<compile_context>
chip_gen: v6e
topology: v6e:2x2x1
jax: 0.10.0
libtpu: 0.0.40
codegen_flags: <defaults>
</compile_context>

<pallas_src>
import functools

import jax
import jax.numpy as jnp
from jax.experimental import pallas as pl
from jax.experimental.pallas import tpu as pltpu

H = W = 56
HW = H * W              # 3136 flat spatial positions, p = h*56 + w
C_IN = 128              # input channel  c = i*2 + n   (i in [0,64), n in [0,2))
C_OUT = 128             # output channel = i2*4 + k1   (i2 in [0,32), k1 in [0,4))
M_BLK = 64              # conv2 output rows per grid step (grid = 2 steps)


def _lane_roll(a, shift):
    """jnp.roll(a, shift, axis=-1) with a static shift (slice + concat)."""
    n = a.shape[-1]
    s = shift % n
    if s == 0:
        return a
    return jnp.concatenate([a[:, n - s:], a[:, :n - s]], axis=1)


def _kernel(col_ref, x_ref, w1_ref, w2_ref, y_ref, zcat_ref, *, shift):
    # col_ref:  (1, HW)   int32, col_ref[0, p] = p % 56 (W coordinate of p)
    # x_ref:    (128, HW) f32,  row = i*2 + n, col = h*56 + w
    # w1_ref:   (24, 128) bf16 expanded conv1 weight (see _expand_weights)
    # w2_ref:   (64, 24)  bf16 block of expanded conv2 weight
    # y_ref:    (64, HW)  f32 output block, row = i2*4 + k1
    # zcat_ref: (24, HW)  bf16 scratch, persists across the two grid steps

    @pl.when(pl.program_id(0) == 0)
    def _():
        # ---- conv1: all 3 H-taps and both n-groups in one MXU matmul ----
        xb = x_ref[...].astype(jnp.bfloat16)
        p_all = jnp.dot(w1_ref[...], xb,
                        preferred_element_type=jnp.float32)        # (24, HW) f32

        # Apply torch.roll(shift along H) + the zero-pad of the 3-tap H conv
        # to the small per-tap products: tap j reads H row (h + j - 1 - shift)
        # mod 56 and is zero where h + j - 1 falls outside [0, 56).
        pos = jax.lax.broadcasted_iota(jnp.int32, (1, HW), 1)
        keep_top = pos >= W              # h >= 1   (mask for tap j = 0)
        keep_bot = pos < (H - 1) * W     # h <= 54  (mask for tap j = 2)

        def tap(j, keep):
            r = _lane_roll(p_all[8 * j:8 * (j + 1), :], (shift + 1 - j) * W)
            return r if keep is None else jnp.where(keep, r, 0.0)

        y1 = tap(0, keep_top) + tap(1, None) + tap(2, keep_bot)    # (8, HW) f32

        # ---- conv2 prep: zero-padded 3-tap W conv as +/-1 lane rolls ----
        # Tap kk reads column w + kk - 1 (zero outside [0, 56)); the wrap of
        # the flat +/-1 roll only ever lands on masked positions.
        col = col_ref[...]                                          # (1, HW)
        z0 = jnp.where(col != 0, _lane_roll(y1, 1), 0.0)            # kk = 0
        z2 = jnp.where(col != W - 1, _lane_roll(y1, -1), 0.0)       # kk = 2
        zcat_ref[...] = jnp.concatenate([z0, y1, z2],
                                        axis=0).astype(jnp.bfloat16)

    # ---- conv2: this step's 64 output rows in one matmul, already in the
    # final channel order i2*4 + k1.  The previous step's 64-row writeback is
    # overlapped with this matmul by the Pallas output pipeline.
    y_ref[...] = jnp.dot(w2_ref[...], zcat_ref[...],
                         preferred_element_type=jnp.float32)


def _expand_weights(w1, w2):
    """Fold group structure + taps into dense bf16 matmul weights (a few KB)."""
    # w1cat[j*8 + k*2 + n, i*2 + m] = w1[k, i, j] * (n == m)
    w1cat = jnp.einsum('kij,nm->jknim', w1,
                       jnp.eye(2, dtype=w1.dtype)).reshape(24, 128)
    # w2cat[i2*4 + k1, kk*8 + k*2 + n] = w2[i2, n, kk] * (k1 == k)
    w2cat = jnp.einsum('ink,co->ickon', w2,
                       jnp.eye(4, dtype=w2.dtype)).reshape(128, 24)
    return w1cat.astype(jnp.bfloat16), w2cat.astype(jnp.bfloat16)


@functools.partial(jax.jit, static_argnames=('shift',))
def forward(x, w1, w2, *, shift=1):
    # `shift` mirrors the torch module's shift_direction (+1 or -1), which is
    # drawn once at module construction time -> static per-instance parameter.
    w1cat, w2cat = _expand_weights(w1, w2)
    col = (jnp.arange(HW, dtype=jnp.int32) % W).reshape(1, HW)
    x2 = x.reshape(C_IN, HW)                      # free reshape (row-major)

    y2 = pl.pallas_call(
        functools.partial(_kernel, shift=shift),
        out_shape=jax.ShapeDtypeStruct((C_OUT, HW), jnp.float32),
        grid=(C_OUT // M_BLK,),
        in_specs=[
            pl.BlockSpec((1, HW), lambda i: (0, 0)),        # col ids
            pl.BlockSpec((C_IN, HW), lambda i: (0, 0)),     # x (128, 3136) f32
            pl.BlockSpec((24, C_IN), lambda i: (0, 0)),     # w1cat bf16
            pl.BlockSpec((M_BLK, 24), lambda i: (i, 0)),    # w2cat block bf16
        ],
        out_specs=pl.BlockSpec((M_BLK, HW), lambda i: (i, 0)),
        scratch_shapes=[pltpu.VMEM((24, HW), jnp.bfloat16)],
        compiler_params=pltpu.CompilerParams(
            dimension_semantics=("arbitrary",),
            vmem_limit_bytes=32 * 1024 * 1024,
        ),
        cost_estimate=pl.CostEstimate(
            flops=38_535_168, transcendentals=0, bytes_accessed=3_236_096),
    )(col, x2, w1cat, w2cat)

    return y2.reshape(1, C_OUT, H, W)             # free reshape back to NCHW


def reference(x, w1, w2, shift):
    """Pure-JAX mirror of the torch ops (roll, unfold via pad+stack, einsum)."""
    hp = jax.lax.Precision.HIGHEST
    t3 = x.reshape(1, 64, 2, 56, 56)
    t3 = jnp.roll(t3, shift, axis=3)
    t3 = t3.reshape(1, 128, 56, 56)
    tp = jnp.pad(t3, ((0, 0), (0, 0), (1, 1), (0, 0)))
    t3u = jnp.stack([tp[:, :, j:j + 56, :] for j in range(3)], axis=2)
    t3u = t3u.reshape(1, 64, 2, 3, 56, 56)
    t4 = jnp.einsum('linjmo,kij->lknmo', t3u, w1, precision=hp)
    t5 = t4.reshape(1, 448, 56, 1)
    tp2 = jnp.pad(t5, ((0, 0), (0, 0), (1, 1), (0, 0)))
    t5u = jnp.stack([tp2[:, :, k:k + 56, :] for k in range(3)], axis=2)
    t5u = t5u.reshape(1, 4, 2, 56, 3, 56)
    t6 = jnp.einsum('lojmkn,ijk->liomn', t5u, w2, precision=hp)
    return t6.reshape(1, 128, 56, 56)


if __name__ == "__main__":
    key = jax.random.PRNGKey(0)
    kx, k1, k2 = jax.random.split(key, 3)

    # The torch reshapes hard-code (1, 64, 2, 56, 56): input must be 1x128x56x56.
    x = jax.random.normal(kx, (1, 128, 56, 56), dtype=jnp.float32)
    w1 = jax.random.normal(k1, (4, 64, 3), dtype=jnp.float32)    # self.weights[0]
    w2 = jax.random.normal(k2, (32, 2, 3), dtype=jnp.float32)    # self.weights[1]

    for s in (1, -1):   # the two possible values of the module's shift_direction
        y = jax.block_until_ready(forward(x, w1, w2, shift=s))
        assert y.shape == (1, 128, 56, 56)
        y_ref = reference(x, w1, w2, s)
        # Relative Frobenius error: bf16 operands (f32 accumulation) against
        # the HIGHEST-precision f32 reference give ~0.3-0.6% relative error;
        # 2e-2 leaves a comfortable margin while still catching layout/shift
        # mistakes (which produce O(1) relative error).
        rel = float(jnp.linalg.norm(y - y_ref) / jnp.linalg.norm(y_ref))
        assert rel < 2e-2, f"relative error {rel:.3e} too large (shift={s})"

    print("KERNEL_OK")
</pallas_src>

<mosaic_0001>
module attributes {stable_mosaic.version = 11 : i64} {
  func.func @_kernel(%arg0: i32, %arg1: memref<1x3136xi32, #tpu.memory_space<vmem>>, %arg2: memref<128x3136xf32, #tpu.memory_space<vmem>>, %arg3: memref<24x128xbf16, #tpu.memory_space<vmem>>, %arg4: memref<64x24xbf16, #tpu.memory_space<vmem>>, %arg5: memref<64x3136xf32, #tpu.memory_space<vmem>>, %arg6: memref<24x3136xbf16, #tpu.memory_space<vmem>>) attributes {dimension_semantics = [#tpu.dimension_semantics<arbitrary>], iteration_bounds = array<i64: 2>, scalar_prefetch = 0 : i64, scratch_operands = 1 : i64, tpu.core_type = #tpu.core_type<tc>, window_params = [{pipeline_mode = #tpu.pipeline_mode<synchronous>, transform_indices = @transform_0, window_bounds = array<i64: 1, 3136>}, {pipeline_mode = #tpu.pipeline_mode<synchronous>, transform_indices = @transform_1, window_bounds = array<i64: 128, 3136>}, {pipeline_mode = #tpu.pipeline_mode<synchronous>, transform_indices = @transform_2, window_bounds = array<i64: 24, 128>}, {transform_indices = @transform_3, window_bounds = array<i64: 64, 24>}, {transform_indices = @transform_4, window_bounds = array<i64: 64, 3136>}]} {
    %c0_i32 = arith.constant 0 : i32
    %0 = arith.cmpi eq, %arg0, %c0_i32 : i32
    %1 = arith.extui %0 : i1 to i32
    %c0_i32_0 = arith.constant 0 : i32
    %2 = arith.cmpi ne, %1, %c0_i32_0 : i32
    scf.if %2 {
      %c0_6 = arith.constant 0 : index
      %c0_7 = arith.constant 0 : index
      %7 = vector.load %arg2[%c0_6, %c0_7] : memref<128x3136xf32, #tpu.memory_space<vmem>>, vector<128x3136xf32>
      %8 = arith.truncf %7 : vector<128x3136xf32> to vector<128x3136xbf16>
      %c0_8 = arith.constant 0 : index
      %c0_9 = arith.constant 0 : index
      %9 = vector.load %arg3[%c0_8, %c0_9] : memref<24x128xbf16, #tpu.memory_space<vmem>>, vector<24x128xbf16>
      %cst_10 = arith.constant dense<0.000000e+00> : vector<24x3136xf32>
      %10 = tpu.matmul %9, %8, %cst_10 {dimension_numbers = #tpu.dot_dimension_numbers<[1], [0], [0], [1], [0, 0, 1, 1], [], []>} : vector<24x128xbf16>, vector<128x3136xbf16>, vector<24x3136xf32> -> vector<24x3136xf32>
      %11 = tpu.iota {dimensions = array<i32: 1>} : vector<1x3136xi32>
      %c56_i32 = arith.constant 56 : i32
      %12 = vector.broadcast %c56_i32 : i32 to vector<1x3136xi32>
      %13 = arith.cmpi sge, %11, %12 : vector<1x3136xi32>
      %c3080_i32 = arith.constant 3080 : i32
      %14 = vector.broadcast %c3080_i32 : i32 to vector<1x3136xi32>
      %15 = arith.cmpi slt, %11, %14 : vector<1x3136xi32>
      %16 = vector.extract_strided_slice %10 {offsets = [0, 0], sizes = [8, 3136], strides = [1, 1]} : vector<24x3136xf32> to vector<8x3136xf32>
      %17 = vector.extract_strided_slice %16 {offsets = [0, 3024], sizes = [8, 112], strides = [1, 1]} : vector<8x3136xf32> to vector<8x112xf32>
      %18 = vector.extract_strided_slice %16 {offsets = [0, 0], sizes = [8, 3024], strides = [1, 1]} : vector<8x3136xf32> to vector<8x3024xf32>
      %19 = tpu.concatenate %17, %18 in 1 : vector<8x112xf32>, vector<8x3024xf32> -> vector<8x3136xf32>
      %cst_11 = arith.constant 0.000000e+00 : f32
      %20 = vector.shape_cast %13 : vector<1x3136xi1> to vector<1x3136xi1>
      %21 = vector.broadcast %20 : vector<1x3136xi1> to vector<8x3136xi1>
      %22 = vector.broadcast %cst_11 : f32 to vector<8x3136xf32>
      %23 = arith.select %21, %19, %22 : vector<8x3136xi1>, vector<8x3136xf32>
      %24 = vector.extract_strided_slice %10 {offsets = [8, 0], sizes = [8, 3136], strides = [1, 1]} : vector<24x3136xf32> to vector<8x3136xf32>
      %25 = vector.extract_strided_slice %24 {offsets = [0, 3080], sizes = [8, 56], strides = [1, 1]} : vector<8x3136xf32> to vector<8x56xf32>
      %26 = vector.extract_strided_slice %24 {offsets = [0, 0], sizes = [8, 3080], strides = [1, 1]} : vector<8x3136xf32> to vector<8x3080xf32>
      %27 = tpu.concatenate %25, %26 in 1 : vector<8x56xf32>, vector<8x3080xf32> -> vector<8x3136xf32>
      %28 = arith.addf %23, %27 : vector<8x3136xf32>
      %29 = vector.extract_strided_slice %10 {offsets = [16, 0], sizes = [8, 3136], strides = [1, 1]} : vector<24x3136xf32> to vector<8x3136xf32>
      %cst_12 = arith.constant 0.000000e+00 : f32
      %30 = vector.shape_cast %15 : vector<1x3136xi1> to vector<1x3136xi1>
      %31 = vector.broadcast %30 : vector<1x3136xi1> to vector<8x3136xi1>
      %32 = vector.broadcast %cst_12 : f32 to vector<8x3136xf32>
      %33 = arith.select %31, %29, %32 : vector<8x3136xi1>, vector<8x3136xf32>
      %34 = arith.addf %28, %33 : vector<8x3136xf32>
      %c0_13 = arith.constant 0 : index
      %c0_14 = arith.constant 0 : index
      %35 = vector.load %arg1[%c0_13, %c0_14] : memref<1x3136xi32, #tpu.memory_space<vmem>>, vector<1x3136xi32>
      %c0_i32_15 = arith.constant 0 : i32
      %36 = vector.broadcast %c0_i32_15 : i32 to vector<1x3136xi32>
      %37 = arith.cmpi ne, %35, %36 : vector<1x3136xi32>
      %38 = vector.extract_strided_slice %34 {offsets = [0, 3135], sizes = [8, 1], strides = [1, 1]} : vector<8x3136xf32> to vector<8x1xf32>
      %39 = vector.extract_strided_slice %34 {offsets = [0, 0], sizes = [8, 3135], strides = [1, 1]} : vector<8x3136xf32> to vector<8x3135xf32>
      %40 = tpu.concatenate %38, %39 in 1 : vector<8x1xf32>, vector<8x3135xf32> -> vector<8x3136xf32>
      %cst_16 = arith.constant 0.000000e+00 : f32
      %41 = vector.shape_cast %37 : vector<1x3136xi1> to vector<1x3136xi1>
      %42 = vector.broadcast %41 : vector<1x3136xi1> to vector<8x3136xi1>
      %43 = vector.broadcast %cst_16 : f32 to vector<8x3136xf32>
      %44 = arith.select %42, %40, %43 : vector<8x3136xi1>, vector<8x3136xf32>
      %c55_i32 = arith.constant 55 : i32
      %45 = vector.broadcast %c55_i32 : i32 to vector<1x3136xi32>
      %46 = arith.cmpi ne, %35, %45 : vector<1x3136xi32>
      %47 = vector.extract_strided_slice %34 {offsets = [0, 1], sizes = [8, 3135], strides = [1, 1]} : vector<8x3136xf32> to vector<8x3135xf32>
      %48 = vector.extract_strided_slice %34 {offsets = [0, 0], sizes = [8, 1], strides = [1, 1]} : vector<8x3136xf32> to vector<8x1xf32>
      %49 = tpu.concatenate %47, %48 in 1 : vector<8x3135xf32>, vector<8x1xf32> -> vector<8x3136xf32>
      %cst_17 = arith.constant 0.000000e+00 : f32
      %50 = vector.shape_cast %46 : vector<1x3136xi1> to vector<1x3136xi1>
      %51 = vector.broadcast %50 : vector<1x3136xi1> to vector<8x3136xi1>
      %52 = vector.broadcast %cst_17 : f32 to vector<8x3136xf32>
      %53 = arith.select %51, %49, %52 : vector<8x3136xi1>, vector<8x3136xf32>
      %54 = tpu.concatenate %44, %34, %53 in 0 : vector<8x3136xf32>, vector<8x3136xf32>, vector<8x3136xf32> -> vector<24x3136xf32>
      %55 = arith.truncf %54 : vector<24x3136xf32> to vector<24x3136xbf16>
      %c0_18 = arith.constant 0 : index
      %c0_19 = arith.constant 0 : index
      %56 = vector.load %arg6[%c0_18, %c0_19] : memref<24x3136xbf16, #tpu.memory_space<vmem>>, vector<24x3136xbf16>
      tpu.vector_store %arg6[%c0_18, %c0_19], %55 {strides = array<i32>} : memref<24x3136xbf16, #tpu.memory_space<vmem>>, vector<24x3136xbf16>,
    } else {
    }
    %c0 = arith.constant 0 : index
    %c0_1 = arith.constant 0 : index
    %3 = vector.load %arg4[%c0, %c0_1] : memref<64x24xbf16, #tpu.memory_space<vmem>>, vector<64x24xbf16>
    %c0_2 = arith.constant 0 : index
    %c0_3 = arith.constant 0 : index
    %4 = vector.load %arg6[%c0_2, %c0_3] : memref<24x3136xbf16, #tpu.memory_space<vmem>>, vector<24x3136xbf16>
    %cst = arith.constant dense<0.000000e+00> : vector<64x3136xf32>
    %5 = tpu.matmul %3, %4, %cst {dimension_numbers = #tpu.dot_dimension_numbers<[1], [0], [0], [1], [0, 0, 1, 1], [], []>} : vector<64x24xbf16>, vector<24x3136xbf16>, vector<64x3136xf32> -> vector<64x3136xf32>
    %c0_4 = arith.constant 0 : index
    %c0_5 = arith.constant 0 : index
    %6 = vector.load %arg5[%c0_4, %c0_5] : memref<64x3136xf32, #tpu.memory_space<vmem>>, vector<64x3136xf32>
    tpu.vector_store %arg5[%c0_4, %c0_5], %5 {strides = array<i32>} : memref<64x3136xf32, #tpu.memory_space<vmem>>, vector<64x3136xf32>,
    return
  }
  func.func @transform_0(%arg0: i32) -> (i32, i32) {
    %c0_i32 = arith.constant 0 : i32
    %c0_i32_0 = arith.constant 0 : i32
    %c0_i32_1 = arith.constant 0 : i32
    return %c0_i32, %c0_i32_0 : i32, i32
  }
  func.func @transform_1(%arg0: i32) -> (i32, i32) {
    %c0_i32 = arith.constant 0 : i32
    %c0_i32_0 = arith.constant 0 : i32
    %c0_i32_1 = arith.constant 0 : i32
    return %c0_i32, %c0_i32_0 : i32, i32
  }
  func.func @transform_2(%arg0: i32) -> (i32, i32) {
    %c0_i32 = arith.constant 0 : i32
    %c0_i32_0 = arith.constant 0 : i32
    %c0_i32_1 = arith.constant 0 : i32
    return %c0_i32, %c0_i32_0 : i32, i32
  }
  func.func @transform_3(%arg0: i32) -> (i32, i32) {
    %c0_i32 = arith.constant 0 : i32
    %c0_i32_0 = arith.constant 0 : i32
    return %arg0, %c0_i32 : i32, i32
  }
  func.func @transform_4(%arg0: i32) -> (i32, i32) {
    %c0_i32 = arith.constant 0 : i32
    %c0_i32_0 = arith.constant 0 : i32
    return %arg0, %c0_i32 : i32, i32
  }
}

</mosaic_0001>

<llo_original>
// kernel: forward.1
$region0: #{forward.1}
  #allocation0 [shape = 'u32[]', space=smem, size = 0x4, offset = 0x4, fixed_abs, tag = 'smem constant byte address 0x4 - core index']
  #allocation1 [shape = 'u32[144,128]{1,0:T(1,128)}', space=vmem, size = 0x12000, scoped, tag = 'internal scratch']
  #allocation2 [shape = 'bf16[24,3136]{1,0:T(8,128)(2,1)}', space=vmem, size = 0x25800, scoped, tag = 'scratch operand']
  %s0 = inlined_call_operand.vmem [shape: s32[1,3136], index: 0, kind: input, shape index: {}]
  %s1 = inlined_call_operand.vmem [shape: f32[128,3136], index: 1, kind: input, shape index: {}]
  %s2 = inlined_call_operand.vmem [shape: bf16[24,128], index: 2, kind: input, shape index: {}]
  %s3 = inlined_call_operand.vmem [shape: bf16[128,24], index: 3, kind: input, shape index: {}]
  %s4 = inlined_call_operand.vmem [shape: f32[128,3136], index: 4, kind: output, shape index: {}]
  %s5 = sld [smem:[#allocation0]]
  $region53: #{forward.1} parent=0
    _
  %s7 = ssub.s32 1, %s5
  %s8 = scalar_select 0, %s7, %s5
  loop: start=0, step=1, limit=4
  $region2: #{forward.1} parent=0 // loop_pre_header
    _
  $region3: #{forward.1} parent=0 // loop_header
    %s10 = sphi 0, %s14
    %p11 = scmp.ge.s32.totalorder %s10, 4
    %s18 = sphi 0, %s18
    %s20 = sphi 0, %s18
    %s21 = sphi 0, %s20
    %s35 = sphi 0, %s21
    %s39 = sphi 0, %s39
    %s41 = sphi 0, %s39
    %s42 = sphi 0, %s41
    %s56 = sphi 0, %s42
    %s60 = sphi 0, %s60
    %s62 = sphi 0, %s60
    %s63 = sphi 0, %s62
    %s77 = sphi 0, %s63
    %s83 = sphi 0, %s85
    %s86 = sphi 0, %s83
    %s87 = sphi 0, %s86
    %s103 = sphi 0, %s87
    %s109 = sphi 0, %s111
    %s112 = sphi 0, %s109
    %s113 = sphi 0, %s112
    %s129 = sphi 0, %s113
  $region4: #{forward.1} parent=0 // loop_header_branch
    %13 = sbr.rel (%p11) target = $region8
  $region5: #{forward.1} parent=0 // loop_body
    %s15 = ssub.s32 %s10, 1
    %s16 = ssub.s32 %s10, 2
    %s17 = sadd.s32 %s10, 1
    %s19 = sadd.s32 %s18, 1
    %p22 = scmp.eq.s32.totalorder %s10, 1
    %p23 = scmp.ne.s32.totalorder %s18, %s20
    %p24 = scmp.eq.s32.totalorder %s10, 0
    %p25 = por %p23, %p24
    %p26 = scmp.ne.s32.totalorder %s18, %s20
    %p27 = scmp.eq.s32.totalorder %s15, 1
    %p28 = por %p26, %p27
    %p29 = scmp.ne.s32.totalorder %s20, %s21
    %p30 = scmp.eq.s32.totalorder %s15, 0
    %p31 = por %p29, %p30
    %p32 = scmp.ne.s32.totalorder %s20, %s21
    %p33 = scmp.eq.s32.totalorder %s16, 1
    %p34 = por %p32, %p33
    %p36 = scmp.ne.s32.totalorder %s21, %s35
    %p37 = scmp.eq.s32.totalorder %s16, 0
    %p38 = por %p36, %p37
    %s40 = sadd.s32 %s39, 1
    %p43 = scmp.eq.s32.totalorder %s10, 1
    %p44 = scmp.ne.s32.totalorder %s39, %s41
    %p45 = scmp.eq.s32.totalorder %s10, 0
    %p46 = por %p44, %p45
    %p47 = scmp.ne.s32.totalorder %s39, %s41
    %p48 = scmp.eq.s32.totalorder %s15, 1
    %p49 = por %p47, %p48
    %p50 = scmp.ne.s32.totalorder %s41, %s42
    %p51 = scmp.eq.s32.totalorder %s15, 0
    %p52 = por %p50, %p51
    %p53 = scmp.ne.s32.totalorder %s41, %s42
    %p54 = scmp.eq.s32.totalorder %s16, 1
    %p55 = por %p53, %p54
    %p57 = scmp.ne.s32.totalorder %s42, %s56
    %p58 = scmp.eq.s32.totalorder %s16, 0
    %p59 = por %p57, %p58
    %s61 = sadd.s32 %s60, 1
    %p64 = scmp.eq.s32.totalorder %s10, 1
    %p65 = scmp.ne.s32.totalorder %s60, %s62
    %p66 = scmp.eq.s32.totalorder %s10, 0
    %p67 = por %p65, %p66
    %p68 = scmp.ne.s32.totalorder %s60, %s62
    %p69 = scmp.eq.s32.totalorder %s15, 1
    %p70 = por %p68, %p69
    %p71 = scmp.ne.s32.totalorder %s62, %s63
    %p72 = scmp.eq.s32.totalorder %s15, 0
    %p73 = por %p71, %p72
    %p74 = scmp.ne.s32.totalorder %s62, %s63
    %p75 = scmp.eq.s32.totalorder %s16, 1
    %p76 = por %p74, %p75
    %p78 = scmp.ne.s32.totalorder %s63, %s77
    %p79 = scmp.eq.s32.totalorder %s16, 0
    %p80 = por %p78, %p79
    %s81 = ssub.s32 %s10, %s17
    %p82 = scmp.eq.s32.totalorder %s81, 0
    %s84 = sadd.s32 %s83, 1
    %s85 = scalar_select %p82, %s83, %s84
    %p88 = pneg %p82
    %p89 = scmp.eq.s32.totalorder %s10, 1
    %p90 = por %p88, %p89
    %p91 = scmp.ne.s32.totalorder %s83, %s86
    %p92 = scmp.eq.s32.totalorder %s10, 0
    %p93 = por %p91, %p92
    %p94 = scmp.ne.s32.totalorder %s83, %s86
    %p95 = scmp.eq.s32.totalorder %s15, 1
    %p96 = por %p94, %p95
    %p97 = scmp.ne.s32.totalorder %s86, %s87
    %p98 = scmp.eq.s32.totalorder %s15, 0
    %p99 = por %p97, %p98
    %p100 = scmp.ne.s32.totalorder %s86, %s87
    %p101 = scmp.eq.s32.totalorder %s16, 1
    %p102 = por %p100, %p101
    %p104 = scmp.ne.s32.totalorder %s87, %s103
    %p105 = scmp.eq.s32.totalorder %s16, 0
    %p106 = por %p104, %p105
    %s107 = ssub.s32 %s10, %s17
    %p108 = scmp.eq.s32.totalorder %s107, 0
    %s110 = sadd.s32 %s109, 1
    %s111 = scalar_select %p108, %s109, %s110
    %p114 = pneg %p108
    %p115 = scmp.eq.s32.totalorder %s10, 1
    %p116 = por %p114, %p115
    %p117 = scmp.ne.s32.totalorder %s109, %s112
    %p118 = scmp.eq.s32.totalorder %s10, 0
    %p119 = por %p117, %p118
    %p120 = scmp.ne.s32.totalorder %s109, %s112
    %p121 = scmp.eq.s32.totalorder %s15, 1
    %p122 = por %p120, %p121
    %p123 = scmp.ne.s32.totalorder %s112, %s113
    %p124 = scmp.eq.s32.totalorder %s15, 0
    %p125 = por %p123, %p124
    %p126 = scmp.ne.s32.totalorder %s112, %s113
    %p127 = scmp.eq.s32.totalorder %s16, 1
    %p128 = por %p126, %p127
    %p130 = scmp.ne.s32.totalorder %s113, %s129
    %p131 = scmp.eq.s32.totalorder %s16, 0
    %p132 = por %p130, %p131
    %p133 = scmp.le.s32.totalorder 1, %s10
    %p134 = scmp.lt.s32.totalorder %s10, 3
    %p135 = pnand %p133, %p134
    %p136 = pneg %p135
    // Predicated region
    $region9: #{forward.1} parent=5 // pred_check
      _
    $region10: #{forward.1} parent=5 // pred_check_branch
      %138 = sbr.rel (%p135) target = $region12
    $region11: #{forward.1} parent=5 // pred_region
      %s139 = ssub.s32 %s10, 1
      // Predicated region
      $region13: #{forward.1} parent=11 // pred_check
        %p140 = pneg %p31
      $region14: #{forward.1} parent=11 // pred_check_branch
        %142 = sbr.rel (%p140) target = $region16
      $region15: #{forward.1} parent=11 // pred_region
        _
      $region16: #{forward.1} parent=11 // pred_fallthru
        _
      // Predicated region
      $region17: #{forward.1} parent=11 // pred_check
        %p143 = pneg %p52
      $region18: #{forward.1} parent=11 // pred_check_branch
        %145 = sbr.rel (%p143) target = $region20
      $region19: #{forward.1} parent=11 // pred_region
        _
      $region20: #{forward.1} parent=11 // pred_fallthru
        _
      // Predicated region
      $region21: #{forward.1} parent=11 // pred_check
        %p146 = pneg %p73
      $region22: #{forward.1} parent=11 // pred_check_branch
        %148 = sbr.rel (%p146) target = $region24
      $region23: #{forward.1} parent=11 // pred_region
        _
      $region24: #{forward.1} parent=11 // pred_fallthru
        _
    $region12: #{forward.1} parent=5 // pred_fallthru
      _
    %p149 = scmp.lt.s32.totalorder %s10, 2
    // Predicated region
    $region25: #{forward.1} parent=5 // pred_check
      %p150 = pneg %p149
    $region26: #{forward.1} parent=5 // pred_check_branch
      %152 = sbr.rel (%p150) target = $region28
    $region27: #{forward.1} parent=5 // pred_region
      // Predicated region
      $region29: #{forward.1} parent=27 // pred_check
        %p153 = pneg %p93
      $region30: #{forward.1} parent=27 // pred_check_branch
        %155 = sbr.rel (%p153) target = $region32
      $region31: #{forward.1} parent=27 // pred_region
        %s156 = smul.u32 8, %s10
        %p157 = scmp.lt.s32.totalorder %s156, 15
        %s158 = scalar_select %p157, %s156, 15
        %s159 = smul.addr %s158, 4
        %s160 = scalar_lea.vmem %s3, %s159
        %s161 = smul.u32 8, %s10
      $region32: #{forward.1} parent=27 // pred_fallthru
        _
    $region28: #{forward.1} parent=5 // pred_fallthru
      _
    %p162 = scmp.le.s32.totalorder 1, %s10
    %p163 = scmp.lt.s32.totalorder %s10, 3
    %p164 = pnand %p162, %p163
    %p165 = pneg %p164
    // Predicated region
    $region33: #{forward.1} parent=5 // pred_check
      _
    $region34: #{forward.1} parent=5 // pred_check_branch
      %167 = sbr.rel (%p164) target = $region36
    $region35: #{forward.1} parent=5 // pred_region
      %s168 = ssub.s32 %s10, 1
      %p169 = pneg %p31
      %p170 = pneg %p28
      %p171 = pneg %p52
      %p172 = pneg %p49
      %p173 = pneg %p73
      %p174 = pneg %p70
      %s175 = smul.u32 8, %s15
      %p176 = scmp.lt.s32.totalorder %s175, 15
      %s177 = scalar_select %p176, %s175, 15
      %s178 = smul.addr %s177, 4
      %s179 = scalar_lea.vmem %s3, %s178
      %p180 = pneg %p99
      %p181 = pneg %p96
      %p182 = pneg %p125
      %p183 = pneg %p122
      %s184 = smul.u32 8, %s15
      %p185 = scmp.lt.s32.totalorder %s184, 15
      %s186 = scalar_select %p185, %s184, 15
      %s187 = smul.addr %s186, 25
      %s188 = smul.addr %s187, 8
      %s189 = scalar_lea.vmem %s4, %s188
      %s190 = smul.u32 8, %s15
      %p191 = scmp.lt.s32.totalorder %s190, 15
      %s192 = scalar_select %p191, %s190, 15
      %s193 = smul.addr %s192, 4
      %s194 = scalar_lea.vmem %s3, %s193
      %s195 = smul.u32 8, %s15
      %s196 = smul.u32 8, %s15
      %p197 = scmp.lt.s32.totalorder %s196, 15
      %s198 = scalar_select %p197, %s196, 15
      %s199 = smul.addr %s198, 25
      %s200 = smul.addr %s199, 8
      %s201 = scalar_lea.vmem %s4, %s200
      %s202 = smul.u32 8, %s15
      %p204 = scmp.eq.s32.totalorder %s15, 0
      // Predicated region
      $region37: #{forward.1} parent=35 // pred_check
        %p205 = pneg %p204
      $region38: #{forward.1} parent=35 // pred_check_branch
        %207 = sbr.rel (%p205) target = $region40
      $region39: #{forward.1} parent=35 // pred_region
        %v208 = vld [vmem:[%s1] sm:$0xff]
        %v209 = vld [vmem:[%s1 + $0x8] sm:$0xff]
        %v210 = vld [vmem:[%s1 + $0x10] sm:$0xff]
        %v211 = vld [vmem:[%s1 + $0x18] sm:$0xff]
        %v212 = vld [vmem:[%s1 + $0x20] sm:$0xff]
        %v213 = vld [vmem:[%s1 + $0x28] sm:$0xff]
        %v214 = vld [vmem:[%s1 + $0x30] sm:$0xff]
        %v215 = vld [vmem:[%s1 + $0x38] sm:$0xff]
        %v216 = vld [vmem:[%s1 + $0x40] sm:$0xff]
        %v217 = vld [vmem:[%s1 + $0x48] sm:$0xff]
        %v218 = vld [vmem:[%s1 + $0x50] sm:$0xff]
        %v219 = vld [vmem:[%s1 + $0x58] sm:$0xff]
        %v220 = vld [vmem:[%s1 + $0x60] sm:$0xff]
        %v221 = vld [vmem:[%s1 + $0x68] sm:$0xff]
        %v222 = vld [vmem:[%s1 + $0x70] sm:$0xff]
        %v223 = vld [vmem:[%s1 + $0x78] sm:$0xff]
        %v224 = vld [vmem:[%s1 + $0x80] sm:$0xff]
        %v225 = vld [vmem:[%s1 + $0x88] sm:$0xff]
        %v226 = vld [vmem:[%s1 + $0x90] sm:$0xff]
        %v227 = vld [vmem:[%s1 + $0x98] sm:$0xff]
        %v228 = vld [vmem:[%s1 + $0xa0] sm:$0xff]
        %v229 = vld [vmem:[%s1 + $0xa8] sm:$0xff]
        %v230 = vld [vmem:[%s1 + $0xb0] sm:$0xff]
        %v231 = vld [vmem:[%s1 + $0xb8] sm:$0xff]
        %v232 = vld [vmem:[%s1 + $0xc0] sm:$0xff]
        %v233 = vld [vmem:[%s1 + $0xc8] sm:$0xff]
        %v234 = vld [vmem:[%s1 + $0xd0] sm:$0xff]
        %v235 = vld [vmem:[%s1 + $0xd8] sm:$0xff]
        %v236 = vld [vmem:[%s1 + $0xe0] sm:$0xff]
        %v237 = vld [vmem:[%s1 + $0xe8] sm:$0xff]
        %v238 = vld [vmem:[%s1 + $0xf0] sm:$0xff]
        %v239 = vld [vmem:[%s1 + $0xf8] sm:$0xff]
        %v240 = vld [vmem:[%s1 + $0x100] sm:$0xff]
        %v241 = vld [vmem:[%s1 + $0x108] sm:$0xff]
        %v242 = vld [vmem:[%s1 + $0x110] sm:$0xff]
        %v243 = vld [vmem:[%s1 + $0x118] sm:$0xff]
        %v244 = vld [vmem:[%s1 + $0x120] sm:$0xff]
        %v245 = vld [vmem:[%s1 + $0x128] sm:$0xff]
        %v246 = vld [vmem:[%s1 + $0x130] sm:$0xff]
        %v247 = vld [vmem:[%s1 + $0x138] sm:$0xff]
        %v248 = vld [vmem:[%s1 + $0x140] sm:$0xff]
        %v249 = vld [vmem:[%s1 + $0x148] sm:$0xff]
        %v250 = vld [vmem:[%s1 + $0x150] sm:$0xff]
        %v251 = vld [vmem:[%s1 + $0x158] sm:$0xff]
        %v252 = vld [vmem:[%s1 + $0x160] sm:$0xff]
        %v253 = vld [vmem:[%s1 + $0x168] sm:$0xff]
        %v254 = vld [vmem:[%s1 + $0x170] sm:$0xff]
        %v255 = vld [vmem:[%s1 + $0x178] sm:$0xff]
        %v256 = vld [vmem:[%s1 + $0x180] sm:$0xff]
        %v257 = vld [vmem:[%s1 + $0x188] sm:$0xff]
        %v258 = vld [vmem:[%s1 + $0x190] sm:$0xff]
        %v259 = vld [vmem:[%s1 + $0x198] sm:$0xff]
        %v260 = vld [vmem:[%s1 + $0x1a0] sm:$0xff]
        %v261 = vld [vmem:[%s1 + $0x1a8] sm:$0xff]
        %v262 = vld [vmem:[%s1 + $0x1b0] sm:$0xff]
        %v263 = vld [vmem:[%s1 + $0x1b8] sm:$0xff]
        %v264 = vld [vmem:[%s1 + $0x1c0] sm:$0xff]
        %v265 = vld [vmem:[%s1 + $0x1c8] sm:$0xff]
        %v266 = vld [vmem:[%s1 + $0x1d0] sm:$0xff]
        %v267 = vld [vmem:[%s1 + $0x1d8] sm:$0xff]
        %v268 = vld [vmem:[%s1 + $0x1e0] sm:$0xff]
        %v269 = vld [vmem:[%s1 + $0x1e8] sm:$0xff]
        %v270 = vld [vmem:[%s1 + $0x1f0] sm:$0xff]
        %v271 = vld [vmem:[%s1 + $0x1f8] sm:$0xff]
        %v272 = vld [vmem:[%s1 + $0x200] sm:$0xff]
        %v273 = vld [vmem:[%s1 + $0x208] sm:$0xff]
        %v274 = vld [vmem:[%s1 + $0x210] sm:$0xff]
        %v275 = vld [vmem:[%s1 + $0x218] sm:$0xff]
        %v276 = vld [vmem:[%s1 + $0x220] sm:$0xff]
        %v277 = vld [vmem:[%s1 + $0x228] sm:$0xff]
        %v278 = vld [vmem:[%s1 + $0x230] sm:$0xff]
        %v279 = vld [vmem:[%s1 + $0x238] sm:$0xff]
        %v280 = vld [vmem:[%s1 + $0x240] sm:$0xff]
        %v281 = vld [vmem:[%s1 + $0x248] sm:$0xff]
        %v282 = vld [vmem:[%s1 + $0x250] sm:$0xff]
        %v283 = vld [vmem:[%s1 + $0x258] sm:$0xff]
        %v284 = vld [vmem:[%s1 + $0x260] sm:$0xff]
        %v285 = vld [vmem:[%s1 + $0x268] sm:$0xff]
        %v286 = vld [vmem:[%s1 + $0x270] sm:$0xff]
        %v287 = vld [vmem:[%s1 + $0x278] sm:$0xff]
        %v288 = vld [vmem:[%s1 + $0x280] sm:$0xff]
        %v289 = vld [vmem:[%s1 + $0x288] sm:$0xff]
        %v290 = vld [vmem:[%s1 + $0x290] sm:$0xff]
        %v291 = vld [vmem:[%s1 + $0x298] sm:$0xff]
        %v292 = vld [vmem:[%s1 + $0x2a0] sm:$0xff]
        %v293 = vld [vmem:[%s1 + $0x2a8] sm:$0xff]
        %v294 = vld [vmem:[%s1 + $0x2b0] sm:$0xff]
        %v295 = vld [vmem:[%s1 + $0x2b8] sm:$0xff]
        %v296 = vld [vmem:[%s1 + $0x2c0] sm:$0xff]
        %v297 = vld [vmem:[%s1 + $0x2c8] sm:$0xff]
        %v298 = vld [vmem:[%s1 + $0x2d0] sm:$0xff]
        %v299 = vld [vmem:[%s1 + $0x2d8] sm:$0xff]
        %v300 = vld [vmem:[%s1 + $0x2e0] sm:$0xff]
        %v301 = vld [vmem:[%s1 + $0x2e8] sm:$0xff]
        %v302 = vld [vmem:[%s1 + $0x2f0] sm:$0xff]
        %v303 = vld [vmem:[%s1 + $0x2f8] sm:$0xff]
        %v304 = vld [vmem:[%s1 + $0x300] sm:$0xff]
        %v305 = vld [vmem:[%s1 + $0x308] sm:$0xff]
        %v306 = vld [vmem:[%s1 + $0x310] sm:$0xff]
        %v307 = vld [vmem:[%s1 + $0x318] sm:$0xff]
        %v308 = vld [vmem:[%s1 + $0x320] sm:$0xff]
        %v309 = vld [vmem:[%s1 + $0x328] sm:$0xff]
        %v310 = vld [vmem:[%s1 + $0x330] sm:$0xff]
        %v311 = vld [vmem:[%s1 + $0x338] sm:$0xff]
        %v312 = vld [vmem:[%s1 + $0x340] sm:$0xff]
        %v313 = vld [vmem:[%s1 + $0x348] sm:$0xff]
        %v314 = vld [vmem:[%s1 + $0x350] sm:$0xff]
        %v315 = vld [vmem:[%s1 + $0x358] sm:$0xff]
        %v316 = vld [vmem:[%s1 + $0x360] sm:$0xff]
        %v317 = vld [vmem:[%s1 + $0x368] sm:$0xff]
        %v318 = vld [vmem:[%s1 + $0x370] sm:$0xff]
        %v319 = vld [vmem:[%s1 + $0x378] sm:$0xff]
        %v320 = vld [vmem:[%s1 + $0x380] sm:$0xff]
        %v321 = vld [vmem:[%s1 + $0x388] sm:$0xff]
        %v322 = vld [vmem:[%s1 + $0x390] sm:$0xff]
        %v323 = vld [vmem:[%s1 + $0x398] sm:$0xff]
        %v324 = vld [vmem:[%s1 + $0x3a0] sm:$0xff]
        %v325 = vld [vmem:[%s1 + $0x3a8] sm:$0xff]
        %v326 = vld [vmem:[%s1 + $0x3b0] sm:$0xff]
        %v327 = vld [vmem:[%s1 + $0x3b8] sm:$0xff]
        %v328 = vld [vmem:[%s1 + $0x3c0] sm:$0xff]
        %v329 = vld [vmem:[%s1 + $0x3c8] sm:$0xff]
        %v330 = vld [vmem:[%s1 + $0x3d0] sm:$0xff]
        %v331 = vld [vmem:[%s1 + $0x3d8] sm:$0xff]
        %v332 = vld [vmem:[%s1 + $0x3e0] sm:$0xff]
        %v333 = vld [vmem:[%s1 + $0x3e8] sm:$0xff]
        %v334 = vld [vmem:[%s1 + $0x3f0] sm:$0xff]
        %v335 = vld [vmem:[%s1 + $0x3f8] sm:$0xff]
        %v336 = vld [vmem:[%s1 + $0x400] sm:$0xff]
        %v337 = vld [vmem:[%s1 + $0x408] sm:$0xff]
        %v338 = vld [vmem:[%s1 + $0x410] sm:$0xff]
        %v339 = vld [vmem:[%s1 + $0x418] sm:$0xff]
        %v340 = vld [vmem:[%s1 + $0x420] sm:$0xff]
        %v341 = vld [vmem:[%s1 + $0x428] sm:$0xff]
        %v342 = vld [vmem:[%s1 + $0x430] sm:$0xff]
        %v343 = vld [vmem:[%s1 + $0x438] sm:$0xff]
        %v344 = vld [vmem:[%s1 + $0x440] sm:$0xff]
        %v345 = vld [vmem:[%s1 + $0x448] sm:$0xff]
        %v346 = vld [vmem:[%s1 + $0x450] sm:$0xff]
        %v347 = vld [vmem:[%s1 + $0x458] sm:$0xff]
        %v348 = vld [vmem:[%s1 + $0x460] sm:$0xff]
        %v349 = vld [vmem:[%s1 + $0x468] sm:$0xff]
        %v350 = vld [vmem:[%s1 + $0x470] sm:$0xff]
        %v351 = vld [vmem:[%s1 + $0x478] sm:$0xff]
        %v352 = vld [vmem:[%s1 + $0x480] sm:$0xff]
        %v353 = vld [vmem:[%s1 + $0x488] sm:$0xff]
        %v354 = vld [vmem:[%s1 + $0x490] sm:$0xff]
        %v355 = vld [vmem:[%s1 + $0x498] sm:$0xff]
        %v356 = vld [vmem:[%s1 + $0x4a0] sm:$0xff]
        %v357 = vld [vmem:[%s1 + $0x4a8] sm:$0xff]
        %v358 = vld [vmem:[%s1 + $0x4b0] sm:$0xff]
        %v359 = vld [vmem:[%s1 + $0x4b8] sm:$0xff]
        %v360 = vld [vmem:[%s1 + $0x4c0] sm:$0xff]
        %v361 = vld [vmem:[%s1 + $0x4c8] sm:$0xff]
        %v362 = vld [vmem:[%s1 + $0x4d0] sm:$0xff]
        %v363 = vld [vmem:[%s1 + $0x4d8] sm:$0xff]
        %v364 = vld [vmem:[%s1 + $0x4e0] sm:$0xff]
        %v365 = vld [vmem:[%s1 + $0x4e8] sm:$0xff]
        %v366 = vld [vmem:[%s1 + $0x4f0] sm:$0xff]
        %v367 = vld [vmem:[%s1 + $0x4f8] sm:$0xff]
        %v368 = vld [vmem:[%s1 + $0x500] sm:$0xff]
        %v369 = vld [vmem:[%s1 + $0x508] sm:$0xff]
        %v370 = vld [vmem:[%s1 + $0x510] sm:$0xff]
        %v371 = vld [vmem:[%s1 + $0x518] sm:$0xff]
        %v372 = vld [vmem:[%s1 + $0x520] sm:$0xff]
        %v373 = vld [vmem:[%s1 + $0x528] sm:$0xff]
        %v374 = vld [vmem:[%s1 + $0x530] sm:$0xff]
        %v375 = vld [vmem:[%s1 + $0x538] sm:$0xff]
        %v376 = vld [vmem:[%s1 + $0x540] sm:$0xff]
        %v377 = vld [vmem:[%s1 + $0x548] sm:$0xff]
        %v378 = vld [vmem:[%s1 + $0x550] sm:$0xff]
        %v379 = vld [vmem:[%s1 + $0x558] sm:$0xff]
        %v380 = vld [vmem:[%s1 + $0x560] sm:$0xff]
        %v381 = vld [vmem:[%s1 + $0x568] sm:$0xff]
        %v382 = vld [vmem:[%s1 + $0x570] sm:$0xff]
        %v383 = vld [vmem:[%s1 + $0x578] sm:$0xff]
        %v384 = vld [vmem:[%s1 + $0x580] sm:$0xff]
        %v385 = vld [vmem:[%s1 + $0x588] sm:$0xff]
        %v386 = vld [vmem:[%s1 + $0x590] sm:$0xff]
        %v387 = vld [vmem:[%s1 + $0x598] sm:$0xff]
        %v388 = vld [vmem:[%s1 + $0x5a0] sm:$0xff]
        %v389 = vld [vmem:[%s1 + $0x5a8] sm:$0xff]
        %v390 = vld [vmem:[%s1 + $0x5b0] sm:$0xff]
        %v391 = vld [vmem:[%s1 + $0x5b8] sm:$0xff]
        %v392 = vld [vmem:[%s1 + $0x5c0] sm:$0xff]
        %v393 = vld [vmem:[%s1 + $0x5c8] sm:$0xff]
        %v394 = vld [vmem:[%s1 + $0x5d0] sm:$0xff]
        %v395 = vld [vmem:[%s1 + $0x5d8] sm:$0xff]
        %v396 = vld [vmem:[%s1 + $0x5e0] sm:$0xff]
        %v397 = vld [vmem:[%s1 + $0x5e8] sm:$0xff]
        %v398 = vld [vmem:[%s1 + $0x5f0] sm:$0xff]
        %v399 = vld [vmem:[%s1 + $0x5f8] sm:$0xff]
        %v400 = vld [vmem:[%s1 + $0x600] sm:$0xff]
        %v401 = vld [vmem:[%s1 + $0x608] sm:$0xff]
        %v402 = vld [vmem:[%s1 + $0x610] sm:$0xff]
        %v403 = vld [vmem:[%s1 + $0x618] sm:$0xff]
        %v404 = vld [vmem:[%s1 + $0x620] sm:$0xff]
        %v405 = vld [vmem:[%s1 + $0x628] sm:$0xff]
        %v406 = vld [vmem:[%s1 + $0x630] sm:$0xff]
        %v407 = vld [vmem:[%s1 + $0x638] sm:$0xff]
        %v408 = vld [vmem:[%s1 + $0x640] sm:$0xff]
        %v409 = vld [vmem:[%s1 + $0x648] sm:$0xff]
        %v410 = vld [vmem:[%s1 + $0x650] sm:$0xff]
        %v411 = vld [vmem:[%s1 + $0x658] sm:$0xff]
        %v412 = vld [vmem:[%s1 + $0x660] sm:$0xff]
        %v413 = vld [vmem:[%s1 + $0x668] sm:$0xff]
        %v414 = vld [vmem:[%s1 + $0x670] sm:$0xff]
        %v415 = vld [vmem:[%s1 + $0x678] sm:$0xff]
        %v416 = vld [vmem:[%s1 + $0x680] sm:$0xff]
        %v417 = vld [vmem:[%s1 + $0x688] sm:$0xff]
        %v418 = vld [vmem:[%s1 + $0x690] sm:$0xff]
        %v419 = vld [vmem:[%s1 + $0x698] sm:$0xff]
        %v420 = vld [vmem:[%s1 + $0x6a0] sm:$0xff]
        %v421 = vld [vmem:[%s1 + $0x6a8] sm:$0xff]
        %v422 = vld [vmem:[%s1 + $0x6b0] sm:$0xff]
        %v423 = vld [vmem:[%s1 + $0x6b8] sm:$0xff]
        %v424 = vld [vmem:[%s1 + $0x6c0] sm:$0xff]
        %v425 = vld [vmem:[%s1 + $0x6c8] sm:$0xff]
        %v426 = vld [vmem:[%s1 + $0x6d0] sm:$0xff]
        %v427 = vld [vmem:[%s1 + $0x6d8] sm:$0xff]
        %v428 = vld [vmem:[%s1 + $0x6e0] sm:$0xff]
        %v429 = vld [vmem:[%s1 + $0x6e8] sm:$0xff]
        %v430 = vld [vmem:[%s1 + $0x6f0] sm:$0xff]
        %v431 = vld [vmem:[%s1 + $0x6f8] sm:$0xff]
        %v432 = vld [vmem:[%s1 + $0x700] sm:$0xff]
        %v433 = vld [vmem:[%s1 + $0x708] sm:$0xff]
        %v434 = vld [vmem:[%s1 + $0x710] sm:$0xff]
        %v435 = vld [vmem:[%s1 + $0x718] sm:$0xff]
        %v436 = vld [vmem:[%s1 + $0x720] sm:$0xff]
        %v437 = vld [vmem:[%s1 + $0x728] sm:$0xff]
        %v438 = vld [vmem:[%s1 + $0x730] sm:$0xff]
        %v439 = vld [vmem:[%s1 + $0x738] sm:$0xff]
        %v440 = vld [vmem:[%s1 + $0x740] sm:$0xff]
        %v441 = vld [vmem:[%s1 + $0x748] sm:$0xff]
        %v442 = vld [vmem:[%s1 + $0x750] sm:$0xff]
        %v443 = vld [vmem:[%s1 + $0x758] sm:$0xff]
        %v444 = vld [vmem:[%s1 + $0x760] sm:$0xff]
        %v445 = vld [vmem:[%s1 + $0x768] sm:$0xff]
        %v446 = vld [vmem:[%s1 + $0x770] sm:$0xff]
        %v447 = vld [vmem:[%s1 + $0x778] sm:$0xff]
        %v448 = vld [vmem:[%s1 + $0x780] sm:$0xff]
        %v449 = vld [vmem:[%s1 + $0x788] sm:$0xff]
        %v450 = vld [vmem:[%s1 + $0x790] sm:$0xff]
        %v451 = vld [vmem:[%s1 + $0x798] sm:$0xff]
        %v452 = vld [vmem:[%s1 + $0x7a0] sm:$0xff]
        %v453 = vld [vmem:[%s1 + $0x7a8] sm:$0xff]
        %v454 = vld [vmem:[%s1 + $0x7b0] sm:$0xff]
        %v455 = vld [vmem:[%s1 + $0x7b8] sm:$0xff]
        %v456 = vld [vmem:[%s1 + $0x7c0] sm:$0xff]
        %v457 = vld [vmem:[%s1 + $0x7c8] sm:$0xff]
        %v458 = vld [vmem:[%s1 + $0x7d0] sm:$0xff]
        %v459 = vld [vmem:[%s1 + $0x7d8] sm:$0xff]
        %v460 = vld [vmem:[%s1 + $0x7e0] sm:$0xff]
        %v461 = vld [vmem:[%s1 + $0x7e8] sm:$0xff]
        %v462 = vld [vmem:[%s1 + $0x7f0] sm:$0xff]
        %v463 = vld [vmem:[%s1 + $0x7f8] sm:$0xff]
        %v464 = vld [vmem:[%s1 + $0x800] sm:$0xff]
        %v465 = vld [vmem:[%s1 + $0x808] sm:$0xff]
        %v466 = vld [vmem:[%s1 + $0x810] sm:$0xff]
        %v467 = vld [vmem:[%s1 + $0x818] sm:$0xff]
        %v468 = vld [vmem:[%s1 + $0x820] sm:$0xff]
        %v469 = vld [vmem:[%s1 + $0x828] sm:$0xff]
        %v470 = vld [vmem:[%s1 + $0x830] sm:$0xff]
        %v471 = vld [vmem:[%s1 + $0x838] sm:$0xff]
        %v472 = vld [vmem:[%s1 + $0x840] sm:$0xff]
        %v473 = vld [vmem:[%s1 + $0x848] sm:$0xff]
        %v474 = vld [vmem:[%s1 + $0x850] sm:$0xff]
        %v475 = vld [vmem:[%s1 + $0x858] sm:$0xff]
        %v476 = vld [vmem:[%s1 + $0x860] sm:$0xff]
        %v477 = vld [vmem:[%s1 + $0x868] sm:$0xff]
        %v478 = vld [vmem:[%s1 + $0x870] sm:$0xff]
        %v479 = vld [vmem:[%s1 + $0x878] sm:$0xff]
        %v480 = vld [vmem:[%s1 + $0x880] sm:$0xff]
        %v481 = vld [vmem:[%s1 + $0x888] sm:$0xff]
        %v482 = vld [vmem:[%s1 + $0x890] sm:$0xff]
        %v483 = vld [vmem:[%s1 + $0x898] sm:$0xff]
        %v484 = vld [vmem:[%s1 + $0x8a0] sm:$0xff]
        %v485 = vld [vmem:[%s1 + $0x8a8] sm:$0xff]
        %v486 = vld [vmem:[%s1 + $0x8b0] sm:$0xff]
        %v487 = vld [vmem:[%s1 + $0x8b8] sm:$0xff]
        %v488 = vld [vmem:[%s1 + $0x8c0] sm:$0xff]
        %v489 = vld [vmem:[%s1 + $0x8c8] sm:$0xff]
        %v490 = vld [vmem:[%s1 + $0x8d0] sm:$0xff]
        %v491 = vld [vmem:[%s1 + $0x8d8] sm:$0xff]
        %v492 = vld [vmem:[%s1 + $0x8e0] sm:$0xff]
        %v493 = vld [vmem:[%s1 + $0x8e8] sm:$0xff]
        %v494 = vld [vmem:[%s1 + $0x8f0] sm:$0xff]
        %v495 = vld [vmem:[%s1 + $0x8f8] sm:$0xff]
        %v496 = vld [vmem:[%s1 + $0x900] sm:$0xff]
        %v497 = vld [vmem:[%s1 + $0x908] sm:$0xff]
        %v498 = vld [vmem:[%s1 + $0x910] sm:$0xff]
        %v499 = vld [vmem:[%s1 + $0x918] sm:$0xff]
        %v500 = vld [vmem:[%s1 + $0x920] sm:$0xff]
        %v501 = vld [vmem:[%s1 + $0x928] sm:$0xff]
        %v502 = vld [vmem:[%s1 + $0x930] sm:$0xff]
        %v503 = vld [vmem:[%s1 + $0x938] sm:$0xff]
        %v504 = vld [vmem:[%s1 + $0x940] sm:$0xff]
        %v505 = vld [vmem:[%s1 + $0x948] sm:$0xff]
        %v506 = vld [vmem:[%s1 + $0x950] sm:$0xff]
        %v507 = vld [vmem:[%s1 + $0x958] sm:$0xff]
        %v508 = vld [vmem:[%s1 + $0x960] sm:$0xff]
        %v509 = vld [vmem:[%s1 + $0x968] sm:$0xff]
        %v510 = vld [vmem:[%s1 + $0x970] sm:$0xff]
        %v511 = vld [vmem:[%s1 + $0x978] sm:$0xff]
        %v512 = vld [vmem:[%s1 + $0x980] sm:$0xff]
        %v513 = vld [vmem:[%s1 + $0x988] sm:$0xff]
        %v514 = vld [vmem:[%s1 + $0x990] sm:$0xff]
        %v515 = vld [vmem:[%s1 + $0x998] sm:$0xff]
        %v516 = vld [vmem:[%s1 + $0x9a0] sm:$0xff]
        %v517 = vld [vmem:[%s1 + $0x9a8] sm:$0xff]
        %v518 = vld [vmem:[%s1 + $0x9b0] sm:$0xff]
        %v519 = vld [vmem:[%s1 + $0x9b8] sm:$0xff]
        %v520 = vld [vmem:[%s1 + $0x9c0] sm:$0xff]
        %v521 = vld [vmem:[%s1 + $0x9c8] sm:$0xff]
        %v522 = vld [vmem:[%s1 + $0x9d0] sm:$0xff]
        %v523 = vld [vmem:[%s1 + $0x9d8] sm:$0xff]
        %v524 = vld [vmem:[%s1 + $0x9e0] sm:$0xff]
        %v525 = vld [vmem:[%s1 + $0x9e8] sm:$0xff]
        %v526 = vld [vmem:[%s1 + $0x9f0] sm:$0xff]
        %v527 = vld [vmem:[%s1 + $0x9f8] sm:$0xff]
        %v528 = vld [vmem:[%s1 + $0xa00] sm:$0xff]
        %v529 = vld [vmem:[%s1 + $0xa08] sm:$0xff]
        %v530 = vld [vmem:[%s1 + $0xa10] sm:$0xff]
        %v531 = vld [vmem:[%s1 + $0xa18] sm:$0xff]
        %v532 = vld [vmem:[%s1 + $0xa20] sm:$0xff]
        %v533 = vld [vmem:[%s1 + $0xa28] sm:$0xff]
        %v534 = vld [vmem:[%s1 + $0xa30] sm:$0xff]
        %v535 = vld [vmem:[%s1 + $0xa38] sm:$0xff]
        %v536 = vld [vmem:[%s1 + $0xa40] sm:$0xff]
        %v537 = vld [vmem:[%s1 + $0xa48] sm:$0xff]
        %v538 = vld [vmem:[%s1 + $0xa50] sm:$0xff]
        %v539 = vld [vmem:[%s1 + $0xa58] sm:$0xff]
        %v540 = vld [vmem:[%s1 + $0xa60] sm:$0xff]
        %v541 = vld [vmem:[%s1 + $0xa68] sm:$0xff]
        %v542 = vld [vmem:[%s1 + $0xa70] sm:$0xff]
        %v543 = vld [vmem:[%s1 + $0xa78] sm:$0xff]
        %v544 = vld [vmem:[%s1 + $0xa80] sm:$0xff]
        %v545 = vld [vmem:[%s1 + $0xa88] sm:$0xff]
        %v546 = vld [vmem:[%s1 + $0xa90] sm:$0xff]
        %v547 = vld [vmem:[%s1 + $0xa98] sm:$0xff]
        %v548 = vld [vmem:[%s1 + $0xaa0] sm:$0xff]
        %v549 = vld [vmem:[%s1 + $0xaa8] sm:$0xff]
        %v550 = vld [vmem:[%s1 + $0xab0] sm:$0xff]
        %v551 = vld [vmem:[%s1 + $0xab8] sm:$0xff]
        %v552 = vld [vmem:[%s1 + $0xac0] sm:$0xff]
        %v553 = vld [vmem:[%s1 + $0xac8] sm:$0xff]
        %v554 = vld [vmem:[%s1 + $0xad0] sm:$0xff]
        %v555 = vld [vmem:[%s1 + $0xad8] sm:$0xff]
        %v556 = vld [vmem:[%s1 + $0xae0] sm:$0xff]
        %v557 = vld [vmem:[%s1 + $0xae8] sm:$0xff]
        %v558 = vld [vmem:[%s1 + $0xaf0] sm:$0xff]
        %v559 = vld [vmem:[%s1 + $0xaf8] sm:$0xff]
        %v560 = vld [vmem:[%s1 + $0xb00] sm:$0xff]
        %v561 = vld [vmem:[%s1 + $0xb08] sm:$0xff]
        %v562 = vld [vmem:[%s1 + $0xb10] sm:$0xff]
        %v563 = vld [vmem:[%s1 + $0xb18] sm:$0xff]
        %v564 = vld [vmem:[%s1 + $0xb20] sm:$0xff]
        %v565 = vld [vmem:[%s1 + $0xb28] sm:$0xff]
        %v566 = vld [vmem:[%s1 + $0xb30] sm:$0xff]
        %v567 = vld [vmem:[%s1 + $0xb38] sm:$0xff]
        %v568 = vld [vmem:[%s1 + $0xb40] sm:$0xff]
        %v569 = vld [vmem:[%s1 + $0xb48] sm:$0xff]
        %v570 = vld [vmem:[%s1 + $0xb50] sm:$0xff]
        %v571 = vld [vmem:[%s1 + $0xb58] sm:$0xff]
        %v572 = vld [vmem:[%s1 + $0xb60] sm:$0xff]
        %v573 = vld [vmem:[%s1 + $0xb68] sm:$0xff]
        %v574 = vld [vmem:[%s1 + $0xb70] sm:$0xff]
        %v575 = vld [vmem:[%s1 + $0xb78] sm:$0xff]
        %v576 = vld [vmem:[%s1 + $0xb80] sm:$0xff]
        %v577 = vld [vmem:[%s1 + $0xb88] sm:$0xff]
        %v578 = vld [vmem:[%s1 + $0xb90] sm:$0xff]
        %v579 = vld [vmem:[%s1 + $0xb98] sm:$0xff]
        %v580 = vld [vmem:[%s1 + $0xba0] sm:$0xff]
        %v581 = vld [vmem:[%s1 + $0xba8] sm:$0xff]
        %v582 = vld [vmem:[%s1 + $0xbb0] sm:$0xff]
        %v583 = vld [vmem:[%s1 + $0xbb8] sm:$0xff]
        %v584 = vld [vmem:[%s1 + $0xbc0] sm:$0xff]
        %v585 = vld [vmem:[%s1 + $0xbc8] sm:$0xff]
        %v586 = vld [vmem:[%s1 + $0xbd0] sm:$0xff]
        %v587 = vld [vmem:[%s1 + $0xbd8] sm:$0xff]
        %v588 = vld [vmem:[%s1 + $0xbe0] sm:$0xff]
        %v589 = vld [vmem:[%s1 + $0xbe8] sm:$0xff]
        %v590 = vld [vmem:[%s1 + $0xbf0] sm:$0xff]
        %v591 = vld [vmem:[%s1 + $0xbf8] sm:$0xff]
        %v592 = vld [vmem:[%s1 + $0xc00] sm:$0xff]
        %v593 = vld [vmem:[%s1 + $0xc08] sm:$0xff]
        %v594 = vld [vmem:[%s1 + $0xc10] sm:$0xff]
        %v595 = vld [vmem:[%s1 + $0xc18] sm:$0xff]
        %v596 = vld [vmem:[%s1 + $0xc20] sm:$0xff]
        %v597 = vld [vmem:[%s1 + $0xc28] sm:$0xff]
        %v598 = vld [vmem:[%s1 + $0xc30] sm:$0xff]
        %v599 = vld [vmem:[%s1 + $0xc38] sm:$0xff]
        %v600 = vld [vmem:[%s1 + $0xc40] sm:$0xff]
        %v601 = vld [vmem:[%s1 + $0xc48] sm:$0xff]
        %v602 = vld [vmem:[%s1 + $0xc50] sm:$0xff]
        %v603 = vld [vmem:[%s1 + $0xc58] sm:$0xff]
        %v604 = vld [vmem:[%s1 + $0xc60] sm:$0xff]
        %v605 = vld [vmem:[%s1 + $0xc68] sm:$0xff]
        %v606 = vld [vmem:[%s1 + $0xc70] sm:$0xff]
        %v607 = vld [vmem:[%s1 + $0xc78] sm:$0xff]
        %v608 = vpack.c.bf16 %v233, %v208
        %v609 = vpack.c.bf16 %v234, %v209
        %v610 = vpack.c.bf16 %v235, %v210
        %v611 = vpack.c.bf16 %v236, %v211
        %v612 = vpack.c.bf16 %v237, %v212
        %v613 = vpack.c.bf16 %v238, %v213
        %v614 = vpack.c.bf16 %v239, %v214
        %v615 = vpack.c.bf16 %v240, %v215
        %v616 = vpack.c.bf16 %v241, %v216
        %v617 = vpack.c.bf16 %v242, %v217
        %v618 = vpack.c.bf16 %v243, %v218
        %v619 = vpack.c.bf16 %v244, %v219
        %v620 = vpack.c.bf16 %v245, %v220
        %v621 = vpack.c.bf16 %v246, %v221
        %v622 = vpack.c.bf16 %v247, %v222
        %v623 = vpack.c.bf16 %v248, %v223
        %v624 = vpack.c.bf16 %v249, %v224
        %v625 = vpack.c.bf16 %v250, %v225
        %v626 = vpack.c.bf16 %v251, %v226
        %v627 = vpack.c.bf16 %v252, %v227
        %v628 = vpack.c.bf16 %v253, %v228
        %v629 = vpack.c.bf16 %v254, %v229
        %v630 = vpack.c.bf16 %v255, %v230
        %v631 = vpack.c.bf16 %v256, %v231
        %v632 = vpack.c.bf16 %v257, %v232
        %v633 = vpack.c.bf16 %v283, %v258
        %v634 = vpack.c.bf16 %v284, %v259
        %v635 = vpack.c.bf16 %v285, %v260
        %v636 = vpack.c.bf16 %v286, %v261
        %v637 = vpack.c.bf16 %v287, %v262
        %v638 = vpack.c.bf16 %v288, %v263
        %v639 = vpack.c.bf16 %v289, %v264
        %v640 = vpack.c.bf16 %v290, %v265
        %v641 = vpack.c.bf16 %v291, %v266
        %v642 = vpack.c.bf16 %v292, %v267
        %v643 = vpack.c.bf16 %v293, %v268
        %v644 = vpack.c.bf16 %v294, %v269
        %v645 = vpack.c.bf16 %v295, %v270
        %v646 = vpack.c.bf16 %v296, %v271
        %v647 = vpack.c.bf16 %v297, %v272
        %v648 = vpack.c.bf16 %v298, %v273
        %v649 = vpack.c.bf16 %v299, %v274
        %v650 = vpack.c.bf16 %v300, %v275
        %v651 = vpack.c.bf16 %v301, %v276
        %v652 = vpack.c.bf16 %v302, %v277
        %v653 = vpack.c.bf16 %v303, %v278
        %v654 = vpack.c.bf16 %v304, %v279
        %v655 = vpack.c.bf16 %v305, %v280
        %v656 = vpack.c.bf16 %v306, %v281
        %v657 = vpack.c.bf16 %v307, %v282
        %v658 = vpack.c.bf16 %v333, %v308
        %v659 = vpack.c.bf16 %v334, %v309
        %v660 = vpack.c.bf16 %v335, %v310
        %v661 = vpack.c.bf16 %v336, %v311
        %v662 = vpack.c.bf16 %v337, %v312
        %v663 = vpack.c.bf16 %v338, %v313
        %v664 = vpack.c.bf16 %v339, %v314
        %v665 = vpack.c.bf16 %v340, %v315
        %v666 = vpack.c.bf16 %v341, %v316
        %v667 = vpack.c.bf16 %v342, %v317
        %v668 = vpack.c.bf16 %v343, %v318
        %v669 = vpack.c.bf16 %v344, %v319
        %v670 = vpack.c.bf16 %v345, %v320
        %v671 = vpack.c.bf16 %v346, %v321
        %v672 = vpack.c.bf16 %v347, %v322
        %v673 = vpack.c.bf16 %v348, %v323
        %v674 = vpack.c.bf16 %v349, %v324
        %v675 = vpack.c.bf16 %v350, %v325
        %v676 = vpack.c.bf16 %v351, %v326
        %v677 = vpack.c.bf16 %v352, %v327
        %v678 = vpack.c.bf16 %v353, %v328
        %v679 = vpack.c.bf16 %v354, %v329
        %v680 = vpack.c.bf16 %v355, %v330
        %v681 = vpack.c.bf16 %v356, %v331
        %v682 = vpack.c.bf16 %v357, %v332
        %v683 = vpack.c.bf16 %v383, %v358
        %v684 = vpack.c.bf16 %v384, %v359
        %v685 = vpack.c.bf16 %v385, %v360
        %v686 = vpack.c.bf16 %v386, %v361
        %v687 = vpack.c.bf16 %v387, %v362
        %v688 = vpack.c.bf16 %v388, %v363
        %v689 = vpack.c.bf16 %v389, %v364
        %v690 = vpack.c.bf16 %v390, %v365
        %v691 = vpack.c.bf16 %v391, %v366
        %v692 = vpack.c.bf16 %v392, %v367
        %v693 = vpack.c.bf16 %v393, %v368
        %v694 = vpack.c.bf16 %v394, %v369
        %v695 = vpack.c.bf16 %v395, %v370
        %v696 = vpack.c.bf16 %v396, %v371
        %v697 = vpack.c.bf16 %v397, %v372
        %v698 = vpack.c.bf16 %v398, %v373
        %v699 = vpack.c.bf16 %v399, %v374
        %v700 = vpack.c.bf16 %v400, %v375
        %v701 = vpack.c.bf16 %v401, %v376
        %v702 = vpack.c.bf16 %v402, %v377
        %v703 = vpack.c.bf16 %v403, %v378
        %v704 = vpack.c.bf16 %v404, %v379
        %v705 = vpack.c.bf16 %v405, %v380
        %v706 = vpack.c.bf16 %v406, %v381
        %v707 = vpack.c.bf16 %v407, %v382
        %v708 = vpack.c.bf16 %v433, %v408
        %v709 = vpack.c.bf16 %v434, %v409
        %v710 = vpack.c.bf16 %v435, %v410
        %v711 = vpack.c.bf16 %v436, %v411
        %v712 = vpack.c.bf16 %v437, %v412
        %v713 = vpack.c.bf16 %v438, %v413
        %v714 = vpack.c.bf16 %v439, %v414
        %v715 = vpack.c.bf16 %v440, %v415
        %v716 = vpack.c.bf16 %v441, %v416
        %v717 = vpack.c.bf16 %v442, %v417
        %v718 = vpack.c.bf16 %v443, %v418
        %v719 = vpack.c.bf16 %v444, %v419
        %v720 = vpack.c.bf16 %v445, %v420
        %v721 = vpack.c.bf16 %v446, %v421
        %v722 = vpack.c.bf16 %v447, %v422
        %v723 = vpack.c.bf16 %v448, %v423
        %v724 = vpack.c.bf16 %v449, %v424
        %v725 = vpack.c.bf16 %v450, %v425
        %v726 = vpack.c.bf16 %v451, %v426
        %v727 = vpack.c.bf16 %v452, %v427
        %v728 = vpack.c.bf16 %v453, %v428
        %v729 = vpack.c.bf16 %v454, %v429
        %v730 = vpack.c.bf16 %v455, %v430
        %v731 = vpack.c.bf16 %v456, %v431
        %v732 = vpack.c.bf16 %v457, %v432
        %v733 = vpack.c.bf16 %v483, %v458
        %v734 = vpack.c.bf16 %v484, %v459
        %v735 = vpack.c.bf16 %v485, %v460
        %v736 = vpack.c.bf16 %v486, %v461
        %v737 = vpack.c.bf16 %v487, %v462
        %v738 = vpack.c.bf16 %v488, %v463
        %v739 = vpack.c.bf16 %v489, %v464
        %v740 = vpack.c.bf16 %v490, %v465
        %v741 = vpack.c.bf16 %v491, %v466
        %v742 = vpack.c.bf16 %v492, %v467
        %v743 = vpack.c.bf16 %v493, %v468
        %v744 = vpack.c.bf16 %v494, %v469
        %v745 = vpack.c.bf16 %v495, %v470
        %v746 = vpack.c.bf16 %v496, %v471
        %v747 = vpack.c.bf16 %v497, %v472
        %v748 = vpack.c.bf16 %v498, %v473
        %v749 = vpack.c.bf16 %v499, %v474
        %v750 = vpack.c.bf16 %v500, %v475
        %v751 = vpack.c.bf16 %v501, %v476
        %v752 = vpack.c.bf16 %v502, %v477
        %v753 = vpack.c.bf16 %v503, %v478
        %v754 = vpack.c.bf16 %v504, %v479
        %v755 = vpack.c.bf16 %v505, %v480
        %v756 = vpack.c.bf16 %v506, %v481
        %v757 = vpack.c.bf16 %v507, %v482
        %v758 = vpack.c.bf16 %v533, %v508
        %v759 = vpack.c.bf16 %v534, %v509
        %v760 = vpack.c.bf16 %v535, %v510
        %v761 = vpack.c.bf16 %v536, %v511
        %v762 = vpack.c.bf16 %v537, %v512
        %v763 = vpack.c.bf16 %v538, %v513
        %v764 = vpack.c.bf16 %v539, %v514
        %v765 = vpack.c.bf16 %v540, %v515
        %v766 = vpack.c.bf16 %v541, %v516
        %v767 = vpack.c.bf16 %v542, %v517
        %v768 = vpack.c.bf16 %v543, %v518
        %v769 = vpack.c.bf16 %v544, %v519
        %v770 = vpack.c.bf16 %v545, %v520
        %v771 = vpack.c.bf16 %v546, %v521
        %v772 = vpack.c.bf16 %v547, %v522
        %v773 = vpack.c.bf16 %v548, %v523
        %v774 = vpack.c.bf16 %v549, %v524
        %v775 = vpack.c.bf16 %v550, %v525
        %v776 = vpack.c.bf16 %v551, %v526
        %v777 = vpack.c.bf16 %v552, %v527
        %v778 = vpack.c.bf16 %v553, %v528
        %v779 = vpack.c.bf16 %v554, %v529
        %v780 = vpack.c.bf16 %v555, %v530
        %v781 = vpack.c.bf16 %v556, %v531
        %v782 = vpack.c.bf16 %v557, %v532
        %v783 = vpack.c.bf16 %v583, %v558
        %v784 = vpack.c.bf16 %v584, %v559
        %v785 = vpack.c.bf16 %v585, %v560
        %v786 = vpack.c.bf16 %v586, %v561
        %v787 = vpack.c.bf16 %v587, %v562
        %v788 = vpack.c.bf16 %v588, %v563
        %v789 = vpack.c.bf16 %v589, %v564
        %v790 = vpack.c.bf16 %v590, %v565
        %v791 = vpack.c.bf16 %v591, %v566
        %v792 = vpack.c.bf16 %v592, %v567
        %v793 = vpack.c.bf16 %v593, %v568
        %v794 = vpack.c.bf16 %v594, %v569
        %v795 = vpack.c.bf16 %v595, %v570
        %v796 = vpack.c.bf16 %v596, %v571
        %v797 = vpack.c.bf16 %v597, %v572
        %v798 = vpack.c.bf16 %v598, %v573
        %v799 = vpack.c.bf16 %v599, %v574
        %v800 = vpack.c.bf16 %v600, %v575
        %v801 = vpack.c.bf16 %v601, %v576
        %v802 = vpack.c.bf16 %v602, %v577
        %v803 = vpack.c.bf16 %v603, %v578
        %v804 = vpack.c.bf16 %v604, %v579
        %v805 = vpack.c.bf16 %v605, %v580
        %v806 = vpack.c.bf16 %v606, %v581
        %v807 = vpack.c.bf16 %v607, %v582
        %v808 = vld [vmem:[%s2] sm:$0xf]
        %v809 = vld [vmem:[%s2 + $0x4] sm:$0xf]
        %v810 = vld [vmem:[%s2 + $0x8] sm:$0xf]
        %v814 = vunpack.c.l.b16 %v808
        %v815 = vunpack.c.l.b16 %v809
        %v816 = vunpack.c.l.b16 %v810
        %v817 = vpack.c.b16 %v815, %v814
        %v818 = vpack.c.b16 %v816, %v816
        %821 = vmatprep.subr.bf16.mxu0 %v784
        %822 = vmatpush1.bf16.msra.mxu0 %v783
        %823 = vmatprep.subr.bf16.mxu0 %v759
        %824 = vmatpush1.bf16.msra.mxu0 %v758
        %825 = vmatprep.subr.bf16.mxu0 %v734
        %826 = vmatpush1.bf16.msra.mxu0 %v733
        %827 = vmatprep.subr.bf16.mxu0 %v709
        %828 = vmatpush1.bf16.msra.mxu0 %v708
        %829 = vmatprep.subr.bf16.mxu0 %v684
        %830 = vmatpush1.bf16.msra.mxu0 %v683
        %831 = vmatprep.subr.bf16.mxu0 %v659
        %832 = vmatpush1.bf16.msra.mxu0 %v658
        %833 = vmatprep.subr.bf16.mxu0 %v634
        %834 = vmatpush1.bf16.msra.mxu0 %v633
        %835 = vmatprep.subr.bf16.mxu0 %v609
        %836 = vmatpush1.bf16.msra.mxu0 %v608
        %837 = vmatprep.subr.bf16.mxu0 0
        %838 = vmatpush2.bf16.msra.mxu0 0
        %839 = vmatprep.subr.bf16.mxu0 0
        %840 = vmatpush2.bf16.msra.mxu0 0
        %841 = vmatprep.subr.bf16.mxu0 0
        %842 = vmatpush2.bf16.msra.mxu0 0
        %843 = vmatprep.subr.bf16.mxu0 0
        %844 = vmatpush2.bf16.msra.mxu0 0
        %845 = vmatprep.subr.bf16.mxu0 0
        %846 = vmatpush2.bf16.msra.mxu0 0
        %847 = vmatprep.subr.bf16.mxu0 0
        %848 = vmatpush2.bf16.msra.mxu0 0
        %849 = vmatprep.subr.bf16.mxu0 0
        %850 = vmatpush2.bf16.msra.mxu0 0
        %851 = vmatprep.subr.bf16.mxu0 0
        %852 = vmatpush2.bf16.msra.mxu0 0
        %853 = vmatprep.mubr.bf16.mxu0 0
        %854 = vmatmul.mubr.bf16.gmra.mxu0 %v817
        %v855 = vpop.f32.mrf.mxu0
        %v856 = vadd.f32 0.0, %v855
        %v857 = vpop.f32.mrf.mxu0
        %v858 = vadd.f32 0.0, %v857
        %v859 = vpop.f32.mrf.mxu0
        %v860 = vadd.f32 0.0, %v859
        %v861 = vpop.f32.mrf.mxu0
        %v862 = vadd.f32 0.0, %v861
        %863 = vmatprep.mubr.bf16.mxu0 0
        %864 = vmatmul.mubr.bf16.gmra.mxu0 %v818
        %v865 = vpop.f32.mrf.mxu0
        %v866 = vadd.f32 0.0, %v865
        %v867 = vpop.f32.mrf.mxu0
        %v868 = vadd.f32 0.0, %v867
        %v869 = vpop.f32.mrf.mxu0
        %v870 = vpop.f32.mrf.mxu0
        %871 = vdwg.mxu0
        %872 = vmatprep.subr.bf16.mxu0 %v786
        %873 = vmatpush1.bf16.msra.mxu0 %v785
        %874 = vmatprep.subr.bf16.mxu0 %v761
        %875 = vmatpush1.bf16.msra.mxu0 %v760
        %876 = vmatprep.subr.bf16.mxu0 %v736
        %877 = vmatpush1.bf16.msra.mxu0 %v735
        %878 = vmatprep.subr.bf16.mxu0 %v711
        %879 = vmatpush1.bf16.msra.mxu0 %v710
        %880 = vmatprep.subr.bf16.mxu0 %v686
        %881 = vmatpush1.bf16.msra.mxu0 %v685
        %882 = vmatprep.subr.bf16.mxu0 %v661
        %883 = vmatpush1.bf16.msra.mxu0 %v660
        %884 = vmatprep.subr.bf16.mxu0 %v636
        %885 = vmatpush1.bf16.msra.mxu0 %v635
        %886 = vmatprep.subr.bf16.mxu0 %v611
        %887 = vmatpush1.bf16.msra.mxu0 %v610
        %888 = vmatprep.subr.bf16.mxu0 0
        %889 = vmatpush2.bf16.msra.mxu0 0
        %890 = vmatprep.subr.bf16.mxu0 0
        %891 = vmatpush2.bf16.msra.mxu0 0
        %892 = vmatprep.subr.bf16.mxu0 0
        %893 = vmatpush2.bf16.msra.mxu0 0
        %894 = vmatprep.subr.bf16.mxu0 0
        %895 = vmatpush2.bf16.msra.mxu0 0
        %896 = vmatprep.subr.bf16.mxu0 0
        %897 = vmatpush2.bf16.msra.mxu0 0
        %898 = vmatprep.subr.bf16.mxu0 0
        %899 = vmatpush2.bf16.msra.mxu0 0
        %900 = vmatprep.subr.bf16.mxu0 0
        %901 = vmatpush2.bf16.msra.mxu0 0
        %902 = vmatprep.subr.bf16.mxu0 0
        %903 = vmatpush2.bf16.msra.mxu0 0
        %904 = vmatprep.mubr.bf16.mxu0 0
        %905 = vmatmul.mubr.bf16.gmra.mxu0 %v817
        %v906 = vpop.f32.mrf.mxu0
        %v907 = vadd.f32 0.0, %v906
        %v908 = vpop.f32.mrf.mxu0
        %v909 = vadd.f32 0.0, %v908
        %v910 = vpop.f32.mrf.mxu0
        %v911 = vadd.f32 0.0, %v910
        %v912 = vpop.f32.mrf.mxu0
        %v913 = vadd.f32 0.0, %v912
        %914 = vmatprep.mubr.bf16.mxu0 0
        %915 = vmatmul.mubr.bf16.gmra.mxu0 %v818
        %v916 = vpop.f32.mrf.mxu0
        %v917 = vadd.f32 0.0, %v916
        %v918 = vpop.f32.mrf.mxu0
        %v919 = vadd.f32 0.0, %v918
        %v920 = vpop.f32.mrf.mxu0
        %v921 = vpop.f32.mrf.mxu0
        %922 = vdwg.mxu0
        %923 = vmatprep.subr.bf16.mxu0 %v788
        %924 = vmatpush1.bf16.msra.mxu0 %v787
        %925 = vmatprep.subr.bf16.mxu0 %v763
        %926 = vmatpush1.bf16.msra.mxu0 %v762
        %927 = vmatprep.subr.bf16.mxu0 %v738
        %928 = vmatpush1.bf16.msra.mxu0 %v737
        %929 = vmatprep.subr.bf16.mxu0 %v713
        %930 = vmatpush1.bf16.msra.mxu0 %v712
        %931 = vmatprep.subr.bf16.mxu0 %v688
        %932 = vmatpush1.bf16.msra.mxu0 %v687
        %933 = vmatprep.subr.bf16.mxu0 %v663
        %934 = vmatpush1.bf16.msra.mxu0 %v662
        %935 = vmatprep.subr.bf16.mxu0 %v638
        %936 = vmatpush1.bf16.msra.mxu0 %v637
        %937 = vmatprep.subr.bf16.mxu0 %v613
        %938 = vmatpush1.bf16.msra.mxu0 %v612
        %939 = vmatprep.subr.bf16.mxu0 0
        %940 = vmatpush2.bf16.msra.mxu0 0
        %941 = vmatprep.subr.bf16.mxu0 0
        %942 = vmatpush2.bf16.msra.mxu0 0
        %943 = vmatprep.subr.bf16.mxu0 0
        %944 = vmatpush2.bf16.msra.mxu0 0
        %945 = vmatprep.subr.bf16.mxu0 0
        %946 = vmatpush2.bf16.msra.mxu0 0
        %947 = vmatprep.subr.bf16.mxu0 0
        %948 = vmatpush2.bf16.msra.mxu0 0
        %949 = vmatprep.subr.bf16.mxu0 0
        %950 = vmatpush2.bf16.msra.mxu0 0
        %951 = vmatprep.subr.bf16.mxu0 0
        %952 = vmatpush2.bf16.msra.mxu0 0
        %953 = vmatprep.subr.bf16.mxu0 0
        %954 = vmatpush2.bf16.msra.mxu0 0
        %955 = vmatprep.mubr.bf16.mxu0 0
        %956 = vmatmul.mubr.bf16.gmra.mxu0 %v817
        %v957 = vpop.f32.mrf.mxu0
        %v958 = vadd.f32 0.0, %v957
        %v959 = vpop.f32.mrf.mxu0
        %v960 = vadd.f32 0.0, %v959
        %v961 = vpop.f32.mrf.mxu0
        %v962 = vadd.f32 0.0, %v961
        %v963 = vpop.f32.mrf.mxu0
        %v964 = vadd.f32 0.0, %v963
        %965 = vmatprep.mubr.bf16.mxu0 0
        %966 = vmatmul.mubr.bf16.gmra.mxu0 %v818
        %v967 = vpop.f32.mrf.mxu0
        %v968 = vadd.f32 0.0, %v967
        %v969 = vpop.f32.mrf.mxu0
        %v970 = vadd.f32 0.0, %v969
        %v971 = vpop.f32.mrf.mxu0
        %v972 = vpop.f32.mrf.mxu0
        %973 = vdwg.mxu0
        %974 = vmatprep.subr.bf16.mxu0 %v790
        %975 = vmatpush1.bf16.msra.mxu0 %v789
        %976 = vmatprep.subr.bf16.mxu0 %v765
        %977 = vmatpush1.bf16.msra.mxu0 %v764
        %978 = vmatprep.subr.bf16.mxu0 %v740
        %979 = vmatpush1.bf16.msra.mxu0 %v739
        %980 = vmatprep.subr.bf16.mxu0 %v715
        %981 = vmatpush1.bf16.msra.mxu0 %v714
        %982 = vmatprep.subr.bf16.mxu0 %v690
        %983 = vmatpush1.bf16.msra.mxu0 %v689
        %984 = vmatprep.subr.bf16.mxu0 %v665
        %985 = vmatpush1.bf16.msra.mxu0 %v664
        %986 = vmatprep.subr.bf16.mxu0 %v640
        %987 = vmatpush1.bf16.msra.mxu0 %v639
        %988 = vmatprep.subr.bf16.mxu0 %v615
        %989 = vmatpush1.bf16.msra.mxu0 %v614
        %990 = vmatprep.subr.bf16.mxu0 0
        %991 = vmatpush2.bf16.msra.mxu0 0
        %992 = vmatprep.subr.bf16.mxu0 0
        %993 = vmatpush2.bf16.msra.mxu0 0
        %994 = vmatprep.subr.bf16.mxu0 0
        %995 = vmatpush2.bf16.msra.mxu0 0
        %996 = vmatprep.subr.bf16.mxu0 0
        %997 = vmatpush2.bf16.msra.mxu0 0
        %998 = vmatprep.subr.bf16.mxu0 0
        %999 = vmatpush2.bf16.msra.mxu0 0
        %1000 = vmatprep.subr.bf16.mxu0 0
        %1001 = vmatpush2.bf16.msra.mxu0 0
        %1002 = vmatprep.subr.bf16.mxu0 0
        %1003 = vmatpush2.bf16.msra.mxu0 0
        %1004 = vmatprep.subr.bf16.mxu0 0
        %1005 = vmatpush2.bf16.msra.mxu0 0
        %1006 = vmatprep.mubr.bf16.mxu0 0
        %1007 = vmatmul.mubr.bf16.gmra.mxu0 %v817
        %v1008 = vpop.f32.mrf.mxu0
        %v1009 = vadd.f32 0.0, %v1008
        %v1010 = vpop.f32.mrf.mxu0
        %v1011 = vadd.f32 0.0, %v1010
        %v1012 = vpop.f32.mrf.mxu0
        %v1013 = vadd.f32 0.0, %v1012
        %v1014 = vpop.f32.mrf.mxu0
        %v1015 = vadd.f32 0.0, %v1014
        %1016 = vmatprep.mubr.bf16.mxu0 0
        %1017 = vmatmul.mubr.bf16.gmra.mxu0 %v818
        %v1018 = vpop.f32.mrf.mxu0
        %v1019 = vadd.f32 0.0, %v1018
        %v1020 = vpop.f32.mrf.mxu0
        %v1021 = vadd.f32 0.0, %v1020
        %v1022 = vpop.f32.mrf.mxu0
        %v1023 = vpop.f32.mrf.mxu0
        %1024 = vdwg.mxu0
        %1025 = vmatprep.subr.bf16.mxu0 %v792
        %1026 = vmatpush1.bf16.msra.mxu0 %v791
        %1027 = vmatprep.subr.bf16.mxu0 %v767
        %1028 = vmatpush1.bf16.msra.mxu0 %v766
        %1029 = vmatprep.subr.bf16.mxu0 %v742
        %1030 = vmatpush1.bf16.msra.mxu0 %v741
        %1031 = vmatprep.subr.bf16.mxu0 %v717
        %1032 = vmatpush1.bf16.msra.mxu0 %v716
        %1033 = vmatprep.subr.bf16.mxu0 %v692
        %1034 = vmatpush1.bf16.msra.mxu0 %v691
        %1035 = vmatprep.subr.bf16.mxu0 %v667
        %1036 = vmatpush1.bf16.msra.mxu0 %v666
        %1037 = vmatprep.subr.bf16.mxu0 %v642
        %1038 = vmatpush1.bf16.msra.mxu0 %v641
        %1039 = vmatprep.subr.bf16.mxu0 %v617
        %1040 = vmatpush1.bf16.msra.mxu0 %v616
        %1041 = vmatprep.subr.bf16.mxu0 0
        %1042 = vmatpush2.bf16.msra.mxu0 0
        %1043 = vmatprep.subr.bf16.mxu0 0
        %1044 = vmatpush2.bf16.msra.mxu0 0
        %1045 = vmatprep.subr.bf16.mxu0 0
        %1046 = vmatpush2.bf16.msra.mxu0 0
        %1047 = vmatprep.subr.bf16.mxu0 0
        %1048 = vmatpush2.bf16.msra.mxu0 0
        %1049 = vmatprep.subr.bf16.mxu0 0
        %1050 = vmatpush2.bf16.msra.mxu0 0
        %1051 = vmatprep.subr.bf16.mxu0 0
        %1052 = vmatpush2.bf16.msra.mxu0 0
        %1053 = vmatprep.subr.bf16.mxu0 0
        %1054 = vmatpush2.bf16.msra.mxu0 0
        %1055 = vmatprep.subr.bf16.mxu0 0
        %1056 = vmatpush2.bf16.msra.mxu0 0
        %1057 = vmatprep.mubr.bf16.mxu0 0
        %1058 = vmatmul.mubr.bf16.gmra.mxu0 %v817
        %v1059 = vpop.f32.mrf.mxu0
        %v1060 = vadd.f32 0.0, %v1059
        %v1061 = vpop.f32.mrf.mxu0
        %v1062 = vadd.f32 0.0, %v1061
        %v1063 = vpop.f32.mrf.mxu0
        %v1064 = vadd.f32 0.0, %v1063
        %v1065 = vpop.f32.mrf.mxu0
        %v1066 = vadd.f32 0.0, %v1065
        %1067 = vmatprep.mubr.bf16.mxu0 0
        %1068 = vmatmul.mubr.bf16.gmra.mxu0 %v818
        %v1069 = vpop.f32.mrf.mxu0
        %v1070 = vadd.f32 0.0, %v1069
        %v1071 = vpop.f32.mrf.mxu0
        %v1072 = vadd.f32 0.0, %v1071
        %v1073 = vpop.f32.mrf.mxu0
        %v1074 = vpop.f32.mrf.mxu0
        %1075 = vdwg.mxu0
        %1076 = vmatprep.subr.bf16.mxu0 %v794
        %1077 = vmatpush1.bf16.msra.mxu0 %v793
        %1078 = vmatprep.subr.bf16.mxu0 %v769
        %1079 = vmatpush1.bf16.msra.mxu0 %v768
        %1080 = vmatprep.subr.bf16.mxu0 %v744
        %1081 = vmatpush1.bf16.msra.mxu0 %v743
        %1082 = vmatprep.subr.bf16.mxu0 %v719
        %1083 = vmatpush1.bf16.msra.mxu0 %v718
        %1084 = vmatprep.subr.bf16.mxu0 %v694
        %1085 = vmatpush1.bf16.msra.mxu0 %v693
        %1086 = vmatprep.subr.bf16.mxu0 %v669
        %1087 = vmatpush1.bf16.msra.mxu0 %v668
        %1088 = vmatprep.subr.bf16.mxu0 %v644
        %1089 = vmatpush1.bf16.msra.mxu0 %v643
        %1090 = vmatprep.subr.bf16.mxu0 %v619
        %1091 = vmatpush1.bf16.msra.mxu0 %v618
        %1092 = vmatprep.subr.bf16.mxu0 0
        %1093 = vmatpush2.bf16.msra.mxu0 0
        %1094 = vmatprep.subr.bf16.mxu0 0
        %1095 = vmatpush2.bf16.msra.mxu0 0
        %1096 = vmatprep.subr.bf16.mxu0 0
        %1097 = vmatpush2.bf16.msra.mxu0 0
        %1098 = vmatprep.subr.bf16.mxu0 0
        %1099 = vmatpush2.bf16.msra.mxu0 0
        %1100 = vmatprep.subr.bf16.mxu0 0
        %1101 = vmatpush2.bf16.msra.mxu0 0
        %1102 = vmatprep.subr.bf16.mxu0 0
        %1103 = vmatpush2.bf16.msra.mxu0 0
        %1104 = vmatprep.subr.bf16.mxu0 0
        %1105 = vmatpush2.bf16.msra.mxu0 0
        %1106 = vmatprep.subr.bf16.mxu0 0
        %1107 = vmatpush2.bf16.msra.mxu0 0
        %1108 = vmatprep.mubr.bf16.mxu0 0
        %1109 = vmatmul.mubr.bf16.gmra.mxu0 %v817
        %v1110 = vpop.f32.mrf.mxu0
        %v1111 = vadd.f32 0.0, %v1110
        %v1112 = vpop.f32.mrf.mxu0
        %v1113 = vadd.f32 0.0, %v1112
        %v1114 = vpop.f32.mrf.mxu0
        %v1115 = vadd.f32 0.0, %v1114
        %v1116 = vpop.f32.mrf.mxu0
        %v1117 = vadd.f32 0.0, %v1116
        %1118 = vmatprep.mubr.bf16.mxu0 0
        %1119 = vmatmul.mubr.bf16.gmra.mxu0 %v818
        %v1120 = vpop.f32.mrf.mxu0
        %v1121 = vadd.f32 0.0, %v1120
        %v1122 = vpop.f32.mrf.mxu0
        %v1123 = vadd.f32 0.0, %v1122
        %v1124 = vpop.f32.mrf.mxu0
        %v1125 = vpop.f32.mrf.mxu0
        %1126 = vdwg.mxu0
        %1127 = vmatprep.subr.bf16.mxu0 %v796
        %1128 = vmatpush1.bf16.msra.mxu0 %v795
        %1129 = vmatprep.subr.bf16.mxu0 %v771
        %1130 = vmatpush1.bf16.msra.mxu0 %v770
        %1131 = vmatprep.subr.bf16.mxu0 %v746
        %1132 = vmatpush1.bf16.msra.mxu0 %v745
        %1133 = vmatprep.subr.bf16.mxu0 %v721
        %1134 = vmatpush1.bf16.msra.mxu0 %v720
        %1135 = vmatprep.subr.bf16.mxu0 %v696
        %1136 = vmatpush1.bf16.msra.mxu0 %v695
        %1137 = vmatprep.subr.bf16.mxu0 %v671
        %1138 = vmatpush1.bf16.msra.mxu0 %v670
        %1139 = vmatprep.subr.bf16.mxu0 %v646
        %1140 = vmatpush1.bf16.msra.mxu0 %v645
        %1141 = vmatprep.subr.bf16.mxu0 %v621
        %1142 = vmatpush1.bf16.msra.mxu0 %v620
        %1143 = vmatprep.subr.bf16.mxu0 0
        %1144 = vmatpush2.bf16.msra.mxu0 0
        %1145 = vmatprep.subr.bf16.mxu0 0
        %1146 = vmatpush2.bf16.msra.mxu0 0
        %1147 = vmatprep.subr.bf16.mxu0 0
        %1148 = vmatpush2.bf16.msra.mxu0 0
        %1149 = vmatprep.subr.bf16.mxu0 0
        %1150 = vmatpush2.bf16.msra.mxu0 0
        %1151 = vmatprep.subr.bf16.mxu0 0
        %1152 = vmatpush2.bf16.msra.mxu0 0
        %1153 = vmatprep.subr.bf16.mxu0 0
        %1154 = vmatpush2.bf16.msra.mxu0 0
        %1155 = vmatprep.subr.bf16.mxu0 0
        %1156 = vmatpush2.bf16.msra.mxu0 0
        %1157 = vmatprep.subr.bf16.mxu0 0
        %1158 = vmatpush2.bf16.msra.mxu0 0
        %1159 = vmatprep.mubr.bf16.mxu0 0
        %1160 = vmatmul.mubr.bf16.gmra.mxu0 %v817
        %v1161 = vpop.f32.mrf.mxu0
        %v1162 = vadd.f32 0.0, %v1161
        %v1163 = vpop.f32.mrf.mxu0
        %v1164 = vadd.f32 0.0, %v1163
        %v1165 = vpop.f32.mrf.mxu0
        %v1166 = vadd.f32 0.0, %v1165
        %v1167 = vpop.f32.mrf.mxu0
        %v1168 = vadd.f32 0.0, %v1167
        %1169 = vmatprep.mubr.bf16.mxu0 0
        %1170 = vmatmul.mubr.bf16.gmra.mxu0 %v818
        %v1171 = vpop.f32.mrf.mxu0
        %v1172 = vadd.f32 0.0, %v1171
        %v1173 = vpop.f32.mrf.mxu0
        %v1174 = vadd.f32 0.0, %v1173
        %v1175 = vpop.f32.mrf.mxu0
        %v1176 = vpop.f32.mrf.mxu0
        %1177 = vdwg.mxu0
        %1178 = vmatprep.subr.bf16.mxu0 %v798
        %1179 = vmatpush1.bf16.msra.mxu0 %v797
        %1180 = vmatprep.subr.bf16.mxu0 %v773
        %1181 = vmatpush1.bf16.msra.mxu0 %v772
        %1182 = vmatprep.subr.bf16.mxu0 %v748
        %1183 = vmatpush1.bf16.msra.mxu0 %v747
        %1184 = vmatprep.subr.bf16.mxu0 %v723
        %1185 = vmatpush1.bf16.msra.mxu0 %v722
        %1186 = vmatprep.subr.bf16.mxu0 %v698
        %1187 = vmatpush1.bf16.msra.mxu0 %v697
        %1188 = vmatprep.subr.bf16.mxu0 %v673
        %1189 = vmatpush1.bf16.msra.mxu0 %v672
        %1190 = vmatprep.subr.bf16.mxu0 %v648
        %1191 = vmatpush1.bf16.msra.mxu0 %v647
        %1192 = vmatprep.subr.bf16.mxu0 %v623
        %1193 = vmatpush1.bf16.msra.mxu0 %v622
        %1194 = vmatprep.subr.bf16.mxu0 0
        %1195 = vmatpush2.bf16.msra.mxu0 0
        %1196 = vmatprep.subr.bf16.mxu0 0
        %1197 = vmatpush2.bf16.msra.mxu0 0
        %1198 = vmatprep.subr.bf16.mxu0 0
        %1199 = vmatpush2.bf16.msra.mxu0 0
        %1200 = vmatprep.subr.bf16.mxu0 0
        %1201 = vmatpush2.bf16.msra.mxu0 0
        %1202 = vmatprep.subr.bf16.mxu0 0
        %1203 = vmatpush2.bf16.msra.mxu0 0
        %1204 = vmatprep.subr.bf16.mxu0 0
        %1205 = vmatpush2.bf16.msra.mxu0 0
        %1206 = vmatprep.subr.bf16.mxu0 0
        %1207 = vmatpush2.bf16.msra.mxu0 0
        %1208 = vmatprep.subr.bf16.mxu0 0
        %1209 = vmatpush2.bf16.msra.mxu0 0
        %1210 = vmatprep.mubr.bf16.mxu0 0
        %1211 = vmatmul.mubr.bf16.gmra.mxu0 %v817
        %v1212 = vpop.f32.mrf.mxu0
        %v1213 = vadd.f32 0.0, %v1212
        %v1214 = vpop.f32.mrf.mxu0
        %v1215 = vadd.f32 0.0, %v1214
        %v1216 = vpop.f32.mrf.mxu0
        %v1217 = vadd.f32 0.0, %v1216
        %v1218 = vpop.f32.mrf.mxu0
        %v1219 = vadd.f32 0.0, %v1218
        %1220 = vmatprep.mubr.bf16.mxu0 0
        %1221 = vmatmul.mubr.bf16.gmra.mxu0 %v818
        %v1222 = vpop.f32.mrf.mxu0
        %v1223 = vadd.f32 0.0, %v1222
        %v1224 = vpop.f32.mrf.mxu0
        %v1225 = vadd.f32 0.0, %v1224
        %v1226 = vpop.f32.mrf.mxu0
        %v1227 = vpop.f32.mrf.mxu0
        %1228 = vdwg.mxu0
        %1229 = vmatprep.subr.bf16.mxu0 %v800
        %1230 = vmatpush1.bf16.msra.mxu0 %v799
        %1231 = vmatprep.subr.bf16.mxu0 %v775
        %1232 = vmatpush1.bf16.msra.mxu0 %v774
        %1233 = vmatprep.subr.bf16.mxu0 %v750
        %1234 = vmatpush1.bf16.msra.mxu0 %v749
        %1235 = vmatprep.subr.bf16.mxu0 %v725
        %1236 = vmatpush1.bf16.msra.mxu0 %v724
        %1237 = vmatprep.subr.bf16.mxu0 %v700
        %1238 = vmatpush1.bf16.msra.mxu0 %v699
        %1239 = vmatprep.subr.bf16.mxu0 %v675
        %1240 = vmatpush1.bf16.msra.mxu0 %v674
        %1241 = vmatprep.subr.bf16.mxu0 %v650
        %1242 = vmatpush1.bf16.msra.mxu0 %v649
        %1243 = vmatprep.subr.bf16.mxu0 %v625
        %1244 = vmatpush1.bf16.msra.mxu0 %v624
        %1245 = vmatprep.subr.bf16.mxu0 0
        %1246 = vmatpush2.bf16.msra.mxu0 0
        %1247 = vmatprep.subr.bf16.mxu0 0
        %1248 = vmatpush2.bf16.msra.mxu0 0
        %1249 = vmatprep.subr.bf16.mxu0 0
        %1250 = vmatpush2.bf16.msra.mxu0 0
        %1251 = vmatprep.subr.bf16.mxu0 0
        %1252 = vmatpush2.bf16.msra.mxu0 0
        %1253 = vmatprep.subr.bf16.mxu0 0
        %1254 = vmatpush2.bf16.msra.mxu0 0
        %1255 = vmatprep.subr.bf16.mxu0 0
        %1256 = vmatpush2.bf16.msra.mxu0 0
        %1257 = vmatprep.subr.bf16.mxu0 0
        %1258 = vmatpush2.bf16.msra.mxu0 0
        %1259 = vmatprep.subr.bf16.mxu0 0
        %1260 = vmatpush2.bf16.msra.mxu0 0
        %1261 = vmatprep.mubr.bf16.mxu0 0
        %1262 = vmatmul.mubr.bf16.gmra.mxu0 %v817
        %v1263 = vpop.f32.mrf.mxu0
        %v1264 = vadd.f32 0.0, %v1263
        %v1265 = vpop.f32.mrf.mxu0
        %v1266 = vadd.f32 0.0, %v1265
        %v1267 = vpop.f32.mrf.mxu0
        %v1268 = vadd.f32 0.0, %v1267
        %v1269 = vpop.f32.mrf.mxu0
        %v1270 = vadd.f32 0.0, %v1269
        %1271 = vmatprep.mubr.bf16.mxu0 0
        %1272 = vmatmul.mubr.bf16.gmra.mxu0 %v818
        %v1273 = vpop.f32.mrf.mxu0
        %v1274 = vadd.f32 0.0, %v1273
        %v1275 = vpop.f32.mrf.mxu0
        %v1276 = vadd.f32 0.0, %v1275
        %v1277 = vpop.f32.mrf.mxu0
        %v1278 = vpop.f32.mrf.mxu0
        %1279 = vdwg.mxu0
        %1280 = vmatprep.subr.bf16.mxu0 %v802
        %1281 = vmatpush1.bf16.msra.mxu0 %v801
        %1282 = vmatprep.subr.bf16.mxu0 %v777
        %1283 = vmatpush1.bf16.msra.mxu0 %v776
        %1284 = vmatprep.subr.bf16.mxu0 %v752
        %1285 = vmatpush1.bf16.msra.mxu0 %v751
        %1286 = vmatprep.subr.bf16.mxu0 %v727
        %1287 = vmatpush1.bf16.msra.mxu0 %v726
        %1288 = vmatprep.subr.bf16.mxu0 %v702
        %1289 = vmatpush1.bf16.msra.mxu0 %v701
        %1290 = vmatprep.subr.bf16.mxu0 %v677
        %1291 = vmatpush1.bf16.msra.mxu0 %v676
        %1292 = vmatprep.subr.bf16.mxu0 %v652
        %1293 = vmatpush1.bf16.msra.mxu0 %v651
        %1294 = vmatprep.subr.bf16.mxu0 %v627
        %1295 = vmatpush1.bf16.msra.mxu0 %v626
        %1296 = vmatprep.subr.bf16.mxu0 0
        %1297 = vmatpush2.bf16.msra.mxu0 0
        %1298 = vmatprep.subr.bf16.mxu0 0
        %1299 = vmatpush2.bf16.msra.mxu0 0
        %1300 = vmatprep.subr.bf16.mxu0 0
        %1301 = vmatpush2.bf16.msra.mxu0 0
        %1302 = vmatprep.subr.bf16.mxu0 0
        %1303 = vmatpush2.bf16.msra.mxu0 0
        %1304 = vmatprep.subr.bf16.mxu0 0
        %1305 = vmatpush2.bf16.msra.mxu0 0
        %1306 = vmatprep.subr.bf16.mxu0 0
        %1307 = vmatpush2.bf16.msra.mxu0 0
        %1308 = vmatprep.subr.bf16.mxu0 0
        %1309 = vmatpush2.bf16.msra.mxu0 0
        %1310 = vmatprep.subr.bf16.mxu0 0
        %1311 = vmatpush2.bf16.msra.mxu0 0
        %1312 = vmatprep.mubr.bf16.mxu0 0
        %1313 = vmatmul.mubr.bf16.gmra.mxu0 %v817
        %v1314 = vpop.f32.mrf.mxu0
        %v1315 = vadd.f32 0.0, %v1314
        %v1316 = vpop.f32.mrf.mxu0
        %v1317 = vadd.f32 0.0, %v1316
        %v1318 = vpop.f32.mrf.mxu0
        %v1319 = vadd.f32 0.0, %v1318
        %v1320 = vpop.f32.mrf.mxu0
        %v1321 = vadd.f32 0.0, %v1320
        %1322 = vmatprep.mubr.bf16.mxu0 0
        %1323 = vmatmul.mubr.bf16.gmra.mxu0 %v818
        %v1324 = vpop.f32.mrf.mxu0
        %v1325 = vadd.f32 0.0, %v1324
        %v1326 = vpop.f32.mrf.mxu0
        %v1327 = vadd.f32 0.0, %v1326
        %v1328 = vpop.f32.mrf.mxu0
        %v1329 = vpop.f32.mrf.mxu0
        %1330 = vdwg.mxu0
        %1331 = vmatprep.subr.bf16.mxu0 %v804
        %1332 = vmatpush1.bf16.msra.mxu0 %v803
        %1333 = vmatprep.subr.bf16.mxu0 %v779
        %1334 = vmatpush1.bf16.msra.mxu0 %v778
        %1335 = vmatprep.subr.bf16.mxu0 %v754
        %1336 = vmatpush1.bf16.msra.mxu0 %v753
        %1337 = vmatprep.subr.bf16.mxu0 %v729
        %1338 = vmatpush1.bf16.msra.mxu0 %v728
        %1339 = vmatprep.subr.bf16.mxu0 %v704
        %1340 = vmatpush1.bf16.msra.mxu0 %v703
        %1341 = vmatprep.subr.bf16.mxu0 %v679
        %1342 = vmatpush1.bf16.msra.mxu0 %v678
        %1343 = vmatprep.subr.bf16.mxu0 %v654
        %1344 = vmatpush1.bf16.msra.mxu0 %v653
        %1345 = vmatprep.subr.bf16.mxu0 %v629
        %1346 = vmatpush1.bf16.msra.mxu0 %v628
        %1347 = vmatprep.subr.bf16.mxu0 0
        %1348 = vmatpush2.bf16.msra.mxu0 0
        %1349 = vmatprep.subr.bf16.mxu0 0
        %1350 = vmatpush2.bf16.msra.mxu0 0
        %1351 = vmatprep.subr.bf16.mxu0 0
        %1352 = vmatpush2.bf16.msra.mxu0 0
        %1353 = vmatprep.subr.bf16.mxu0 0
        %1354 = vmatpush2.bf16.msra.mxu0 0
        %1355 = vmatprep.subr.bf16.mxu0 0
        %1356 = vmatpush2.bf16.msra.mxu0 0
        %1357 = vmatprep.subr.bf16.mxu0 0
        %1358 = vmatpush2.bf16.msra.mxu0 0
        %1359 = vmatprep.subr.bf16.mxu0 0
        %1360 = vmatpush2.bf16.msra.mxu0 0
        %1361 = vmatprep.subr.bf16.mxu0 0
        %1362 = vmatpush2.bf16.msra.mxu0 0
        %1363 = vmatprep.mubr.bf16.mxu0 0
        %1364 = vmatmul.mubr.bf16.gmra.mxu0 %v817
        %v1365 = vpop.f32.mrf.mxu0
        %v1366 = vadd.f32 0.0, %v1365
        %v1367 = vpop.f32.mrf.mxu0
        %v1368 = vadd.f32 0.0, %v1367
        %v1369 = vpop.f32.mrf.mxu0
        %v1370 = vadd.f32 0.0, %v1369
        %v1371 = vpop.f32.mrf.mxu0
        %v1372 = vadd.f32 0.0, %v1371
        %1373 = vmatprep.mubr.bf16.mxu0 0
        %1374 = vmatmul.mubr.bf16.gmra.mxu0 %v818
        %v1375 = vpop.f32.mrf.mxu0
        %v1376 = vadd.f32 0.0, %v1375
        %v1377 = vpop.f32.mrf.mxu0
        %v1378 = vadd.f32 0.0, %v1377
        %v1379 = vpop.f32.mrf.mxu0
        %v1380 = vpop.f32.mrf.mxu0
        %1381 = vdwg.mxu0
        %1382 = vmatprep.subr.bf16.mxu0 %v806
        %1383 = vmatpush1.bf16.msra.mxu0 %v805
        %1384 = vmatprep.subr.bf16.mxu0 %v781
        %1385 = vmatpush1.bf16.msra.mxu0 %v780
        %1386 = vmatprep.subr.bf16.mxu0 %v756
        %1387 = vmatpush1.bf16.msra.mxu0 %v755
        %1388 = vmatprep.subr.bf16.mxu0 %v731
        %1389 = vmatpush1.bf16.msra.mxu0 %v730
        %1390 = vmatprep.subr.bf16.mxu0 %v706
        %1391 = vmatpush1.bf16.msra.mxu0 %v705
        %1392 = vmatprep.subr.bf16.mxu0 %v681
        %1393 = vmatpush1.bf16.msra.mxu0 %v680
        %1394 = vmatprep.subr.bf16.mxu0 %v656
        %1395 = vmatpush1.bf16.msra.mxu0 %v655
        %1396 = vmatprep.subr.bf16.mxu0 %v631
        %1397 = vmatpush1.bf16.msra.mxu0 %v630
        %1398 = vmatprep.subr.bf16.mxu0 0
        %1399 = vmatpush2.bf16.msra.mxu0 0
        %1400 = vmatprep.subr.bf16.mxu0 0
        %1401 = vmatpush2.bf16.msra.mxu0 0
        %1402 = vmatprep.subr.bf16.mxu0 0
        %1403 = vmatpush2.bf16.msra.mxu0 0
        %1404 = vmatprep.subr.bf16.mxu0 0
        %1405 = vmatpush2.bf16.msra.mxu0 0
        %1406 = vmatprep.subr.bf16.mxu0 0
        %1407 = vmatpush2.bf16.msra.mxu0 0
        %1408 = vmatprep.subr.bf16.mxu0 0
        %1409 = vmatpush2.bf16.msra.mxu0 0
        %1410 = vmatprep.subr.bf16.mxu0 0
        %1411 = vmatpush2.bf16.msra.mxu0 0
        %1412 = vmatprep.subr.bf16.mxu0 0
        %1413 = vmatpush2.bf16.msra.mxu0 0
        %1414 = vmatprep.mubr.bf16.mxu0 0
        %1415 = vmatmul.mubr.bf16.gmra.mxu0 %v817
        %v1416 = vpop.f32.mrf.mxu0
        %v1417 = vadd.f32 0.0, %v1416
        %v1418 = vpop.f32.mrf.mxu0
        %v1419 = vadd.f32 0.0, %v1418
        %v1420 = vpop.f32.mrf.mxu0
        %v1421 = vadd.f32 0.0, %v1420
        %v1422 = vpop.f32.mrf.mxu0
        %v1423 = vadd.f32 0.0, %v1422
        %1424 = vmatprep.mubr.bf16.mxu0 0
        %1425 = vmatmul.mubr.bf16.gmra.mxu0 %v818
        %v1426 = vpop.f32.mrf.mxu0
        %v1427 = vadd.f32 0.0, %v1426
        %v1428 = vpop.f32.mrf.mxu0
        %v1429 = vadd.f32 0.0, %v1428
        %v1430 = vpop.f32.mrf.mxu0
        %v1431 = vpop.f32.mrf.mxu0
        %1432 = vdwg.mxu0
        %1433 = vmatprep.subr.bf16.mxu0 0
        %1434 = vmatpush1.bf16.msra.mxu0 %v807
        %1435 = vmatprep.subr.bf16.mxu0 0
        %1436 = vmatpush1.bf16.msra.mxu0 %v782
        %1437 = vmatprep.subr.bf16.mxu0 0
        %1438 = vmatpush1.bf16.msra.mxu0 %v757
        %1439 = vmatprep.subr.bf16.mxu0 0
        %1440 = vmatpush1.bf16.msra.mxu0 %v732
        %1441 = vmatprep.subr.bf16.mxu0 0
        %1442 = vmatpush1.bf16.msra.mxu0 %v707
        %1443 = vmatprep.subr.bf16.mxu0 0
        %1444 = vmatpush1.bf16.msra.mxu0 %v682
        %1445 = vmatprep.subr.bf16.mxu0 0
        %1446 = vmatpush1.bf16.msra.mxu0 %v657
        %1447 = vmatprep.subr.bf16.mxu0 0
        %1448 = vmatpush1.bf16.msra.mxu0 %v632
        %1449 = vmatprep.subr.bf16.mxu0 0
        %1450 = vmatpush2.bf16.msra.mxu0 0
        %1451 = vmatprep.subr.bf16.mxu0 0
        %1452 = vmatpush2.bf16.msra.mxu0 0
        %1453 = vmatprep.subr.bf16.mxu0 0
        %1454 = vmatpush2.bf16.msra.mxu0 0
        %1455 = vmatprep.subr.bf16.mxu0 0
        %1456 = vmatpush2.bf16.msra.mxu0 0
        %1457 = vmatprep.subr.bf16.mxu0 0
        %1458 = vmatpush2.bf16.msra.mxu0 0
        %1459 = vmatprep.subr.bf16.mxu0 0
        %1460 = vmatpush2.bf16.msra.mxu0 0
        %1461 = vmatprep.subr.bf16.mxu0 0
        %1462 = vmatpush2.bf16.msra.mxu0 0
        %1463 = vmatprep.subr.bf16.mxu0 0
        %1464 = vmatpush2.bf16.msra.mxu0 0
        %1465 = vmatprep.mubr.bf16.mxu0 0
        %1466 = vmatmul.mubr.bf16.gmra.mxu0 %v817
        %v1467 = vpop.f32.mrf.mxu0
        %v1468 = vadd.f32 0.0, %v1467
        %v1469 = vpop.f32.mrf.mxu0
        %v1470 = vpop.f32.mrf.mxu0
        %v1471 = vadd.f32 0.0, %v1470
        %v1472 = vpop.f32.mrf.mxu0
        %1473 = vmatprep.mubr.bf16.mxu0 0
        %1474 = vmatmul.mubr.bf16.gmra.mxu0 %v818
        %v1475 = vpop.f32.mrf.mxu0
        %v1476 = vadd.f32 0.0, %v1475
        %v1477 = vpop.f32.mrf.mxu0
        %v1478 = vpop.f32.mrf.mxu0
        %v1479 = vpop.f32.mrf.mxu0
        %1480 = vdwg.mxu0
        %v1481 = vlaneseq
        %v1482 = vand.u32 %v1481, 127
        %v1483 = vadd.s32 %v1482, 128
        %v1484 = vadd.s32 %v1482, 256
        %v1485 = vadd.s32 %v1482, 384
        %v1486 = vadd.s32 %v1482, 512
        %v1487 = vadd.s32 %v1482, 640
        %v1488 = vadd.s32 %v1482, 768
        %v1489 = vadd.s32 %v1482, 896
        %v1490 = vadd.s32 %v1482, 1024
        %v1491 = vadd.s32 %v1482, 1152
        %v1492 = vadd.s32 %v1482, 1280
        %v1493 = vadd.s32 %v1482, 1408
        %v1494 = vadd.s32 %v1482, 1536
        %v1495 = vadd.s32 %v1482, 1664
        %v1496 = vadd.s32 %v1482, 1792
        %v1497 = vadd.s32 %v1482, 1920
        %v1498 = vadd.s32 %v1482, 2048
        %v1499 = vadd.s32 %v1482, 2176
        %v1500 = vadd.s32 %v1482, 2304
        %v1501 = vadd.s32 %v1482, 2432
        %v1502 = vadd.s32 %v1482, 2560
        %v1503 = vadd.s32 %v1482, 2688
        %v1504 = vadd.s32 %v1482, 2816
        %v1505 = vadd.s32 %v1482, 2944
        %v1506 = vadd.s32 %v1482, 3072
        %vm1507 = vcmp.ge.s32.totalorder %v1482, 56
        %vm1508 = vcmp.ge.s32.totalorder %v1483, 56
        %vm1509 = vcmp.ge.s32.totalorder %v1484, 56
        %vm1510 = vcmp.ge.s32.totalorder %v1485, 56
        %vm1511 = vcmp.ge.s32.totalorder %v1486, 56
        %vm1512 = vcmp.ge.s32.totalorder %v1487, 56
        %vm1513 = vcmp.ge.s32.totalorder %v1488, 56
        %vm1514 = vcmp.ge.s32.totalorder %v1489, 56
        %vm1515 = vcmp.ge.s32.totalorder %v1490, 56
        %vm1516 = vcmp.ge.s32.totalorder %v1491, 56
        %vm1517 = vcmp.ge.s32.totalorder %v1492, 56
        %vm1518 = vcmp.ge.s32.totalorder %v1493, 56
        %vm1519 = vcmp.ge.s32.totalorder %v1494, 56
        %vm1520 = vcmp.ge.s32.totalorder %v1495, 56
        %vm1521 = vcmp.ge.s32.totalorder %v1496, 56
        %vm1522 = vcmp.ge.s32.totalorder %v1497, 56
        %vm1523 = vcmp.ge.s32.totalorder %v1498, 56
        %vm1524 = vcmp.ge.s32.totalorder %v1499, 56
        %vm1525 = vcmp.ge.s32.totalorder %v1500, 56
        %vm1526 = vcmp.ge.s32.totalorder %v1501, 56
        %vm1527 = vcmp.ge.s32.totalorder %v1502, 56
        %vm1528 = vcmp.ge.s32.totalorder %v1503, 56
        %vm1529 = vcmp.ge.s32.totalorder %v1504, 56
        %vm1530 = vcmp.ge.s32.totalorder %v1505, 56
        %vm1531 = vcmp.ge.s32.totalorder %v1506, 56
        %vm1532 = vcmp.lt.s32.totalorder %v1482, 3080
        %vm1533 = vcmp.lt.s32.totalorder %v1483, 3080
        %vm1534 = vcmp.lt.s32.totalorder %v1484, 3080
        %vm1535 = vcmp.lt.s32.totalorder %v1485, 3080
        %vm1536 = vcmp.lt.s32.totalorder %v1486, 3080
        %vm1537 = vcmp.lt.s32.totalorder %v1487, 3080
        %vm1538 = vcmp.lt.s32.totalorder %v1488, 3080
        %vm1539 = vcmp.lt.s32.totalorder %v1489, 3080
        %vm1540 = vcmp.lt.s32.totalorder %v1490, 3080
        %vm1541 = vcmp.lt.s32.totalorder %v1491, 3080
        %vm1542 = vcmp.lt.s32.totalorder %v1492, 3080
        %vm1543 = vcmp.lt.s32.totalorder %v1493, 3080
        %vm1544 = vcmp.lt.s32.totalorder %v1494, 3080
        %vm1545 = vcmp.lt.s32.totalorder %v1495, 3080
        %vm1546 = vcmp.lt.s32.totalorder %v1496, 3080
        %vm1547 = vcmp.lt.s32.totalorder %v1497, 3080
        %vm1548 = vcmp.lt.s32.totalorder %v1498, 3080
        %vm1549 = vcmp.lt.s32.totalorder %v1499, 3080
        %vm1550 = vcmp.lt.s32.totalorder %v1500, 3080
        %vm1551 = vcmp.lt.s32.totalorder %v1501, 3080
        %vm1552 = vcmp.lt.s32.totalorder %v1502, 3080
        %vm1553 = vcmp.lt.s32.totalorder %v1503, 3080
        %vm1554 = vcmp.lt.s32.totalorder %v1504, 3080
        %vm1555 = vcmp.lt.s32.totalorder %v1505, 3080
        %vm1556 = vcmp.lt.s32.totalorder %v1506, 3080
        %1559 = vrot.lane.b32.xlu0 %v1419, 48
        %v1560 = vpop.permute.xlu0 %1559
        %1561 = vrot.lane.b32.xlu0 %v1468, 48
        %v1562 = vpop.permute.xlu0 %1561
        %vm1563 = vcmask 392192
        %v1564 = vsel %vm1563, %v1560, %v1562
        %1589 = vrot.lane.b32.xlu0 %v856, 112
        %v1590 = vpop.permute.xlu0 %1589
        %1591 = vrot.lane.b32.xlu0 %v858, 112
        %v1592 = vpop.permute.xlu0 %1591
        %1593 = vrot.lane.b32.xlu0 %v907, 112
        %v1594 = vpop.permute.xlu0 %1593
        %1595 = vrot.lane.b32.xlu0 %v909, 112
        %v1596 = vpop.permute.xlu0 %1595
        %1597 = vrot.lane.b32.xlu0 %v958, 112
        %v1598 = vpop.permute.xlu0 %1597
        %1599 = vrot.lane.b32.xlu0 %v960, 112
        %v1600 = vpop.permute.xlu0 %1599
        %1601 = vrot.lane.b32.xlu0 %v1009, 112
        %v1602 = vpop.permute.xlu0 %1601
        %1603 = vrot.lane.b32.xlu0 %v1011, 112
        %v1604 = vpop.permute.xlu0 %1603
        %1605 = vrot.lane.b32.xlu0 %v1060, 112
        %v1606 = vpop.permute.xlu0 %1605
        %1607 = vrot.lane.b32.xlu0 %v1062, 112
        %v1608 = vpop.permute.xlu0 %1607
        %1609 = vrot.lane.b32.xlu0 %v1111, 112
        %v1610 = vpop.permute.xlu0 %1609
        %1611 = vrot.lane.b32.xlu0 %v1113, 112
        %v1612 = vpop.permute.xlu0 %1611
        %1613 = vrot.lane.b32.xlu0 %v1162, 112
        %v1614 = vpop.permute.xlu0 %1613
        %1615 = vrot.lane.b32.xlu0 %v1164, 112
        %v1616 = vpop.permute.xlu0 %1615
        %1617 = vrot.lane.b32.xlu0 %v1213, 112
        %v1618 = vpop.permute.xlu0 %1617
        %1619 = vrot.lane.b32.xlu0 %v1215, 112
        %v1620 = vpop.permute.xlu0 %1619
        %1621 = vrot.lane.b32.xlu0 %v1264, 112
        %v1622 = vpop.permute.xlu0 %1621
        %1623 = vrot.lane.b32.xlu0 %v1266, 112
        %v1624 = vpop.permute.xlu0 %1623
        %1625 = vrot.lane.b32.xlu0 %v1315, 112
        %v1626 = vpop.permute.xlu0 %1625
        %1627 = vrot.lane.b32.xlu0 %v1317, 112
        %v1628 = vpop.permute.xlu0 %1627
        %1629 = vrot.lane.b32.xlu0 %v1366, 112
        %v1630 = vpop.permute.xlu0 %1629
        %1631 = vrot.lane.b32.xlu0 %v1368, 112
        %v1632 = vpop.permute.xlu0 %1631
        %1633 = vrot.lane.b32.xlu0 %v1417, 112
        %v1634 = vpop.permute.xlu0 %1633
        %1635 = vrot.lane.b32.xlu0 %v1419, 112
        %v1636 = vpop.permute.xlu0 %1635
        %vm1637 = vcmask 916480
        %v1638 = vsel %vm1637, %v1590, %v1592
        %v1639 = vsel %vm1637, %v1592, %v1594
        %v1640 = vsel %vm1637, %v1594, %v1596
        %v1641 = vsel %vm1637, %v1596, %v1598
        %v1642 = vsel %vm1637, %v1598, %v1600
        %v1643 = vsel %vm1637, %v1600, %v1602
        %v1644 = vsel %vm1637, %v1602, %v1604
        %v1645 = vsel %vm1637, %v1604, %v1606
        %v1646 = vsel %vm1637, %v1606, %v1608
        %v1647 = vsel %vm1637, %v1608, %v1610
        %v1648 = vsel %vm1637, %v1610, %v1612
        %v1649 = vsel %vm1637, %v1612, %v1614
        %v1650 = vsel %vm1637, %v1614, %v1616
        %v1651 = vsel %vm1637, %v1616, %v1618
        %v1652 = vsel %vm1637, %v1618, %v1620
        %v1653 = vsel %vm1637, %v1620, %v1622
        %v1654 = vsel %vm1637, %v1622, %v1624
        %v1655 = vsel %vm1637, %v1624, %v1626
        %v1656 = vsel %vm1637, %v1626, %v1628
        %v1657 = vsel %vm1637, %v1628, %v1630
        %v1658 = vsel %vm1637, %v1630, %v1632
        %v1659 = vsel %vm1637, %v1632, %v1634
        %v1660 = vsel %vm1637, %v1634, %v1636
        %v1686 = vsel %vm1637, %v1564, %v1590
        %v1687 = vsel %vm1507, 1, 0
        %v1688 = vsel %vm1508, 1, 0
        %v1689 = vsel %vm1509, 1, 0
        %v1690 = vsel %vm1510, 1, 0
        %v1691 = vsel %vm1511, 1, 0
        %v1692 = vsel %vm1512, 1, 0
        %v1693 = vsel %vm1513, 1, 0
        %v1694 = vsel %vm1514, 1, 0
        %v1695 = vsel %vm1515, 1, 0
        %v1696 = vsel %vm1516, 1, 0
        %v1697 = vsel %vm1517, 1, 0
        %v1698 = vsel %vm1518, 1, 0
        %v1699 = vsel %vm1519, 1, 0
        %v1700 = vsel %vm1520, 1, 0
        %v1701 = vsel %vm1521, 1, 0
        %v1702 = vsel %vm1522, 1, 0
        %v1703 = vsel %vm1523, 1, 0
        %v1704 = vsel %vm1524, 1, 0
        %v1705 = vsel %vm1525, 1, 0
        %v1706 = vsel %vm1526, 1, 0
        %v1707 = vsel %vm1527, 1, 0
        %v1708 = vsel %vm1528, 1, 0
        %v1709 = vsel %vm1529, 1, 0
        %v1710 = vsel %vm1530, 1, 0
        %v1711 = vsel %vm1531, 1, 0
        %vm1712 = vcmp.eq.s32.totalorder %v1687, 1
        %vm1713 = vcmp.eq.s32.totalorder %v1688, 1
        %vm1714 = vcmp.eq.s32.totalorder %v1689, 1
        %vm1715 = vcmp.eq.s32.totalorder %v1690, 1
        %vm1716 = vcmp.eq.s32.totalorder %v1691, 1
        %vm1717 = vcmp.eq.s32.totalorder %v1692, 1
        %vm1718 = vcmp.eq.s32.totalorder %v1693, 1
        %vm1719 = vcmp.eq.s32.totalorder %v1694, 1
        %vm1720 = vcmp.eq.s32.totalorder %v1695, 1
        %vm1721 = vcmp.eq.s32.totalorder %v1696, 1
        %vm1722 = vcmp.eq.s32.totalorder %v1697, 1
        %vm1723 = vcmp.eq.s32.totalorder %v1698, 1
        %vm1724 = vcmp.eq.s32.totalorder %v1699, 1
        %vm1725 = vcmp.eq.s32.totalorder %v1700, 1
        %vm1726 = vcmp.eq.s32.totalorder %v1701, 1
        %vm1727 = vcmp.eq.s32.totalorder %v1702, 1
        %vm1728 = vcmp.eq.s32.totalorder %v1703, 1
        %vm1729 = vcmp.eq.s32.totalorder %v1704, 1
        %vm1730 = vcmp.eq.s32.totalorder %v1705, 1
        %vm1731 = vcmp.eq.s32.totalorder %v1706, 1
        %vm1732 = vcmp.eq.s32.totalorder %v1707, 1
        %vm1733 = vcmp.eq.s32.totalorder %v1708, 1
        %vm1734 = vcmp.eq.s32.totalorder %v1709, 1
        %vm1735 = vcmp.eq.s32.totalorder %v1710, 1
        %vm1736 = vcmp.eq.s32.totalorder %v1711, 1
        %v1737 = vsel %vm1712, %v1686, 0.0
        %v1738 = vsel %vm1713, %v1638, 0.0
        %v1739 = vsel %vm1714, %v1639, 0.0
        %v1740 = vsel %vm1715, %v1640, 0.0
        %v1741 = vsel %vm1716, %v1641, 0.0
        %v1742 = vsel %vm1717, %v1642, 0.0
        %v1743 = vsel %vm1718, %v1643, 0.0
        %v1744 = vsel %vm1719, %v1644, 0.0
        %v1745 = vsel %vm1720, %v1645, 0.0
        %v1746 = vsel %vm1721, %v1646, 0.0
        %v1747 = vsel %vm1722, %v1647, 0.0
        %v1748 = vsel %vm1723, %v1648, 0.0
        %v1749 = vsel %vm1724, %v1649, 0.0
        %v1750 = vsel %vm1725, %v1650, 0.0
        %v1751 = vsel %vm1726, %v1651, 0.0
        %v1752 = vsel %vm1727, %v1652, 0.0
        %v1753 = vsel %vm1728, %v1653, 0.0
        %v1754 = vsel %vm1729, %v1654, 0.0
        %v1755 = vsel %vm1730, %v1655, 0.0
        %v1756 = vsel %vm1731, %v1656, 0.0
        %v1757 = vsel %vm1732, %v1657, 0.0
        %v1758 = vsel %vm1733, %v1658, 0.0
        %v1759 = vsel %vm1734, %v1659, 0.0
        %v1760 = vsel %vm1735, %v1660, 0.0
        %v1761 = vsel %vm1736, %v1636, 0.0
        %1763 = vrot.lane.b32.xlu0 %v1471, 120
        %v1764 = vpop.permute.xlu0 %1763
        %1790 = vrot.lane.b32.xlu0 %v860, 56
        %v1791 = vpop.permute.xlu0 %1790
        %1792 = vrot.lane.b32.xlu0 %v862, 56
        %v1793 = vpop.permute.xlu0 %1792
        %1794 = vrot.lane.b32.xlu0 %v911, 56
        %v1795 = vpop.permute.xlu0 %1794
        %1796 = vrot.lane.b32.xlu0 %v913, 56
        %v1797 = vpop.permute.xlu0 %1796
        %1798 = vrot.lane.b32.xlu0 %v962, 56
        %v1799 = vpop.permute.xlu0 %1798
        %1800 = vrot.lane.b32.xlu0 %v964, 56
        %v1801 = vpop.permute.xlu0 %1800
        %1802 = vrot.lane.b32.xlu0 %v1013, 56
        %v1803 = vpop.permute.xlu0 %1802
        %1804 = vrot.lane.b32.xlu0 %v1015, 56
        %v1805 = vpop.permute.xlu0 %1804
        %1806 = vrot.lane.b32.xlu0 %v1064, 56
        %v1807 = vpop.permute.xlu0 %1806
        %1808 = vrot.lane.b32.xlu0 %v1066, 56
        %v1809 = vpop.permute.xlu0 %1808
        %1810 = vrot.lane.b32.xlu0 %v1115, 56
        %v1811 = vpop.permute.xlu0 %1810
        %1812 = vrot.lane.b32.xlu0 %v1117, 56
        %v1813 = vpop.permute.xlu0 %1812
        %1814 = vrot.lane.b32.xlu0 %v1166, 56
        %v1815 = vpop.permute.xlu0 %1814
        %1816 = vrot.lane.b32.xlu0 %v1168, 56
        %v1817 = vpop.permute.xlu0 %1816
        %1818 = vrot.lane.b32.xlu0 %v1217, 56
        %v1819 = vpop.permute.xlu0 %1818
        %1820 = vrot.lane.b32.xlu0 %v1219, 56
        %v1821 = vpop.permute.xlu0 %1820
        %1822 = vrot.lane.b32.xlu0 %v1268, 56
        %v1823 = vpop.permute.xlu0 %1822
        %1824 = vrot.lane.b32.xlu0 %v1270, 56
        %v1825 = vpop.permute.xlu0 %1824
        %1826 = vrot.lane.b32.xlu0 %v1319, 56
        %v1827 = vpop.permute.xlu0 %1826
        %1828 = vrot.lane.b32.xlu0 %v1321, 56
        %v1829 = vpop.permute.xlu0 %1828
        %1830 = vrot.lane.b32.xlu0 %v1370, 56
        %v1831 = vpop.permute.xlu0 %1830
        %1832 = vrot.lane.b32.xlu0 %v1372, 56
        %v1833 = vpop.permute.xlu0 %1832
        %1834 = vrot.lane.b32.xlu0 %v1421, 56
        %v1835 = vpop.permute.xlu0 %1834
        %1836 = vrot.lane.b32.xlu0 %v1423, 56
        %v1837 = vpop.permute.xlu0 %1836
        %1838 = vrot.lane.b32.xlu0 %v1471, 56
        %v1839 = vpop.permute.xlu0 %1838
        %vm1840 = vcmask 457728
        %v1841 = vsel %vm1840, %v1791, %v1793
        %v1842 = vsel %vm1840, %v1793, %v1795
        %v1843 = vsel %vm1840, %v1795, %v1797
        %v1844 = vsel %vm1840, %v1797, %v1799
        %v1845 = vsel %vm1840, %v1799, %v1801
        %v1846 = vsel %vm1840, %v1801, %v1803
        %v1847 = vsel %vm1840, %v1803, %v1805
        %v1848 = vsel %vm1840, %v1805, %v1807
        %v1849 = vsel %vm1840, %v1807, %v1809
        %v1850 = vsel %vm1840, %v1809, %v1811
        %v1851 = vsel %vm1840, %v1811, %v1813
        %v1852 = vsel %vm1840, %v1813, %v1815
        %v1853 = vsel %vm1840, %v1815, %v1817
        %v1854 = vsel %vm1840, %v1817, %v1819
        %v1855 = vsel %vm1840, %v1819, %v1821
        %v1856 = vsel %vm1840, %v1821, %v1823
        %v1857 = vsel %vm1840, %v1823, %v1825
        %v1858 = vsel %vm1840, %v1825, %v1827
        %v1859 = vsel %vm1840, %v1827, %v1829
        %v1860 = vsel %vm1840, %v1829, %v1831
        %v1861 = vsel %vm1840, %v1831, %v1833
        %v1862 = vsel %vm1840, %v1833, %v1835
        %v1863 = vsel %vm1840, %v1835, %v1837
        %v1864 = vsel %vm1840, %v1837, %v1839
        %v1890 = vsel %vm1840, %v1764, %v1791
        %v1891 = vadd.f32 %v1737, %v1890
        %v1892 = vadd.f32 %v1738, %v1841
        %v1893 = vadd.f32 %v1739, %v1842
        %v1894 = vadd.f32 %v1740, %v1843
        %v1895 = vadd.f32 %v1741, %v1844
        %v1896 = vadd.f32 %v1742, %v1845
        %v1897 = vadd.f32 %v1743, %v1846
        %v1898 = vadd.f32 %v1744, %v1847
        %v1899 = vadd.f32 %v1745, %v1848
        %v1900 = vadd.f32 %v1746, %v1849
        %v1901 = vadd.f32 %v1747, %v1850
        %v1902 = vadd.f32 %v1748, %v1851
        %v1903 = vadd.f32 %v1749, %v1852
        %v1904 = vadd.f32 %v1750, %v1853
        %v1905 = vadd.f32 %v1751, %v1854
        %v1906 = vadd.f32 %v1752, %v1855
        %v1907 = vadd.f32 %v1753, %v1856
        %v1908 = vadd.f32 %v1754, %v1857
        %v1909 = vadd.f32 %v1755, %v1858
        %v1910 = vadd.f32 %v1756, %v1859
        %v1911 = vadd.f32 %v1757, %v1860
        %v1912 = vadd.f32 %v1758, %v1861
        %v1913 = vadd.f32 %v1759, %v1862
        %v1914 = vadd.f32 %v1760, %v1863
        %v1915 = vadd.f32 %v1761, %v1864
        %v1916 = vsel %vm1532, 1, 0
        %v1917 = vsel %vm1533, 1, 0
        %v1918 = vsel %vm1534, 1, 0
        %v1919 = vsel %vm1535, 1, 0
        %v1920 = vsel %vm1536, 1, 0
        %v1921 = vsel %vm1537, 1, 0
        %v1922 = vsel %vm1538, 1, 0
        %v1923 = vsel %vm1539, 1, 0
        %v1924 = vsel %vm1540, 1, 0
        %v1925 = vsel %vm1541, 1, 0
        %v1926 = vsel %vm1542, 1, 0
        %v1927 = vsel %vm1543, 1, 0
        %v1928 = vsel %vm1544, 1, 0
        %v1929 = vsel %vm1545, 1, 0
        %v1930 = vsel %vm1546, 1, 0
        %v1931 = vsel %vm1547, 1, 0
        %v1932 = vsel %vm1548, 1, 0
        %v1933 = vsel %vm1549, 1, 0
        %v1934 = vsel %vm1550, 1, 0
        %v1935 = vsel %vm1551, 1, 0
        %v1936 = vsel %vm1552, 1, 0
        %v1937 = vsel %vm1553, 1, 0
        %v1938 = vsel %vm1554, 1, 0
        %v1939 = vsel %vm1555, 1, 0
        %v1940 = vsel %vm1556, 1, 0
        %vm1941 = vcmp.eq.s32.totalorder %v1916, 1
        %vm1942 = vcmp.eq.s32.totalorder %v1917, 1
        %vm1943 = vcmp.eq.s32.totalorder %v1918, 1
        %vm1944 = vcmp.eq.s32.totalorder %v1919, 1
        %vm1945 = vcmp.eq.s32.totalorder %v1920, 1
        %vm1946 = vcmp.eq.s32.totalorder %v1921, 1
        %vm1947 = vcmp.eq.s32.totalorder %v1922, 1
        %vm1948 = vcmp.eq.s32.totalorder %v1923, 1
        %vm1949 = vcmp.eq.s32.totalorder %v1924, 1
        %vm1950 = vcmp.eq.s32.totalorder %v1925, 1
        %vm1951 = vcmp.eq.s32.totalorder %v1926, 1
        %vm1952 = vcmp.eq.s32.totalorder %v1927, 1
        %vm1953 = vcmp.eq.s32.totalorder %v1928, 1
        %vm1954 = vcmp.eq.s32.totalorder %v1929, 1
        %vm1955 = vcmp.eq.s32.totalorder %v1930, 1
        %vm1956 = vcmp.eq.s32.totalorder %v1931, 1
        %vm1957 = vcmp.eq.s32.totalorder %v1932, 1
        %vm1958 = vcmp.eq.s32.totalorder %v1933, 1
        %vm1959 = vcmp.eq.s32.totalorder %v1934, 1
        %vm1960 = vcmp.eq.s32.totalorder %v1935, 1
        %vm1961 = vcmp.eq.s32.totalorder %v1936, 1
        %vm1962 = vcmp.eq.s32.totalorder %v1937, 1
        %vm1963 = vcmp.eq.s32.totalorder %v1938, 1
        %vm1964 = vcmp.eq.s32.totalorder %v1939, 1
        %vm1965 = vcmp.eq.s32.totalorder %v1940, 1
        %v1966 = vsel %vm1941, %v866, 0.0
        %v1967 = vsel %vm1942, %v868, 0.0
        %v1968 = vsel %vm1943, %v917, 0.0
        %v1969 = vsel %vm1944, %v919, 0.0
        %v1970 = vsel %vm1945, %v968, 0.0
        %v1971 = vsel %vm1946, %v970, 0.0
        %v1972 = vsel %vm1947, %v1019, 0.0
        %v1973 = vsel %vm1948, %v1021, 0.0
        %v1974 = vsel %vm1949, %v1070, 0.0
        %v1975 = vsel %vm1950, %v1072, 0.0
        %v1976 = vsel %vm1951, %v1121, 0.0
        %v1977 = vsel %vm1952, %v1123, 0.0
        %v1978 = vsel %vm1953, %v1172, 0.0
        %v1979 = vsel %vm1954, %v1174, 0.0
        %v1980 = vsel %vm1955, %v1223, 0.0
        %v1981 = vsel %vm1956, %v1225, 0.0
        %v1982 = vsel %vm1957, %v1274, 0.0
        %v1983 = vsel %vm1958, %v1276, 0.0
        %v1984 = vsel %vm1959, %v1325, 0.0
        %v1985 = vsel %vm1960, %v1327, 0.0
        %v1986 = vsel %vm1961, %v1376, 0.0
        %v1987 = vsel %vm1962, %v1378, 0.0
        %v1988 = vsel %vm1963, %v1427, 0.0
        %v1989 = vsel %vm1964, %v1429, 0.0
        %v1990 = vsel %vm1965, %v1476, 0.0
        %v1991 = vadd.f32 %v1891, %v1966
        %v1992 = vadd.f32 %v1892, %v1967
        %v1993 = vadd.f32 %v1893, %v1968
        %v1994 = vadd.f32 %v1894, %v1969
        %v1995 = vadd.f32 %v1895, %v1970
        %v1996 = vadd.f32 %v1896, %v1971
        %v1997 = vadd.f32 %v1897, %v1972
        %v1998 = vadd.f32 %v1898, %v1973
        %v1999 = vadd.f32 %v1899, %v1974
        %v2000 = vadd.f32 %v1900, %v1975
        %v2001 = vadd.f32 %v1901, %v1976
        %v2002 = vadd.f32 %v1902, %v1977
        %v2003 = vadd.f32 %v1903, %v1978
        %v2004 = vadd.f32 %v1904, %v1979
        %v2005 = vadd.f32 %v1905, %v1980
        %v2006 = vadd.f32 %v1906, %v1981
        %v2007 = vadd.f32 %v1907, %v1982
        %v2008 = vadd.f32 %v1908, %v1983
        %v2009 = vadd.f32 %v1909, %v1984
        %v2010 = vadd.f32 %v1910, %v1985
        %v2011 = vadd.f32 %v1911, %v1986
        %v2012 = vadd.f32 %v1912, %v1987
        %v2013 = vadd.f32 %v1913, %v1988
        %v2014 = vadd.f32 %v1914, %v1989
        %v2015 = vadd.f32 %v1915, %v1990
        %v2016 = vld [vmem:[%s0] sm:$0xff]
        %v2017 = vld [vmem:[%s0 + $0x8] sm:$0xff]
        %v2018 = vld [vmem:[%s0 + $0x10] sm:$0xff]
        %v2019 = vld [vmem:[%s0 + $0x18] sm:$0x1]
        %vm2020 = vcmp.ne.s32.totalorder %v2016, 0
        %vm2021 = vcmp.ne.s32.totalorder %v2017, 0
        %vm2022 = vcmp.ne.s32.totalorder %v2018, 0
        %vm2023 = vcmp.ne.s32.totalorder %v2019, 0
        %2025 = vrot.lane.b32.xlu0 %v2015, 65
        %v2026 = vpop.permute.xlu0 %2025
        %2052 = vrot.lane.b32.xlu0 %v1991, 1
        %v2053 = vpop.permute.xlu0 %2052
        %2054 = vrot.lane.b32.xlu0 %v1992, 1
        %v2055 = vpop.permute.xlu0 %2054
        %2056 = vrot.lane.b32.xlu0 %v1993, 1
        %v2057 = vpop.permute.xlu0 %2056
        %2058 = vrot.lane.b32.xlu0 %v1994, 1
        %v2059 = vpop.permute.xlu0 %2058
        %2060 = vrot.lane.b32.xlu0 %v1995, 1
        %v2061 = vpop.permute.xlu0 %2060
        %2062 = vrot.lane.b32.xlu0 %v1996, 1
        %v2063 = vpop.permute.xlu0 %2062
        %2064 = vrot.lane.b32.xlu0 %v1997, 1
        %v2065 = vpop.permute.xlu0 %2064
        %2066 = vrot.lane.b32.xlu0 %v1998, 1
        %v2067 = vpop.permute.xlu0 %2066
        %2068 = vrot.lane.b32.xlu0 %v1999, 1
        %v2069 = vpop.permute.xlu0 %2068
        %2070 = vrot.lane.b32.xlu0 %v2000, 1
        %v2071 = vpop.permute.xlu0 %2070
        %2072 = vrot.lane.b32.xlu0 %v2001, 1
        %v2073 = vpop.permute.xlu0 %2072
        %2074 = vrot.lane.b32.xlu0 %v2002, 1
        %v2075 = vpop.permute.xlu0 %2074
        %2076 = vrot.lane.b32.xlu0 %v2003, 1
        %v2077 = vpop.permute.xlu0 %2076
        %2078 = vrot.lane.b32.xlu0 %v2004, 1
        %v2079 = vpop.permute.xlu0 %2078
        %2080 = vrot.lane.b32.xlu0 %v2005, 1
        %v2081 = vpop.permute.xlu0 %2080
        %2082 = vrot.lane.b32.xlu0 %v2006, 1
        %v2083 = vpop.permute.xlu0 %2082
        %2084 = vrot.lane.b32.xlu0 %v2007, 1
        %v2085 = vpop.permute.xlu0 %2084
        %2086 = vrot.lane.b32.xlu0 %v2008, 1
        %v2087 = vpop.permute.xlu0 %2086
        %2088 = vrot.lane.b32.xlu0 %v2009, 1
        %v2089 = vpop.permute.xlu0 %2088
        %2090 = vrot.lane.b32.xlu0 %v2010, 1
        %v2091 = vpop.permute.xlu0 %2090
        %2092 = vrot.lane.b32.xlu0 %v2011, 1
        %v2093 = vpop.permute.xlu0 %2092
        %2094 = vrot.lane.b32.xlu0 %v2012, 1
        %v2095 = vpop.permute.xlu0 %2094
        %2096 = vrot.lane.b32.xlu0 %v2013, 1
        %v2097 = vpop.permute.xlu0 %2096
        %2098 = vrot.lane.b32.xlu0 %v2014, 1
        %v2099 = vpop.permute.xlu0 %2098
        %2100 = vrot.lane.b32.xlu0 %v2015, 1
        %v2101 = vpop.permute.xlu0 %2100
        %vm2102 = vcmask 7168
        %v2103 = vsel %vm2102, %v2053, %v2055
        %v2104 = vsel %vm2102, %v2055, %v2057
        %v2105 = vsel %vm2102, %v2057, %v2059
        %v2106 = vsel %vm2102, %v2059, %v2061
        %v2107 = vsel %vm2102, %v2061, %v2063
        %v2108 = vsel %vm2102, %v2063, %v2065
        %v2109 = vsel %vm2102, %v2065, %v2067
        %v2110 = vsel %vm2102, %v2067, %v2069
        %v2111 = vsel %vm2102, %v2069, %v2071
        %v2112 = vsel %vm2102, %v2071, %v2073
        %v2113 = vsel %vm2102, %v2073, %v2075
        %v2114 = vsel %vm2102, %v2075, %v2077
        %v2115 = vsel %vm2102, %v2077, %v2079
        %v2116 = vsel %vm2102, %v2079, %v2081
        %v2117 = vsel %vm2102, %v2081, %v2083
        %v2118 = vsel %vm2102, %v2083, %v2085
        %v2119 = vsel %vm2102, %v2085, %v2087
        %v2120 = vsel %vm2102, %v2087, %v2089
        %v2121 = vsel %vm2102, %v2089, %v2091
        %v2122 = vsel %vm2102, %v2091, %v2093
        %v2123 = vsel %vm2102, %v2093, %v2095
        %v2124 = vsel %vm2102, %v2095, %v2097
        %v2125 = vsel %vm2102, %v2097, %v2099
        %v2126 = vsel %vm2102, %v2099, %v2101
        %v2152 = vsel %vm2102, %v2026, %v2053
        %v2153 = vsel %vm2020, 1, 0
        %v2154 = vsel %vm2021, 1, 0
        %v2155 = vsel %vm2022, 1, 0
        %v2156 = vsel %vm2023, 1, 0
        %v2157 = vlaneseq
        %v2158 = vshrl.u32 %v2157, 7
        %v2159 = vsub.s32 0, %v2158
        %v2160 = vrot.slane %v2153, %v2159
        %v2161 = vlaneseq
        %v2162 = vshrl.u32 %v2161, 7
        %v2163 = vsub.s32 1, %v2162
        %v2164 = vrot.slane %v2153, %v2163
        %v2165 = vlaneseq
        %v2166 = vshrl.u32 %v2165, 7
        %v2167 = vsub.s32 2, %v2166
        %v2168 = vrot.slane %v2153, %v2167
        %v2169 = vlaneseq
        %v2170 = vshrl.u32 %v2169, 7
        %v2171 = vsub.s32 3, %v2170
        %v2172 = vrot.slane %v2153, %v2171
        %v2173 = vlaneseq
        %v2174 = vshrl.u32 %v2173, 7
        %v2175 = vsub.s32 4, %v2174
        %v2176 = vrot.slane %v2153, %v2175
        %v2177 = vlaneseq
        %v2178 = vshrl.u32 %v2177, 7
        %v2179 = vsub.s32 5, %v2178
        %v2180 = vrot.slane %v2153, %v2179
        %v2181 = vlaneseq
        %v2182 = vshrl.u32 %v2181, 7
        %v2183 = vsub.s32 6, %v2182
        %v2184 = vrot.slane %v2153, %v2183
        %v2185 = vlaneseq
        %v2186 = vshrl.u32 %v2185, 7
        %v2187 = vsub.s32 7, %v2186
        %v2188 = vrot.slane %v2153, %v2187
        %v2189 = vlaneseq
        %v2190 = vshrl.u32 %v2189, 7
        %v2191 = vsub.s32 0, %v2190
        %v2192 = vrot.slane %v2154, %v2191
        %v2193 = vlaneseq
        %v2194 = vshrl.u32 %v2193, 7
        %v2195 = vsub.s32 1, %v2194
        %v2196 = vrot.slane %v2154, %v2195
        %v2197 = vlaneseq
        %v2198 = vshrl.u32 %v2197, 7
        %v2199 = vsub.s32 2, %v2198
        %v2200 = vrot.slane %v2154, %v2199
        %v2201 = vlaneseq
        %v2202 = vshrl.u32 %v2201, 7
        %v2203 = vsub.s32 3, %v2202
        %v2204 = vrot.slane %v2154, %v2203
        %v2205 = vlaneseq
        %v2206 = vshrl.u32 %v2205, 7
        %v2207 = vsub.s32 4, %v2206
        %v2208 = vrot.slane %v2154, %v2207
        %v2209 = vlaneseq
        %v2210 = vshrl.u32 %v2209, 7
        %v2211 = vsub.s32 5, %v2210
        %v2212 = vrot.slane %v2154, %v2211
        %v2213 = vlaneseq
        %v2214 = vshrl.u32 %v2213, 7
        %v2215 = vsub.s32 6, %v2214
        %v2216 = vrot.slane %v2154, %v2215
        %v2217 = vlaneseq
        %v2218 = vshrl.u32 %v2217, 7
        %v2219 = vsub.s32 7, %v2218
        %v2220 = vrot.slane %v2154, %v2219
        %v2221 = vlaneseq
        %v2222 = vshrl.u32 %v2221, 7
        %v2223 = vsub.s32 0, %v2222
        %v2224 = vrot.slane %v2155, %v2223
        %v2225 = vlaneseq
        %v2226 = vshrl.u32 %v2225, 7
        %v2227 = vsub.s32 1, %v2226
        %v2228 = vrot.slane %v2155, %v2227
        %v2229 = vlaneseq
        %v2230 = vshrl.u32 %v2229, 7
        %v2231 = vsub.s32 2, %v2230
        %v2232 = vrot.slane %v2155, %v2231
        %v2233 = vlaneseq
        %v2234 = vshrl.u32 %v2233, 7
        %v2235 = vsub.s32 3, %v2234
        %v2236 = vrot.slane %v2155, %v2235
        %v2237 = vlaneseq
        %v2238 = vshrl.u32 %v2237, 7
        %v2239 = vsub.s32 4, %v2238
        %v2240 = vrot.slane %v2155, %v2239
        %v2241 = vlaneseq
        %v2242 = vshrl.u32 %v2241, 7
        %v2243 = vsub.s32 5, %v2242
        %v2244 = vrot.slane %v2155, %v2243
        %v2245 = vlaneseq
        %v2246 = vshrl.u32 %v2245, 7
        %v2247 = vsub.s32 6, %v2246
        %v2248 = vrot.slane %v2155, %v2247
        %v2249 = vlaneseq
        %v2250 = vshrl.u32 %v2249, 7
        %v2251 = vsub.s32 7, %v2250
        %v2252 = vrot.slane %v2155, %v2251
        %v2253 = vlaneseq
        %v2254 = vshrl.u32 %v2253, 7
        %v2255 = vsub.s32 0, %v2254
        %v2256 = vrot.slane %v2156, %v2255
        %vm2257 = vcmp.eq.s32.totalorder %v2160, 1
        %vm2258 = vcmp.eq.s32.totalorder %v2164, 1
        %vm2259 = vcmp.eq.s32.totalorder %v2168, 1
        %vm2260 = vcmp.eq.s32.totalorder %v2172, 1
        %vm2261 = vcmp.eq.s32.totalorder %v2176, 1
        %vm2262 = vcmp.eq.s32.totalorder %v2180, 1
        %vm2263 = vcmp.eq.s32.totalorder %v2184, 1
        %vm2264 = vcmp.eq.s32.totalorder %v2188, 1
        %vm2265 = vcmp.eq.s32.totalorder %v2192, 1
        %vm2266 = vcmp.eq.s32.totalorder %v2196, 1
        %vm2267 = vcmp.eq.s32.totalorder %v2200, 1
        %vm2268 = vcmp.eq.s32.totalorder %v2204, 1
        %vm2269 = vcmp.eq.s32.totalorder %v2208, 1
        %vm2270 = vcmp.eq.s32.totalorder %v2212, 1
        %vm2271 = vcmp.eq.s32.totalorder %v2216, 1
        %vm2272 = vcmp.eq.s32.totalorder %v2220, 1
        %vm2273 = vcmp.eq.s32.totalorder %v2224, 1
        %vm2274 = vcmp.eq.s32.totalorder %v2228, 1
        %vm2275 = vcmp.eq.s32.totalorder %v2232, 1
        %vm2276 = vcmp.eq.s32.totalorder %v2236, 1
        %vm2277 = vcmp.eq.s32.totalorder %v2240, 1
        %vm2278 = vcmp.eq.s32.totalorder %v2244, 1
        %vm2279 = vcmp.eq.s32.totalorder %v2248, 1
        %vm2280 = vcmp.eq.s32.totalorder %v2252, 1
        %vm2281 = vcmp.eq.s32.totalorder %v2256, 1
        %v2282 = vsel %vm2257, %v2152, 0.0
        %v2283 = vsel %vm2258, %v2103, 0.0
        %v2284 = vsel %vm2259, %v2104, 0.0
        %v2285 = vsel %vm2260, %v2105, 0.0
        %v2286 = vsel %vm2261, %v2106, 0.0
        %v2287 = vsel %vm2262, %v2107, 0.0
        %v2288 = vsel %vm2263, %v2108, 0.0
        %v2289 = vsel %vm2264, %v2109, 0.0
        %v2290 = vsel %vm2265, %v2110, 0.0
        %v2291 = vsel %vm2266, %v2111, 0.0
        %v2292 = vsel %vm2267, %v2112, 0.0
        %v2293 = vsel %vm2268, %v2113, 0.0
        %v2294 = vsel %vm2269, %v2114, 0.0
        %v2295 = vsel %vm2270, %v2115, 0.0
        %v2296 = vsel %vm2271, %v2116, 0.0
        %v2297 = vsel %vm2272, %v2117, 0.0
        %v2298 = vsel %vm2273, %v2118, 0.0
        %v2299 = vsel %vm2274, %v2119, 0.0
        %v2300 = vsel %vm2275, %v2120, 0.0
        %v2301 = vsel %vm2276, %v2121, 0.0
        %v2302 = vsel %vm2277, %v2122, 0.0
        %v2303 = vsel %vm2278, %v2123, 0.0
        %v2304 = vsel %vm2279, %v2124, 0.0
        %v2305 = vsel %vm2280, %v2125, 0.0
        %v2306 = vsel %vm2281, %v2126, 0.0
        %vm2307 = vcmp.ne.s32.totalorder %v2016, 55
        %vm2308 = vcmp.ne.s32.totalorder %v2017, 55
        %vm2309 = vcmp.ne.s32.totalorder %v2018, 55
        %vm2310 = vcmp.ne.s32.totalorder %v2019, 55
        %2311 = vrot.lane.b32.xlu0 %v1991, 127
        %v2312 = vpop.permute.xlu0 %2311
        %2313 = vrot.lane.b32.xlu0 %v1992, 127
        %v2314 = vpop.permute.xlu0 %2313
        %2315 = vrot.lane.b32.xlu0 %v1993, 127
        %v2316 = vpop.permute.xlu0 %2315
        %2317 = vrot.lane.b32.xlu0 %v1994, 127
        %v2318 = vpop.permute.xlu0 %2317
        %2319 = vrot.lane.b32.xlu0 %v1995, 127
        %v2320 = vpop.permute.xlu0 %2319
        %2321 = vrot.lane.b32.xlu0 %v1996, 127
        %v2322 = vpop.permute.xlu0 %2321
        %2323 = vrot.lane.b32.xlu0 %v1997, 127
        %v2324 = vpop.permute.xlu0 %2323
        %2325 = vrot.lane.b32.xlu0 %v1998, 127
        %v2326 = vpop.permute.xlu0 %2325
        %2327 = vrot.lane.b32.xlu0 %v1999, 127
        %v2328 = vpop.permute.xlu0 %2327
        %2329 = vrot.lane.b32.xlu0 %v2000, 127
        %v2330 = vpop.permute.xlu0 %2329
        %2331 = vrot.lane.b32.xlu0 %v2001, 127
        %v2332 = vpop.permute.xlu0 %2331
        %2333 = vrot.lane.b32.xlu0 %v2002, 127
        %v2334 = vpop.permute.xlu0 %2333
        %2335 = vrot.lane.b32.xlu0 %v2003, 127
        %v2336 = vpop.permute.xlu0 %2335
        %2337 = vrot.lane.b32.xlu0 %v2004, 127
        %v2338 = vpop.permute.xlu0 %2337
        %2339 = vrot.lane.b32.xlu0 %v2005, 127
        %v2340 = vpop.permute.xlu0 %2339
        %2341 = vrot.lane.b32.xlu0 %v2006, 127
        %v2342 = vpop.permute.xlu0 %2341
        %2343 = vrot.lane.b32.xlu0 %v2007, 127
        %v2344 = vpop.permute.xlu0 %2343
        %2345 = vrot.lane.b32.xlu0 %v2008, 127
        %v2346 = vpop.permute.xlu0 %2345
        %2347 = vrot.lane.b32.xlu0 %v2009, 127
        %v2348 = vpop.permute.xlu0 %2347
        %2349 = vrot.lane.b32.xlu0 %v2010, 127
        %v2350 = vpop.permute.xlu0 %2349
        %2351 = vrot.lane.b32.xlu0 %v2011, 127
        %v2352 = vpop.permute.xlu0 %2351
        %2353 = vrot.lane.b32.xlu0 %v2012, 127
        %v2354 = vpop.permute.xlu0 %2353
        %2355 = vrot.lane.b32.xlu0 %v2013, 127
        %v2356 = vpop.permute.xlu0 %2355
        %2357 = vrot.lane.b32.xlu0 %v2014, 127
        %v2358 = vpop.permute.xlu0 %2357
        %2359 = vrot.lane.b32.xlu0 %v2015, 127
        %v2360 = vpop.permute.xlu0 %2359
        %vm2361 = vcmask 1039360
        %v2362 = vsel %vm2361, %v2312, %v2314
        %v2363 = vsel %vm2361, %v2314, %v2316
        %v2364 = vsel %vm2361, %v2316, %v2318
        %v2365 = vsel %vm2361, %v2318, %v2320
        %v2366 = vsel %vm2361, %v2320, %v2322
        %v2367 = vsel %vm2361, %v2322, %v2324
        %v2368 = vsel %vm2361, %v2324, %v2326
        %v2369 = vsel %vm2361, %v2326, %v2328
        %v2370 = vsel %vm2361, %v2328, %v2330
        %v2371 = vsel %vm2361, %v2330, %v2332
        %v2372 = vsel %vm2361, %v2332, %v2334
        %v2373 = vsel %vm2361, %v2334, %v2336
        %v2374 = vsel %vm2361, %v2336, %v2338
        %v2375 = vsel %vm2361, %v2338, %v2340
        %v2376 = vsel %vm2361, %v2340, %v2342
        %v2377 = vsel %vm2361, %v2342, %v2344
        %v2378 = vsel %vm2361, %v2344, %v2346
        %v2379 = vsel %vm2361, %v2346, %v2348
        %v2380 = vsel %vm2361, %v2348, %v2350
        %v2381 = vsel %vm2361, %v2350, %v2352
        %v2382 = vsel %vm2361, %v2352, %v2354
        %v2383 = vsel %vm2361, %v2354, %v2356
        %v2384 = vsel %vm2361, %v2356, %v2358
        %v2385 = vsel %vm2361, %v2358, %v2360
        %2411 = vrot.lane.b32.xlu0 %v1991, 63
        %v2412 = vpop.permute.xlu0 %2411
        %vm2414 = vcmask 515072
        %v2415 = vsel %vm2414, %v2360, %v2412
        %v2416 = vsel %vm2307, 1, 0
        %v2417 = vsel %vm2308, 1, 0
        %v2418 = vsel %vm2309, 1, 0
        %v2419 = vsel %vm2310, 1, 0
        %v2420 = vlaneseq
        %v2421 = vshrl.u32 %v2420, 7
        %v2422 = vsub.s32 0, %v2421
        %v2423 = vrot.slane %v2416, %v2422
        %v2424 = vlaneseq
        %v2425 = vshrl.u32 %v2424, 7
        %v2426 = vsub.s32 1, %v2425
        %v2427 = vrot.slane %v2416, %v2426
        %v2428 = vlaneseq
        %v2429 = vshrl.u32 %v2428, 7
        %v2430 = vsub.s32 2, %v2429
        %v2431 = vrot.slane %v2416, %v2430
        %v2432 = vlaneseq
        %v2433 = vshrl.u32 %v2432, 7
        %v2434 = vsub.s32 3, %v2433
        %v2435 = vrot.slane %v2416, %v2434
        %v2436 = vlaneseq
        %v2437 = vshrl.u32 %v2436, 7
        %v2438 = vsub.s32 4, %v2437
        %v2439 = vrot.slane %v2416, %v2438
        %v2440 = vlaneseq
        %v2441 = vshrl.u32 %v2440, 7
        %v2442 = vsub.s32 5, %v2441
        %v2443 = vrot.slane %v2416, %v2442
        %v2444 = vlaneseq
        %v2445 = vshrl.u32 %v2444, 7
        %v2446 = vsub.s32 6, %v2445
        %v2447 = vrot.slane %v2416, %v2446
        %v2448 = vlaneseq
        %v2449 = vshrl.u32 %v2448, 7
        %v2450 = vsub.s32 7, %v2449
        %v2451 = vrot.slane %v2416, %v2450
        %v2452 = vlaneseq
        %v2453 = vshrl.u32 %v2452, 7
        %v2454 = vsub.s32 0, %v2453
        %v2455 = vrot.slane %v2417, %v2454
        %v2456 = vlaneseq
        %v2457 = vshrl.u32 %v2456, 7
        %v2458 = vsub.s32 1, %v2457
        %v2459 = vrot.slane %v2417, %v2458
        %v2460 = vlaneseq
        %v2461 = vshrl.u32 %v2460, 7
        %v2462 = vsub.s32 2, %v2461
        %v2463 = vrot.slane %v2417, %v2462
        %v2464 = vlaneseq
        %v2465 = vshrl.u32 %v2464, 7
        %v2466 = vsub.s32 3, %v2465
        %v2467 = vrot.slane %v2417, %v2466
        %v2468 = vlaneseq
        %v2469 = vshrl.u32 %v2468, 7
        %v2470 = vsub.s32 4, %v2469
        %v2471 = vrot.slane %v2417, %v2470
        %v2472 = vlaneseq
        %v2473 = vshrl.u32 %v2472, 7
        %v2474 = vsub.s32 5, %v2473
        %v2475 = vrot.slane %v2417, %v2474
        %v2476 = vlaneseq
        %v2477 = vshrl.u32 %v2476, 7
        %v2478 = vsub.s32 6, %v2477
        %v2479 = vrot.slane %v2417, %v2478
        %v2480 = vlaneseq
        %v2481 = vshrl.u32 %v2480, 7
        %v2482 = vsub.s32 7, %v2481
        %v2483 = vrot.slane %v2417, %v2482
        %v2484 = vlaneseq
        %v2485 = vshrl.u32 %v2484, 7
        %v2486 = vsub.s32 0, %v2485
        %v2487 = vrot.slane %v2418, %v2486
        %v2488 = vlaneseq
        %v2489 = vshrl.u32 %v2488, 7
        %v2490 = vsub.s32 1, %v2489
        %v2491 = vrot.slane %v2418, %v2490
        %v2492 = vlaneseq
        %v2493 = vshrl.u32 %v2492, 7
        %v2494 = vsub.s32 2, %v2493
        %v2495 = vrot.slane %v2418, %v2494
        %v2496 = vlaneseq
        %v2497 = vshrl.u32 %v2496, 7
        %v2498 = vsub.s32 3, %v2497
        %v2499 = vrot.slane %v2418, %v2498
        %v2500 = vlaneseq
        %v2501 = vshrl.u32 %v2500, 7
        %v2502 = vsub.s32 4, %v2501
        %v2503 = vrot.slane %v2418, %v2502
        %v2504 = vlaneseq
        %v2505 = vshrl.u32 %v2504, 7
        %v2506 = vsub.s32 5, %v2505
        %v2507 = vrot.slane %v2418, %v2506
        %v2508 = vlaneseq
        %v2509 = vshrl.u32 %v2508, 7
        %v2510 = vsub.s32 6, %v2509
        %v2511 = vrot.slane %v2418, %v2510
        %v2512 = vlaneseq
        %v2513 = vshrl.u32 %v2512, 7
        %v2514 = vsub.s32 7, %v2513
        %v2515 = vrot.slane %v2418, %v2514
        %v2516 = vlaneseq
        %v2517 = vshrl.u32 %v2516, 7
        %v2518 = vsub.s32 0, %v2517
        %v2519 = vrot.slane %v2419, %v2518
        %vm2520 = vcmp.eq.s32.totalorder %v2423, 1
        %vm2521 = vcmp.eq.s32.totalorder %v2427, 1
        %vm2522 = vcmp.eq.s32.totalorder %v2431, 1
        %vm2523 = vcmp.eq.s32.totalorder %v2435, 1
        %vm2524 = vcmp.eq.s32.totalorder %v2439, 1
        %vm2525 = vcmp.eq.s32.totalorder %v2443, 1
        %vm2526 = vcmp.eq.s32.totalorder %v2447, 1
        %vm2527 = vcmp.eq.s32.totalorder %v2451, 1
        %vm2528 = vcmp.eq.s32.totalorder %v2455, 1
        %vm2529 = vcmp.eq.s32.totalorder %v2459, 1
        %vm2530 = vcmp.eq.s32.totalorder %v2463, 1
        %vm2531 = vcmp.eq.s32.totalorder %v2467, 1
        %vm2532 = vcmp.eq.s32.totalorder %v2471, 1
        %vm2533 = vcmp.eq.s32.totalorder %v2475, 1
        %vm2534 = vcmp.eq.s32.totalorder %v2479, 1
        %vm2535 = vcmp.eq.s32.totalorder %v2483, 1
        %vm2536 = vcmp.eq.s32.totalorder %v2487, 1
        %vm2537 = vcmp.eq.s32.totalorder %v2491, 1
        %vm2538 = vcmp.eq.s32.totalorder %v2495, 1
        %vm2539 = vcmp.eq.s32.totalorder %v2499, 1
        %vm2540 = vcmp.eq.s32.totalorder %v2503, 1
        %vm2541 = vcmp.eq.s32.totalorder %v2507, 1
        %vm2542 = vcmp.eq.s32.totalorder %v2511, 1
        %vm2543 = vcmp.eq.s32.totalorder %v2515, 1
        %vm2544 = vcmp.eq.s32.totalorder %v2519, 1
        %v2545 = vsel %vm2520, %v2362, 0.0
        %v2546 = vsel %vm2521, %v2363, 0.0
        %v2547 = vsel %vm2522, %v2364, 0.0
        %v2548 = vsel %vm2523, %v2365, 0.0
        %v2549 = vsel %vm2524, %v2366, 0.0
        %v2550 = vsel %vm2525, %v2367, 0.0
        %v2551 = vsel %vm2526, %v2368, 0.0
        %v2552 = vsel %vm2527, %v2369, 0.0
        %v2553 = vsel %vm2528, %v2370, 0.0
        %v2554 = vsel %vm2529, %v2371, 0.0
        %v2555 = vsel %vm2530, %v2372, 0.0
        %v2556 = vsel %vm2531, %v2373, 0.0
        %v2557 = vsel %vm2532, %v2374, 0.0
        %v2558 = vsel %vm2533, %v2375, 0.0
        %v2559 = vsel %vm2534, %v2376, 0.0
        %v2560 = vsel %vm2535, %v2377, 0.0
        %v2561 = vsel %vm2536, %v2378, 0.0
        %v2562 = vsel %vm2537, %v2379, 0.0
        %v2563 = vsel %vm2538, %v2380, 0.0
        %v2564 = vsel %vm2539, %v2381, 0.0
        %v2565 = vsel %vm2540, %v2382, 0.0
        %v2566 = vsel %vm2541, %v2383, 0.0
        %v2567 = vsel %vm2542, %v2384, 0.0
        %v2568 = vsel %vm2543, %v2385, 0.0
        %v2569 = vsel %vm2544, %v2415, 0.0
        %v2570 = vpack.c.bf16 %v1991, %v2282
        %v2571 = vpack.c.bf16 %v1992, %v2283
        %v2572 = vpack.c.bf16 %v1993, %v2284
        %v2573 = vpack.c.bf16 %v1994, %v2285
        %v2574 = vpack.c.bf16 %v1995, %v2286
        %v2575 = vpack.c.bf16 %v1996, %v2287
        %v2576 = vpack.c.bf16 %v1997, %v2288
        %v2577 = vpack.c.bf16 %v1998, %v2289
        %v2578 = vpack.c.bf16 %v1999, %v2290
        %v2579 = vpack.c.bf16 %v2000, %v2291
        %v2580 = vpack.c.bf16 %v2001, %v2292
        %v2581 = vpack.c.bf16 %v2002, %v2293
        %v2582 = vpack.c.bf16 %v2003, %v2294
        %v2583 = vpack.c.bf16 %v2004, %v2295
        %v2584 = vpack.c.bf16 %v2005, %v2296
        %v2585 = vpack.c.bf16 %v2006, %v2297
        %v2586 = vpack.c.bf16 %v2007, %v2298
        %v2587 = vpack.c.bf16 %v2008, %v2299
        %v2588 = vpack.c.bf16 %v2009, %v2300
        %v2589 = vpack.c.bf16 %v2010, %v2301
        %v2590 = vpack.c.bf16 %v2011, %v2302
        %v2591 = vpack.c.bf16 %v2012, %v2303
        %v2592 = vpack.c.bf16 %v2013, %v2304
        %v2593 = vpack.c.bf16 %v2014, %v2305
        %v2594 = vpack.c.bf16 %v2015, %v2306
        %v2595 = vpack.c.bf16 %v2545, %v2545
        %v2596 = vpack.c.bf16 %v2546, %v2546
        %v2597 = vpack.c.bf16 %v2547, %v2547
        %v2598 = vpack.c.bf16 %v2548, %v2548
        %v2599 = vpack.c.bf16 %v2549, %v2549
        %v2600 = vpack.c.bf16 %v2550, %v2550
        %v2601 = vpack.c.bf16 %v2551, %v2551
        %v2602 = vpack.c.bf16 %v2552, %v2552
        %v2603 = vpack.c.bf16 %v2553, %v2553
        %v2604 = vpack.c.bf16 %v2554, %v2554
        %v2605 = vpack.c.bf16 %v2555, %v2555
        %v2606 = vpack.c.bf16 %v2556, %v2556
        %v2607 = vpack.c.bf16 %v2557, %v2557
        %v2608 = vpack.c.bf16 %v2558, %v2558
        %v2609 = vpack.c.bf16 %v2559, %v2559
        %v2610 = vpack.c.bf16 %v2560, %v2560
        %v2611 = vpack.c.bf16 %v2561, %v2561
        %v2612 = vpack.c.bf16 %v2562, %v2562
        %v2613 = vpack.c.bf16 %v2563, %v2563
        %v2614 = vpack.c.bf16 %v2564, %v2564
        %v2615 = vpack.c.bf16 %v2565, %v2565
        %v2616 = vpack.c.bf16 %v2566, %v2566
        %v2617 = vpack.c.bf16 %v2567, %v2567
        %v2618 = vpack.c.bf16 %v2568, %v2568
        %v2619 = vpack.c.bf16 %v2569, %v2569
        %v2670 = vunpack.c.l.b16 %v2570
        %v2671 = vunpack.c.l.b16 %v2571
        %v2672 = vunpack.c.l.b16 %v2572
        %v2673 = vunpack.c.l.b16 %v2573
        %v2674 = vunpack.c.l.b16 %v2574
        %v2675 = vunpack.c.l.b16 %v2575
        %v2676 = vunpack.c.l.b16 %v2576
        %v2677 = vunpack.c.l.b16 %v2577
        %v2678 = vunpack.c.l.b16 %v2578
        %v2679 = vunpack.c.l.b16 %v2579
        %v2680 = vunpack.c.l.b16 %v2580
        %v2681 = vunpack.c.l.b16 %v2581
        %v2682 = vunpack.c.l.b16 %v2582
        %v2683 = vunpack.c.l.b16 %v2583
        %v2684 = vunpack.c.l.b16 %v2584
        %v2685 = vunpack.c.l.b16 %v2585
        %v2686 = vunpack.c.l.b16 %v2586
        %v2687 = vunpack.c.l.b16 %v2587
        %v2688 = vunpack.c.l.b16 %v2588
        %v2689 = vunpack.c.l.b16 %v2589
        %v2690 = vunpack.c.l.b16 %v2590
        %v2691 = vunpack.c.l.b16 %v2591
        %v2692 = vunpack.c.l.b16 %v2592
        %v2693 = vunpack.c.l.b16 %v2593
        %v2694 = vunpack.c.l.b16 %v2594
        %v2695 = vunpack.c.h.b16 %v2570
        %v2696 = vunpack.c.h.b16 %v2571
        %v2697 = vunpack.c.h.b16 %v2572
        %v2698 = vunpack.c.h.b16 %v2573
        %v2699 = vunpack.c.h.b16 %v2574
        %v2700 = vunpack.c.h.b16 %v2575
        %v2701 = vunpack.c.h.b16 %v2576
        %v2702 = vunpack.c.h.b16 %v2577
        %v2703 = vunpack.c.h.b16 %v2578
        %v2704 = vunpack.c.h.b16 %v2579
        %v2705 = vunpack.c.h.b16 %v2580
        %v2706 = vunpack.c.h.b16 %v2581
        %v2707 = vunpack.c.h.b16 %v2582
        %v2708 = vunpack.c.h.b16 %v2583
        %v2709 = vunpack.c.h.b16 %v2584
        %v2710 = vunpack.c.h.b16 %v2585
        %v2711 = vunpack.c.h.b16 %v2586
        %v2712 = vunpack.c.h.b16 %v2587
        %v2713 = vunpack.c.h.b16 %v2588
        %v2714 = vunpack.c.h.b16 %v2589
        %v2715 = vunpack.c.h.b16 %v2590
        %v2716 = vunpack.c.h.b16 %v2591
        %v2717 = vunpack.c.h.b16 %v2592
        %v2718 = vunpack.c.h.b16 %v2593
        %v2719 = vunpack.c.h.b16 %v2594
        %v2720 = vunpack.c.l.b16 %v2595
        %v2721 = vunpack.c.l.b16 %v2596
        %v2722 = vunpack.c.l.b16 %v2597
        %v2723 = vunpack.c.l.b16 %v2598
        %v2724 = vunpack.c.l.b16 %v2599
        %v2725 = vunpack.c.l.b16 %v2600
        %v2726 = vunpack.c.l.b16 %v2601
        %v2727 = vunpack.c.l.b16 %v2602
        %v2728 = vunpack.c.l.b16 %v2603
        %v2729 = vunpack.c.l.b16 %v2604
        %v2730 = vunpack.c.l.b16 %v2605
        %v2731 = vunpack.c.l.b16 %v2606
        %v2732 = vunpack.c.l.b16 %v2607
        %v2733 = vunpack.c.l.b16 %v2608
        %v2734 = vunpack.c.l.b16 %v2609
        %v2735 = vunpack.c.l.b16 %v2610
        %v2736 = vunpack.c.l.b16 %v2611
        %v2737 = vunpack.c.l.b16 %v2612
        %v2738 = vunpack.c.l.b16 %v2613
        %v2739 = vunpack.c.l.b16 %v2614
        %v2740 = vunpack.c.l.b16 %v2615
        %v2741 = vunpack.c.l.b16 %v2616
        %v2742 = vunpack.c.l.b16 %v2617
        %v2743 = vunpack.c.l.b16 %v2618
        %v2744 = vunpack.c.l.b16 %v2619
        %v2745 = vpack.c.b16 %v2671, %v2670
        %v2746 = vpack.c.b16 %v2673, %v2672
        %v2747 = vpack.c.b16 %v2675, %v2674
        %v2748 = vpack.c.b16 %v2677, %v2676
        %v2749 = vpack.c.b16 %v2679, %v2678
        %v2750 = vpack.c.b16 %v2681, %v2680
        %v2751 = vpack.c.b16 %v2683, %v2682
        %v2752 = vpack.c.b16 %v2685, %v2684
        %v2753 = vpack.c.b16 %v2687, %v2686
        %v2754 = vpack.c.b16 %v2689, %v2688
        %v2755 = vpack.c.b16 %v2691, %v2690
        %v2756 = vpack.c.b16 %v2693, %v2692
        %v2757 = vpack.c.b16 %v2694, %v2694
        %v2758 = vpack.c.b16 %v2696, %v2695
        %v2759 = vpack.c.b16 %v2698, %v2697
        %v2760 = vpack.c.b16 %v2700, %v2699
        %v2761 = vpack.c.b16 %v2702, %v2701
        %v2762 = vpack.c.b16 %v2704, %v2703
        %v2763 = vpack.c.b16 %v2706, %v2705
        %v2764 = vpack.c.b16 %v2708, %v2707
        %v2765 = vpack.c.b16 %v2710, %v2709
        %v2766 = vpack.c.b16 %v2712, %v2711
        %v2767 = vpack.c.b16 %v2714, %v2713
        %v2768 = vpack.c.b16 %v2716, %v2715
        %v2769 = vpack.c.b16 %v2718, %v2717
        %v2770 = vpack.c.b16 %v2719, %v2719
        %v2771 = vpack.c.b16 %v2721, %v2720
        %v2772 = vpack.c.b16 %v2723, %v2722
        %v2773 = vpack.c.b16 %v2725, %v2724
        %v2774 = vpack.c.b16 %v2727, %v2726
        %v2775 = vpack.c.b16 %v2729, %v2728
        %v2776 = vpack.c.b16 %v2731, %v2730
        %v2777 = vpack.c.b16 %v2733, %v2732
        %v2778 = vpack.c.b16 %v2735, %v2734
        %v2779 = vpack.c.b16 %v2737, %v2736
        %v2780 = vpack.c.b16 %v2739, %v2738
        %v2781 = vpack.c.b16 %v2741, %v2740
        %v2782 = vpack.c.b16 %v2743, %v2742
        %v2783 = vpack.c.b16 %v2744, %v2744
        %2823 = vst [vmem:[#allocation2] sm:$0xff] %v2745
        %2824 = vst [vmem:[#allocation2 + $0x8] sm:$0xff] %v2746
        %2825 = vst [vmem:[#allocation2 + $0x10] sm:$0xff] %v2747
        %2826 = vst [vmem:[#allocation2 + $0x18] sm:$0xff] %v2748
        %2827 = vst [vmem:[#allocation2 + $0x20] sm:$0xff] %v2749
        %2828 = vst [vmem:[#allocation2 + $0x28] sm:$0xff] %v2750
        %2829 = vst [vmem:[#allocation2 + $0x30] sm:$0xff] %v2751
        %2830 = vst [vmem:[#allocation2 + $0x38] sm:$0xff] %v2752
        %2831 = vst [vmem:[#allocation2 + $0x40] sm:$0xff] %v2753
        %2832 = vst [vmem:[#allocation2 + $0x48] sm:$0xff] %v2754
        %2833 = vst [vmem:[#allocation2 + $0x50] sm:$0xff] %v2755
        %2834 = vst [vmem:[#allocation2 + $0x58] sm:$0xff] %v2756
        %vm2835 = vcmask 519168
        %2836 = vst.msk [vmem:[#allocation2 + $0x60] sm:$0xf] %vm2835, %v2757
        %2837 = vst [vmem:[#allocation2 + $0x64] sm:$0xff] %v2758
        %2838 = vst [vmem:[#allocation2 + $0x6c] sm:$0xff] %v2759
        %2839 = vst [vmem:[#allocation2 + $0x74] sm:$0xff] %v2760
        %2840 = vst [vmem:[#allocation2 + $0x7c] sm:$0xff] %v2761
        %2841 = vst [vmem:[#allocation2 + $0x84] sm:$0xff] %v2762
        %2842 = vst [vmem:[#allocation2 + $0x8c] sm:$0xff] %v2763
        %2843 = vst [vmem:[#allocation2 + $0x94] sm:$0xff] %v2764
        %2844 = vst [vmem:[#allocation2 + $0x9c] sm:$0xff] %v2765
        %2845 = vst [vmem:[#allocation2 + $0xa4] sm:$0xff] %v2766
        %2846 = vst [vmem:[#allocation2 + $0xac] sm:$0xff] %v2767
        %2847 = vst [vmem:[#allocation2 + $0xb4] sm:$0xff] %v2768
        %2848 = vst [vmem:[#allocation2 + $0xbc] sm:$0xff] %v2769
        %2849 = vst.msk [vmem:[#allocation2 + $0xc4] sm:$0xf] %vm2835, %v2770
        %2850 = vst [vmem:[#allocation2 + $0xc8] sm:$0xff] %v2771
        %2851 = vst [vmem:[#allocation2 + $0xd0] sm:$0xff] %v2772
        %2852 = vst [vmem:[#allocation2 + $0xd8] sm:$0xff] %v2773
        %2853 = vst [vmem:[#allocation2 + $0xe0] sm:$0xff] %v2774
        %2854 = vst [vmem:[#allocation2 + $0xe8] sm:$0xff] %v2775
        %2855 = vst [vmem:[#allocation2 + $0xf0] sm:$0xff] %v2776
        %2856 = vst [vmem:[#allocation2 + $0xf8] sm:$0xff] %v2777
        %2857 = vst [vmem:[#allocation2 + $0x100] sm:$0xff] %v2778
        %2858 = vst [vmem:[#allocation2 + $0x108] sm:$0xff] %v2779
        %2859 = vst [vmem:[#allocation2 + $0x110] sm:$0xff] %v2780
        %2860 = vst [vmem:[#allocation2 + $0x118] sm:$0xff] %v2781
        %2861 = vst [vmem:[#allocation2 + $0x120] sm:$0xff] %v2782
        %2862 = vst.msk [vmem:[#allocation2 + $0x128] sm:$0xf] %vm2835, %v2783
      $region40: #{forward.1} parent=35 // pred_fallthru
        _
      %v2863 = vld [vmem:[%s194] sm:$0xf]
      %v2864 = vld [vmem:[%s194 + $0x4] sm:$0xf]
      %v2865 = vld [vmem:[%s194 + $0x8] sm:$0xf]
      %v2866 = vld [vmem:[%s194 + $0xc] sm:$0xf]
      %v2867 = vld [vmem:[%s194 + $0x10] sm:$0xf]
      %v2868 = vld [vmem:[%s194 + $0x14] sm:$0xf]
      %v2869 = vld [vmem:[%s194 + $0x18] sm:$0xf]
      %v2870 = vld [vmem:[%s194 + $0x1c] sm:$0xf]
      %v2871 = vld [vmem:[#allocation2] sm:$0xff]
      %v2872 = vld [vmem:[#allocation2 + $0x8] sm:$0xff]
      %v2873 = vld [vmem:[#allocation2 + $0x10] sm:$0xff]
      %v2874 = vld [vmem:[#allocation2 + $0x18] sm:$0xff]
      %v2875 = vld [vmem:[#allocation2 + $0x20] sm:$0xff]
      %v2876 = vld [vmem:[#allocation2 + $0x28] sm:$0xff]
      %v2877 = vld [vmem:[#allocation2 + $0x30] sm:$0xff]
      %v2878 = vld [vmem:[#allocation2 + $0x38] sm:$0xff]
      %v2879 = vld [vmem:[#allocation2 + $0x40] sm:$0xff]
      %v2880 = vld [vmem:[#allocation2 + $0x48] sm:$0xff]
      %v2881 = vld [vmem:[#allocation2 + $0x50] sm:$0xff]
      %v2882 = vld [vmem:[#allocation2 + $0x58] sm:$0xff]
      %v2883 = vld [vmem:[#allocation2 + $0x60] sm:$0xf]
      %v2884 = vld [vmem:[#allocation2 + $0x64] sm:$0xff]
      %v2885 = vld [vmem:[#allocation2 + $0x6c] sm:$0xff]
      %v2886 = vld [vmem:[#allocation2 + $0x74] sm:$0xff]
      %v2887 = vld [vmem:[#allocation2 + $0x7c] sm:$0xff]
      %v2888 = vld [vmem:[#allocation2 + $0x84] sm:$0xff]
      %v2889 = vld [vmem:[#allocation2 + $0x8c] sm:$0xff]
      %v2890 = vld [vmem:[#allocation2 + $0x94] sm:$0xff]
      %v2891 = vld [vmem:[#allocation2 + $0x9c] sm:$0xff]
      %v2892 = vld [vmem:[#allocation2 + $0xa4] sm:$0xff]
      %v2893 = vld [vmem:[#allocation2 + $0xac] sm:$0xff]
      %v2894 = vld [vmem:[#allocation2 + $0xb4] sm:$0xff]
      %v2895 = vld [vmem:[#allocation2 + $0xbc] sm:$0xff]
      %v2896 = vld [vmem:[#allocation2 + $0xc4] sm:$0xf]
      %v2897 = vld [vmem:[#allocation2 + $0xc8] sm:$0xff]
      %v2898 = vld [vmem:[#allocation2 + $0xd0] sm:$0xff]
      %v2899 = vld [vmem:[#allocation2 + $0xd8] sm:$0xff]
      %v2900 = vld [vmem:[#allocation2 + $0xe0] sm:$0xff]
      %v2901 = vld [vmem:[#allocation2 + $0xe8] sm:$0xff]
      %v2902 = vld [vmem:[#allocation2 + $0xf0] sm:$0xff]
      %v2903 = vld [vmem:[#allocation2 + $0xf8] sm:$0xff]
      %v2904 = vld [vmem:[#allocation2 + $0x100] sm:$0xff]
      %v2905 = vld [vmem:[#allocation2 + $0x108] sm:$0xff]
      %v2906 = vld [vmem:[#allocation2 + $0x110] sm:$0xff]
      %v2907 = vld [vmem:[#allocation2 + $0x118] sm:$0xff]
      %v2908 = vld [vmem:[#allocation2 + $0x120] sm:$0xff]
      %v2909 = vld [vmem:[#allocation2 + $0x128] sm:$0xf]
      %v2918 = vunpack.c.l.b16 %v2863
      %v2919 = vunpack.c.l.b16 %v2864
      %v2920 = vunpack.c.l.b16 %v2865
      %v2921 = vunpack.c.l.b16 %v2866
      %v2922 = vunpack.c.l.b16 %v2867
      %v2923 = vunpack.c.l.b16 %v2868
      %v2924 = vunpack.c.l.b16 %v2869
      %v2925 = vunpack.c.l.b16 %v2870
      %v2926 = vpack.c.b16 %v2919, %v2918
      %v2927 = vpack.c.b16 %v2921, %v2920
      %v2928 = vpack.c.b16 %v2923, %v2922
      %v2929 = vpack.c.b16 %v2925, %v2924
      %v2969 = vunpack.c.l.b16 %v2871
      %v2970 = vunpack.c.h.b16 %v2871
      %v2971 = vunpack.c.l.b16 %v2872
      %v2972 = vunpack.c.h.b16 %v2872
      %v2973 = vunpack.c.l.b16 %v2873
      %v2974 = vunpack.c.h.b16 %v2873
      %v2975 = vunpack.c.l.b16 %v2874
      %v2976 = vunpack.c.h.b16 %v2874
      %v2977 = vunpack.c.l.b16 %v2875
      %v2978 = vunpack.c.h.b16 %v2875
      %v2979 = vunpack.c.l.b16 %v2876
      %v2980 = vunpack.c.h.b16 %v2876
      %v2981 = vunpack.c.l.b16 %v2877
      %v2982 = vunpack.c.h.b16 %v2877
      %v2983 = vunpack.c.l.b16 %v2878
      %v2984 = vunpack.c.h.b16 %v2878
      %v2985 = vunpack.c.l.b16 %v2879
      %v2986 = vunpack.c.h.b16 %v2879
      %v2987 = vunpack.c.l.b16 %v2880
      %v2988 = vunpack.c.h.b16 %v2880
      %v2989 = vunpack.c.l.b16 %v2881
      %v2990 = vunpack.c.h.b16 %v2881
      %v2991 = vunpack.c.l.b16 %v2882
      %v2992 = vunpack.c.h.b16 %v2882
      %v2993 = vunpack.c.l.b16 %v2883
      %v2994 = vunpack.c.l.b16 %v2884
      %v2995 = vunpack.c.h.b16 %v2884
      %v2996 = vunpack.c.l.b16 %v2885
      %v2997 = vunpack.c.h.b16 %v2885
      %v2998 = vunpack.c.l.b16 %v2886
      %v2999 = vunpack.c.h.b16 %v2886
      %v3000 = vunpack.c.l.b16 %v2887
      %v3001 = vunpack.c.h.b16 %v2887
      %v3002 = vunpack.c.l.b16 %v2888
      %v3003 = vunpack.c.h.b16 %v2888
      %v3004 = vunpack.c.l.b16 %v2889
      %v3005 = vunpack.c.h.b16 %v2889
      %v3006 = vunpack.c.l.b16 %v2890
      %v3007 = vunpack.c.h.b16 %v2890
      %v3008 = vunpack.c.l.b16 %v2891
      %v3009 = vunpack.c.h.b16 %v2891
      %v3010 = vunpack.c.l.b16 %v2892
      %v3011 = vunpack.c.h.b16 %v2892
      %v3012 = vunpack.c.l.b16 %v2893
      %v3013 = vunpack.c.h.b16 %v2893
      %v3014 = vunpack.c.l.b16 %v2894
      %v3015 = vunpack.c.h.b16 %v2894
      %v3016 = vunpack.c.l.b16 %v2895
      %v3017 = vunpack.c.h.b16 %v2895
      %v3018 = vunpack.c.l.b16 %v2896
      %v3019 = vunpack.c.l.b16 %v2897
      %v3020 = vunpack.c.h.b16 %v2897
      %v3021 = vunpack.c.l.b16 %v2898
      %v3022 = vunpack.c.h.b16 %v2898
      %v3023 = vunpack.c.l.b16 %v2899
      %v3024 = vunpack.c.h.b16 %v2899
      %v3025 = vunpack.c.l.b16 %v2900
      %v3026 = vunpack.c.h.b16 %v2900
      %v3027 = vunpack.c.l.b16 %v2901
      %v3028 = vunpack.c.h.b16 %v2901
      %v3029 = vunpack.c.l.b16 %v2902
      %v3030 = vunpack.c.h.b16 %v2902
      %v3031 = vunpack.c.l.b16 %v2903
      %v3032 = vunpack.c.h.b16 %v2903
      %v3033 = vunpack.c.l.b16 %v2904
      %v3034 = vunpack.c.h.b16 %v2904
      %v3035 = vunpack.c.l.b16 %v2905
      %v3036 = vunpack.c.h.b16 %v2905
      %v3037 = vunpack.c.l.b16 %v2906
      %v3038 = vunpack.c.h.b16 %v2906
      %v3039 = vunpack.c.l.b16 %v2907
      %v3040 = vunpack.c.h.b16 %v2907
      %v3041 = vunpack.c.l.b16 %v2908
      %v3042 = vunpack.c.h.b16 %v2908
      %v3043 = vunpack.c.l.b16 %v2909
      %v3044 = vpack.c.b16 %v2994, %v2969
      %v3045 = vpack.c.b16 %v2995, %v2970
      %v3046 = vpack.c.b16 %v2996, %v2971
      %v3047 = vpack.c.b16 %v2997, %v2972
      %v3048 = vpack.c.b16 %v2998, %v2973
      %v3049 = vpack.c.b16 %v2999, %v2974
      %v3050 = vpack.c.b16 %v3000, %v2975
      %v3051 = vpack.c.b16 %v3001, %v2976
      %v3052 = vpack.c.b16 %v3002, %v2977
      %v3053 = vpack.c.b16 %v3003, %v2978
      %v3054 = vpack.c.b16 %v3004, %v2979
      %v3055 = vpack.c.b16 %v3005, %v2980
      %v3056 = vpack.c.b16 %v3006, %v2981
      %v3057 = vpack.c.b16 %v3007, %v2982
      %v3058 = vpack.c.b16 %v3008, %v2983
      %v3059 = vpack.c.b16 %v3009, %v2984
      %v3060 = vpack.c.b16 %v3010, %v2985
      %v3061 = vpack.c.b16 %v3011, %v2986
      %v3062 = vpack.c.b16 %v3012, %v2987
      %v3063 = vpack.c.b16 %v3013, %v2988
      %v3064 = vpack.c.b16 %v3014, %v2989
      %v3065 = vpack.c.b16 %v3015, %v2990
      %v3066 = vpack.c.b16 %v3016, %v2991
      %v3067 = vpack.c.b16 %v3017, %v2992
      %v3068 = vpack.c.b16 %v3018, %v2993
      %v3069 = vpack.c.b16 %v3019, %v3019
      %v3070 = vpack.c.b16 %v3020, %v3020
      %v3071 = vpack.c.b16 %v3021, %v3021
      %v3072 = vpack.c.b16 %v3022, %v3022
      %v3073 = vpack.c.b16 %v3023, %v3023
      %v3074 = vpack.c.b16 %v3024, %v3024
      %v3075 = vpack.c.b16 %v3025, %v3025
      %v3076 = vpack.c.b16 %v3026, %v3026
      %v3077 = vpack.c.b16 %v3027, %v3027
      %v3078 = vpack.c.b16 %v3028, %v3028
      %v3079 = vpack.c.b16 %v3029, %v3029
      %v3080 = vpack.c.b16 %v3030, %v3030
      %v3081 = vpack.c.b16 %v3031, %v3031
      %v3082 = vpack.c.b16 %v3032, %v3032
      %v3083 = vpack.c.b16 %v3033, %v3033
      %v3084 = vpack.c.b16 %v3034, %v3034
      %v3085 = vpack.c.b16 %v3035, %v3035
      %v3086 = vpack.c.b16 %v3036, %v3036
      %v3087 = vpack.c.b16 %v3037, %v3037
      %v3088 = vpack.c.b16 %v3038, %v3038
      %v3089 = vpack.c.b16 %v3039, %v3039
      %v3090 = vpack.c.b16 %v3040, %v3040
      %v3091 = vpack.c.b16 %v3041, %v3041
      %v3092 = vpack.c.b16 %v3042, %v3042
      %v3093 = vpack.c.b16 %v3043, %v3043
      %vm3119 = vcmask 195584
      %v3121 = vsel %vm3119, %v2926, 0
      %v3124 = vsel %vm3119, %v2927, 0
      %v3127 = vsel %vm3119, %v2928, 0
      %v3130 = vsel %vm3119, %v2929, 0
      %vm3132 = vcmask 1043456
      %v3134 = vsel %vm3132, %v3069, 0
      %v3137 = vsel %vm3132, %v3070, 0
      %v3140 = vsel %vm3132, %v3071, 0
      %v3143 = vsel %vm3132, %v3072, 0
      %v3146 = vsel %vm3132, %v3073, 0
      %v3149 = vsel %vm3132, %v3074, 0
      %v3152 = vsel %vm3132, %v3075, 0
      %v3155 = vsel %vm3132, %v3076, 0
      %v3158 = vsel %vm3132, %v3077, 0
      %v3161 = vsel %vm3132, %v3078, 0
      %v3164 = vsel %vm3132, %v3079, 0
      %v3167 = vsel %vm3132, %v3080, 0
      %v3170 = vsel %vm3132, %v3081, 0
      %v3173 = vsel %vm3132, %v3082, 0
      %v3176 = vsel %vm3132, %v3083, 0
      %v3179 = vsel %vm3132, %v3084, 0
      %v3182 = vsel %vm3132, %v3085, 0
      %v3185 = vsel %vm3132, %v3086, 0
      %v3188 = vsel %vm3132, %v3087, 0
      %v3191 = vsel %vm3132, %v3088, 0
      %v3194 = vsel %vm3132, %v3089, 0
      %v3197 = vsel %vm3132, %v3090, 0
      %v3200 = vsel %vm3132, %v3091, 0
      %v3203 = vsel %vm3132, %v3092, 0
      %v3206 = vsel %vm3132, %v3093, 0
      %3208 = vmatprep.subr.bf16.mxu0 0
      %3209 = vmatpush1.bf16.msra.mxu0 0
      %3210 = vmatprep.subr.bf16.mxu0 0
      %3211 = vmatpush1.bf16.msra.mxu0 0
      %3212 = vmatprep.subr.bf16.mxu0 0
      %3213 = vmatpush1.bf16.msra.mxu0 0
      %3214 = vmatprep.subr.bf16.mxu0 0
      %3215 = vmatpush1.bf16.msra.mxu0 0
      %3216 = vmatprep.subr.bf16.mxu0 0
      %3217 = vmatpush1.bf16.msra.mxu0 0
      %3218 = vmatprep.subr.bf16.mxu0 0
      %3219 = vmatpush1.bf16.msra.mxu0 0
      %3220 = vmatprep.subr.bf16.mxu0 %v3137
      %3221 = vmatpush1.bf16.msra.mxu0 %v3134
      %3222 = vmatprep.subr.bf16.mxu0 %v3045
      %3223 = vmatpush1.bf16.msra.mxu0 %v3044
      %3224 = vmatprep.subr.bf16.mxu0 0
      %3225 = vmatpush2.bf16.msra.mxu0 0
      %3226 = vmatprep.subr.bf16.mxu0 0
      %3227 = vmatpush2.bf16.msra.mxu0 0
      %3228 = vmatprep.subr.bf16.mxu0 0
      %3229 = vmatpush2.bf16.msra.mxu0 0
      %3230 = vmatprep.subr.bf16.mxu0 0
      %3231 = vmatpush2.bf16.msra.mxu0 0
      %3232 = vmatprep.subr.bf16.mxu0 0
      %3233 = vmatpush2.bf16.msra.mxu0 0
      %3234 = vmatprep.subr.bf16.mxu0 0
      %3235 = vmatpush2.bf16.msra.mxu0 0
      %3236 = vmatprep.subr.bf16.mxu0 0
      %3237 = vmatpush2.bf16.msra.mxu0 0
      %3238 = vmatprep.subr.bf16.mxu0 0
      %3239 = vmatpush2.bf16.msra.mxu0 0
      %3240 = vmatprep.mubr.bf16.mxu0 0
      %3241 = vmatmul.mubr.bf16.gmra.mxu0 %v3121
      %v3242 = vpop.f32.mrf.mxu0
      %v3243 = vadd.f32 0.0, %v3242
      %v3244 = vpop.f32.mrf.mxu0
      %v3245 = vadd.f32 0.0, %v3244
      %v3246 = vpop.f32.mrf.mxu0
      %v3247 = vadd.f32 0.0, %v3246
      %v3248 = vpop.f32.mrf.mxu0
      %v3249 = vadd.f32 0.0, %v3248
      %3250 = vmatprep.mubr.bf16.mxu0 0
      %3251 = vmatmul.mubr.bf16.gmra.mxu0 %v3124
      %v3252 = vpop.f32.mrf.mxu0
      %v3253 = vadd.f32 0.0, %v3252
      %v3254 = vpop.f32.mrf.mxu0
      %v3255 = vadd.f32 0.0, %v3254
      %v3256 = vpop.f32.mrf.mxu0
      %v3257 = vadd.f32 0.0, %v3256
      %v3258 = vpop.f32.mrf.mxu0
      %v3259 = vadd.f32 0.0, %v3258
      %3260 = vmatprep.mubr.bf16.mxu0 0
      %3261 = vmatmul.mubr.bf16.gmra.mxu0 %v3127
      %v3262 = vpop.f32.mrf.mxu0
      %v3263 = vadd.f32 0.0, %v3262
      %v3264 = vpop.f32.mrf.mxu0
      %v3265 = vadd.f32 0.0, %v3264
      %v3266 = vpop.f32.mrf.mxu0
      %v3267 = vadd.f32 0.0, %v3266
      %v3268 = vpop.f32.mrf.mxu0
      %v3269 = vadd.f32 0.0, %v3268
      %3270 = vmatprep.mubr.bf16.mxu0 0
      %3271 = vmatmul.mubr.bf16.gmra.mxu0 %v3130
      %v3272 = vpop.f32.mrf.mxu0
      %v3273 = vadd.f32 0.0, %v3272
      %v3274 = vpop.f32.mrf.mxu0
      %v3275 = vadd.f32 0.0, %v3274
      %v3276 = vpop.f32.mrf.mxu0
      %v3277 = vadd.f32 0.0, %v3276
      %v3278 = vpop.f32.mrf.mxu0
      %v3279 = vadd.f32 0.0, %v3278
      %3280 = vdwg.mxu0
      %3281 = vmatprep.subr.bf16.mxu0 0
      %3282 = vmatpush1.bf16.msra.mxu0 0
      %3283 = vmatprep.subr.bf16.mxu0 0
      %3284 = vmatpush1.bf16.msra.mxu0 0
      %3285 = vmatprep.subr.bf16.mxu0 0
      %3286 = vmatpush1.bf16.msra.mxu0 0
      %3287 = vmatprep.subr.bf16.mxu0 0
      %3288 = vmatpush1.bf16.msra.mxu0 0
      %3289 = vmatprep.subr.bf16.mxu0 0
      %3290 = vmatpush1.bf16.msra.mxu0 0
      %3291 = vmatprep.subr.bf16.mxu0 0
      %3292 = vmatpush1.bf16.msra.mxu0 0
      %3293 = vmatprep.subr.bf16.mxu0 %v3143
      %3294 = vmatpush1.bf16.msra.mxu0 %v3140
      %3295 = vmatprep.subr.bf16.mxu0 %v3047
      %3296 = vmatpush1.bf16.msra.mxu0 %v3046
      %3297 = vmatprep.subr.bf16.mxu0 0
      %3298 = vmatpush2.bf16.msra.mxu0 0
      %3299 = vmatprep.subr.bf16.mxu0 0
      %3300 = vmatpush2.bf16.msra.mxu0 0
      %3301 = vmatprep.subr.bf16.mxu0 0
      %3302 = vmatpush2.bf16.msra.mxu0 0
      %3303 = vmatprep.subr.bf16.mxu0 0
      %3304 = vmatpush2.bf16.msra.mxu0 0
      %3305 = vmatprep.subr.bf16.mxu0 0
      %3306 = vmatpush2.bf16.msra.mxu0 0
      %3307 = vmatprep.subr.bf16.mxu0 0
      %3308 = vmatpush2.bf16.msra.mxu0 0
      %3309 = vmatprep.subr.bf16.mxu0 0
      %3310 = vmatpush2.bf16.msra.mxu0 0
      %3311 = vmatprep.subr.bf16.mxu0 0
      %3312 = vmatpush2.bf16.msra.mxu0 0
      %3313 = vmatprep.mubr.bf16.mxu0 0
      %3314 = vmatmul.mubr.bf16.gmra.mxu0 %v3121
      %v3315 = vpop.f32.mrf.mxu0
      %v3316 = vadd.f32 0.0, %v3315
      %v3317 = vpop.f32.mrf.mxu0
      %v3318 = vadd.f32 0.0, %v3317
      %v3319 = vpop.f32.mrf.mxu0
      %v3320 = vadd.f32 0.0, %v3319
      %v3321 = vpop.f32.mrf.mxu0
      %v3322 = vadd.f32 0.0, %v3321
      %3323 = vmatprep.mubr.bf16.mxu0 0
      %3324 = vmatmul.mubr.bf16.gmra.mxu0 %v3124
      %v3325 = vpop.f32.mrf.mxu0
      %v3326 = vadd.f32 0.0, %v3325
      %v3327 = vpop.f32.mrf.mxu0
      %v3328 = vadd.f32 0.0, %v3327
      %v3329 = vpop.f32.mrf.mxu0
      %v3330 = vadd.f32 0.0, %v3329
      %v3331 = vpop.f32.mrf.mxu0
      %v3332 = vadd.f32 0.0, %v3331
      %3333 = vmatprep.mubr.bf16.mxu0 0
      %3334 = vmatmul.mubr.bf16.gmra.mxu0 %v3127
      %v3335 = vpop.f32.mrf.mxu0
      %v3336 = vadd.f32 0.0, %v3335
      %v3337 = vpop.f32.mrf.mxu0
      %v3338 = vadd.f32 0.0, %v3337
      %v3339 = vpop.f32.mrf.mxu0
      %v3340 = vadd.f32 0.0, %v3339
      %v3341 = vpop.f32.mrf.mxu0
      %v3342 = vadd.f32 0.0, %v3341
      %3343 = vmatprep.mubr.bf16.mxu0 0
      %3344 = vmatmul.mubr.bf16.gmra.mxu0 %v3130
      %v3345 = vpop.f32.mrf.mxu0
      %v3346 = vadd.f32 0.0, %v3345
      %v3347 = vpop.f32.mrf.mxu0
      %v3348 = vadd.f32 0.0, %v3347
      %v3349 = vpop.f32.mrf.mxu0
      %v3350 = vadd.f32 0.0, %v3349
      %v3351 = vpop.f32.mrf.mxu0
      %v3352 = vadd.f32 0.0, %v3351
      %3353 = vdwg.mxu0
      %3354 = vmatprep.subr.bf16.mxu0 0
      %3355 = vmatpush1.bf16.msra.mxu0 0
      %3356 = vmatprep.subr.bf16.mxu0 0
      %3357 = vmatpush1.bf16.msra.mxu0 0
      %3358 = vmatprep.subr.bf16.mxu0 0
      %3359 = vmatpush1.bf16.msra.mxu0 0
      %3360 = vmatprep.subr.bf16.mxu0 0
      %3361 = vmatpush1.bf16.msra.mxu0 0
      %3362 = vmatprep.subr.bf16.mxu0 0
      %3363 = vmatpush1.bf16.msra.mxu0 0
      %3364 = vmatprep.subr.bf16.mxu0 0
      %3365 = vmatpush1.bf16.msra.mxu0 0
      %3366 = vmatprep.subr.bf16.mxu0 %v3149
      %3367 = vmatpush1.bf16.msra.mxu0 %v3146
      %3368 = vmatprep.subr.bf16.mxu0 %v3049
      %3369 = vmatpush1.bf16.msra.mxu0 %v3048
      %3370 = vmatprep.subr.bf16.mxu0 0
      %3371 = vmatpush2.bf16.msra.mxu0 0
      %3372 = vmatprep.subr.bf16.mxu0 0
      %3373 = vmatpush2.bf16.msra.mxu0 0
      %3374 = vmatprep.subr.bf16.mxu0 0
      %3375 = vmatpush2.bf16.msra.mxu0 0
      %3376 = vmatprep.subr.bf16.mxu0 0
      %3377 = vmatpush2.bf16.msra.mxu0 0
      %3378 = vmatprep.subr.bf16.mxu0 0
      %3379 = vmatpush2.bf16.msra.mxu0 0
      %3380 = vmatprep.subr.bf16.mxu0 0
      %3381 = vmatpush2.bf16.msra.mxu0 0
      %3382 = vmatprep.subr.bf16.mxu0 0
      %3383 = vmatpush2.bf16.msra.mxu0 0
      %3384 = vmatprep.subr.bf16.mxu0 0
      %3385 = vmatpush2.bf16.msra.mxu0 0
      %3386 = vmatprep.mubr.bf16.mxu0 0
      %3387 = vmatmul.mubr.bf16.gmra.mxu0 %v3121
      %v3388 = vpop.f32.mrf.mxu0
      %v3389 = vadd.f32 0.0, %v3388
      %v3390 = vpop.f32.mrf.mxu0
      %v3391 = vadd.f32 0.0, %v3390
      %v3392 = vpop.f32.mrf.mxu0
      %v3393 = vadd.f32 0.0, %v3392
      %v3394 = vpop.f32.mrf.mxu0
      %v3395 = vadd.f32 0.0, %v3394
      %3396 = vmatprep.mubr.bf16.mxu0 0
      %3397 = vmatmul.mubr.bf16.gmra.mxu0 %v3124
      %v3398 = vpop.f32.mrf.mxu0
      %v3399 = vadd.f32 0.0, %v3398
      %v3400 = vpop.f32.mrf.mxu0
      %v3401 = vadd.f32 0.0, %v3400
      %v3402 = vpop.f32.mrf.mxu0
      %v3403 = vadd.f32 0.0, %v3402
      %v3404 = vpop.f32.mrf.mxu0
      %v3405 = vadd.f32 0.0, %v3404
      %3406 = vmatprep.mubr.bf16.mxu0 0
      %3407 = vmatmul.mubr.bf16.gmra.mxu0 %v3127
      %v3408 = vpop.f32.mrf.mxu0
      %v3409 = vadd.f32 0.0, %v3408
      %v3410 = vpop.f32.mrf.mxu0
      %v3411 = vadd.f32 0.0, %v3410
      %v3412 = vpop.f32.mrf.mxu0
      %v3413 = vadd.f32 0.0, %v3412
      %v3414 = vpop.f32.mrf.mxu0
      %v3415 = vadd.f32 0.0, %v3414
      %3416 = vmatprep.mubr.bf16.mxu0 0
      %3417 = vmatmul.mubr.bf16.gmra.mxu0 %v3130
      %v3418 = vpop.f32.mrf.mxu0
      %v3419 = vadd.f32 0.0, %v3418
      %v3420 = vpop.f32.mrf.mxu0
      %v3421 = vadd.f32 0.0, %v3420
      %v3422 = vpop.f32.mrf.mxu0
      %v3423 = vadd.f32 0.0, %v3422
      %v3424 = vpop.f32.mrf.mxu0
      %v3425 = vadd.f32 0.0, %v3424
      %3426 = vdwg.mxu0
      %3427 = vmatprep.subr.bf16.mxu0 0
      %3428 = vmatpush1.bf16.msra.mxu0 0
      %3429 = vmatprep.subr.bf16.mxu0 0
      %3430 = vmatpush1.bf16.msra.mxu0 0
      %3431 = vmatprep.subr.bf16.mxu0 0
      %3432 = vmatpush1.bf16.msra.mxu0 0
      %3433 = vmatprep.subr.bf16.mxu0 0
      %3434 = vmatpush1.bf16.msra.mxu0 0
      %3435 = vmatprep.subr.bf16.mxu0 0
      %3436 = vmatpush1.bf16.msra.mxu0 0
      %3437 = vmatprep.subr.bf16.mxu0 0
      %3438 = vmatpush1.bf16.msra.mxu0 0
      %3439 = vmatprep.subr.bf16.mxu0 %v3155
      %3440 = vmatpush1.bf16.msra.mxu0 %v3152
      %3441 = vmatprep.subr.bf16.mxu0 %v3051
      %3442 = vmatpush1.bf16.msra.mxu0 %v3050
      %3443 = vmatprep.subr.bf16.mxu0 0
      %3444 = vmatpush2.bf16.msra.mxu0 0
      %3445 = vmatprep.subr.bf16.mxu0 0
      %3446 = vmatpush2.bf16.msra.mxu0 0
      %3447 = vmatprep.subr.bf16.mxu0 0
      %3448 = vmatpush2.bf16.msra.mxu0 0
      %3449 = vmatprep.subr.bf16.mxu0 0
      %3450 = vmatpush2.bf16.msra.mxu0 0
      %3451 = vmatprep.subr.bf16.mxu0 0
      %3452 = vmatpush2.bf16.msra.mxu0 0
      %3453 = vmatprep.subr.bf16.mxu0 0
      %3454 = vmatpush2.bf16.msra.mxu0 0
      %3455 = vmatprep.subr.bf16.mxu0 0
      %3456 = vmatpush2.bf16.msra.mxu0 0
      %3457 = vmatprep.subr.bf16.mxu0 0
      %3458 = vmatpush2.bf16.msra.mxu0 0
      %3459 = vmatprep.mubr.bf16.mxu0 0
      %3460 = vmatmul.mubr.bf16.gmra.mxu0 %v3121
      %v3461 = vpop.f32.mrf.mxu0
      %v3462 = vadd.f32 0.0, %v3461
      %v3463 = vpop.f32.mrf.mxu0
      %v3464 = vadd.f32 0.0, %v3463
      %v3465 = vpop.f32.mrf.mxu0
      %v3466 = vadd.f32 0.0, %v3465
      %v3467 = vpop.f32.mrf.mxu0
      %v3468 = vadd.f32 0.0, %v3467
      %3469 = vmatprep.mubr.bf16.mxu0 0
      %3470 = vmatmul.mubr.bf16.gmra.mxu0 %v3124
      %v3471 = vpop.f32.mrf.mxu0
      %v3472 = vadd.f32 0.0, %v3471
      %v3473 = vpop.f32.mrf.mxu0
      %v3474 = vadd.f32 0.0, %v3473
      %v3475 = vpop.f32.mrf.mxu0
      %v3476 = vadd.f32 0.0, %v3475
      %v3477 = vpop.f32.mrf.mxu0
      %v3478 = vadd.f32 0.0, %v3477
      %3479 = vmatprep.mubr.bf16.mxu0 0
      %3480 = vmatmul.mubr.bf16.gmra.mxu0 %v3127
      %v3481 = vpop.f32.mrf.mxu0
      %v3482 = vadd.f32 0.0, %v3481
      %v3483 = vpop.f32.mrf.mxu0
      %v3484 = vadd.f32 0.0, %v3483
      %v3485 = vpop.f32.mrf.mxu0
      %v3486 = vadd.f32 0.0, %v3485
      %v3487 = vpop.f32.mrf.mxu0
      %v3488 = vadd.f32 0.0, %v3487
      %3489 = vmatprep.mubr.bf16.mxu0 0
      %3490 = vmatmul.mubr.bf16.gmra.mxu0 %v3130
      %v3491 = vpop.f32.mrf.mxu0
      %v3492 = vadd.f32 0.0, %v3491
      %v3493 = vpop.f32.mrf.mxu0
      %v3494 = vadd.f32 0.0, %v3493
      %v3495 = vpop.f32.mrf.mxu0
      %v3496 = vadd.f32 0.0, %v3495
      %v3497 = vpop.f32.mrf.mxu0
      %v3498 = vadd.f32 0.0, %v3497
      %3499 = vdwg.mxu0
      %3500 = vmatprep.subr.bf16.mxu0 0
      %3501 = vmatpush1.bf16.msra.mxu0 0
      %3502 = vmatprep.subr.bf16.mxu0 0
      %3503 = vmatpush1.bf16.msra.mxu0 0
      %3504 = vmatprep.subr.bf16.mxu0 0
      %3505 = vmatpush1.bf16.msra.mxu0 0
      %3506 = vmatprep.subr.bf16.mxu0 0
      %3507 = vmatpush1.bf16.msra.mxu0 0
      %3508 = vmatprep.subr.bf16.mxu0 0
      %3509 = vmatpush1.bf16.msra.mxu0 0
      %3510 = vmatprep.subr.bf16.mxu0 0
      %3511 = vmatpush1.bf16.msra.mxu0 0
      %3512 = vmatprep.subr.bf16.mxu0 %v3161
      %3513 = vmatpush1.bf16.msra.mxu0 %v3158
      %3514 = vmatprep.subr.bf16.mxu0 %v3053
      %3515 = vmatpush1.bf16.msra.mxu0 %v3052
      %3516 = vmatprep.subr.bf16.mxu0 0
      %3517 = vmatpush2.bf16.msra.mxu0 0
      %3518 = vmatprep.subr.bf16.mxu0 0
      %3519 = vmatpush2.bf16.msra.mxu0 0
      %3520 = vmatprep.subr.bf16.mxu0 0
      %3521 = vmatpush2.bf16.msra.mxu0 0
      %3522 = vmatprep.subr.bf16.mxu0 0
      %3523 = vmatpush2.bf16.msra.mxu0 0
      %3524 = vmatprep.subr.bf16.mxu0 0
      %3525 = vmatpush2.bf16.msra.mxu0 0
      %3526 = vmatprep.subr.bf16.mxu0 0
      %3527 = vmatpush2.bf16.msra.mxu0 0
      %3528 = vmatprep.subr.bf16.mxu0 0
      %3529 = vmatpush2.bf16.msra.mxu0 0
      %3530 = vmatprep.subr.bf16.mxu0 0
      %3531 = vmatpush2.bf16.msra.mxu0 0
      %3532 = vmatprep.mubr.bf16.mxu0 0
      %3533 = vmatmul.mubr.bf16.gmra.mxu0 %v3121
      %v3534 = vpop.f32.mrf.mxu0
      %v3535 = vadd.f32 0.0, %v3534
      %v3536 = vpop.f32.mrf.mxu0
      %v3537 = vadd.f32 0.0, %v3536
      %v3538 = vpop.f32.mrf.mxu0
      %v3539 = vadd.f32 0.0, %v3538
      %v3540 = vpop.f32.mrf.mxu0
      %v3541 = vadd.f32 0.0, %v3540
      %3542 = vmatprep.mubr.bf16.mxu0 0
      %3543 = vmatmul.mubr.bf16.gmra.mxu0 %v3124
      %v3544 = vpop.f32.mrf.mxu0
      %v3545 = vadd.f32 0.0, %v3544
      %v3546 = vpop.f32.mrf.mxu0
      %v3547 = vadd.f32 0.0, %v3546
      %v3548 = vpop.f32.mrf.mxu0
      %v3549 = vadd.f32 0.0, %v3548
      %v3550 = vpop.f32.mrf.mxu0
      %v3551 = vadd.f32 0.0, %v3550
      %3552 = vmatprep.mubr.bf16.mxu0 0
      %3553 = vmatmul.mubr.bf16.gmra.mxu0 %v3127
      %v3554 = vpop.f32.mrf.mxu0
      %v3555 = vadd.f32 0.0, %v3554
      %v3556 = vpop.f32.mrf.mxu0
      %v3557 = vadd.f32 0.0, %v3556
      %v3558 = vpop.f32.mrf.mxu0
      %v3559 = vadd.f32 0.0, %v3558
      %v3560 = vpop.f32.mrf.mxu0
      %v3561 = vadd.f32 0.0, %v3560
      %3562 = vmatprep.mubr.bf16.mxu0 0
      %3563 = vmatmul.mubr.bf16.gmra.mxu0 %v3130
      %v3564 = vpop.f32.mrf.mxu0
      %v3565 = vadd.f32 0.0, %v3564
      %v3566 = vpop.f32.mrf.mxu0
      %v3567 = vadd.f32 0.0, %v3566
      %v3568 = vpop.f32.mrf.mxu0
      %v3569 = vadd.f32 0.0, %v3568
      %v3570 = vpop.f32.mrf.mxu0
      %v3571 = vadd.f32 0.0, %v3570
      %3572 = vdwg.mxu0
      %3573 = vmatprep.subr.bf16.mxu0 0
      %3574 = vmatpush1.bf16.msra.mxu0 0
      %3575 = vmatprep.subr.bf16.mxu0 0
      %3576 = vmatpush1.bf16.msra.mxu0 0
      %3577 = vmatprep.subr.bf16.mxu0 0
      %3578 = vmatpush1.bf16.msra.mxu0 0
      %3579 = vmatprep.subr.bf16.mxu0 0
      %3580 = vmatpush1.bf16.msra.mxu0 0
      %3581 = vmatprep.subr.bf16.mxu0 0
      %3582 = vmatpush1.bf16.msra.mxu0 0
      %3583 = vmatprep.subr.bf16.mxu0 0
      %3584 = vmatpush1.bf16.msra.mxu0 0
      %3585 = vmatprep.subr.bf16.mxu0 %v3167
      %3586 = vmatpush1.bf16.msra.mxu0 %v3164
      %3587 = vmatprep.subr.bf16.mxu0 %v3055
      %3588 = vmatpush1.bf16.msra.mxu0 %v3054
      %3589 = vmatprep.subr.bf16.mxu0 0
      %3590 = vmatpush2.bf16.msra.mxu0 0
      %3591 = vmatprep.subr.bf16.mxu0 0
      %3592 = vmatpush2.bf16.msra.mxu0 0
      %3593 = vmatprep.subr.bf16.mxu0 0
      %3594 = vmatpush2.bf16.msra.mxu0 0
      %3595 = vmatprep.subr.bf16.mxu0 0
      %3596 = vmatpush2.bf16.msra.mxu0 0
      %3597 = vmatprep.subr.bf16.mxu0 0
      %3598 = vmatpush2.bf16.msra.mxu0 0
      %3599 = vmatprep.subr.bf16.mxu0 0
      %3600 = vmatpush2.bf16.msra.mxu0 0
      %3601 = vmatprep.subr.bf16.mxu0 0
      %3602 = vmatpush2.bf16.msra.mxu0 0
      %3603 = vmatprep.subr.bf16.mxu0 0
      %3604 = vmatpush2.bf16.msra.mxu0 0
      %3605 = vmatprep.mubr.bf16.mxu0 0
      %3606 = vmatmul.mubr.bf16.gmra.mxu0 %v3121
      %v3607 = vpop.f32.mrf.mxu0
      %v3608 = vadd.f32 0.0, %v3607
      %v3609 = vpop.f32.mrf.mxu0
      %v3610 = vadd.f32 0.0, %v3609
      %v3611 = vpop.f32.mrf.mxu0
      %v3612 = vadd.f32 0.0, %v3611
      %v3613 = vpop.f32.mrf.mxu0
      %v3614 = vadd.f32 0.0, %v3613
      %3615 = vmatprep.mubr.bf16.mxu0 0
      %3616 = vmatmul.mubr.bf16.gmra.mxu0 %v3124
      %v3617 = vpop.f32.mrf.mxu0
      %v3618 = vadd.f32 0.0, %v3617
      %v3619 = vpop.f32.mrf.mxu0
      %v3620 = vadd.f32 0.0, %v3619
      %v3621 = vpop.f32.mrf.mxu0
      %v3622 = vadd.f32 0.0, %v3621
      %v3623 = vpop.f32.mrf.mxu0
      %v3624 = vadd.f32 0.0, %v3623
      %3625 = vmatprep.mubr.bf16.mxu0 0
      %3626 = vmatmul.mubr.bf16.gmra.mxu0 %v3127
      %v3627 = vpop.f32.mrf.mxu0
      %v3628 = vadd.f32 0.0, %v3627
      %v3629 = vpop.f32.mrf.mxu0
      %v3630 = vadd.f32 0.0, %v3629
      %v3631 = vpop.f32.mrf.mxu0
      %v3632 = vadd.f32 0.0, %v3631
      %v3633 = vpop.f32.mrf.mxu0
      %v3634 = vadd.f32 0.0, %v3633
      %3635 = vmatprep.mubr.bf16.mxu0 0
      %3636 = vmatmul.mubr.bf16.gmra.mxu0 %v3130
      %v3637 = vpop.f32.mrf.mxu0
      %v3638 = vadd.f32 0.0, %v3637
      %v3639 = vpop.f32.mrf.mxu0
      %v3640 = vadd.f32 0.0, %v3639
      %v3641 = vpop.f32.mrf.mxu0
      %v3642 = vadd.f32 0.0, %v3641
      %v3643 = vpop.f32.mrf.mxu0
      %v3644 = vadd.f32 0.0, %v3643
      %3645 = vdwg.mxu0
      %3646 = vmatprep.subr.bf16.mxu0 0
      %3647 = vmatpush1.bf16.msra.mxu0 0
      %3648 = vmatprep.subr.bf16.mxu0 0
      %3649 = vmatpush1.bf16.msra.mxu0 0
      %3650 = vmatprep.subr.bf16.mxu0 0
      %3651 = vmatpush1.bf16.msra.mxu0 0
      %3652 = vmatprep.subr.bf16.mxu0 0
      %3653 = vmatpush1.bf16.msra.mxu0 0
      %3654 = vmatprep.subr.bf16.mxu0 0
      %3655 = vmatpush1.bf16.msra.mxu0 0
      %3656 = vmatprep.subr.bf16.mxu0 0
      %3657 = vmatpush1.bf16.msra.mxu0 0
      %3658 = vmatprep.subr.bf16.mxu0 %v3173
      %3659 = vmatpush1.bf16.msra.mxu0 %v3170
      %3660 = vmatprep.subr.bf16.mxu0 %v3057
      %3661 = vmatpush1.bf16.msra.mxu0 %v3056
      %3662 = vmatprep.subr.bf16.mxu0 0
      %3663 = vmatpush2.bf16.msra.mxu0 0
      %3664 = vmatprep.subr.bf16.mxu0 0
      %3665 = vmatpush2.bf16.msra.mxu0 0
      %3666 = vmatprep.subr.bf16.mxu0 0
      %3667 = vmatpush2.bf16.msra.mxu0 0
      %3668 = vmatprep.subr.bf16.mxu0 0
      %3669 = vmatpush2.bf16.msra.mxu0 0
      %3670 = vmatprep.subr.bf16.mxu0 0
      %3671 = vmatpush2.bf16.msra.mxu0 0
      %3672 = vmatprep.subr.bf16.mxu0 0
      %3673 = vmatpush2.bf16.msra.mxu0 0
      %3674 = vmatprep.subr.bf16.mxu0 0
      %3675 = vmatpush2.bf16.msra.mxu0 0
      %3676 = vmatprep.subr.bf16.mxu0 0
      %3677 = vmatpush2.bf16.msra.mxu0 0
      %3678 = vmatprep.mubr.bf16.mxu0 0
      %3679 = vmatmul.mubr.bf16.gmra.mxu0 %v3121
      %v3680 = vpop.f32.mrf.mxu0
      %v3681 = vadd.f32 0.0, %v3680
      %v3682 = vpop.f32.mrf.mxu0
      %v3683 = vadd.f32 0.0, %v3682
      %v3684 = vpop.f32.mrf.mxu0
      %v3685 = vadd.f32 0.0, %v3684
      %v3686 = vpop.f32.mrf.mxu0
      %v3687 = vadd.f32 0.0, %v3686
      %3688 = vmatprep.mubr.bf16.mxu0 0
      %3689 = vmatmul.mubr.bf16.gmra.mxu0 %v3124
      %v3690 = vpop.f32.mrf.mxu0
      %v3691 = vadd.f32 0.0, %v3690
      %v3692 = vpop.f32.mrf.mxu0
      %v3693 = vadd.f32 0.0, %v3692
      %v3694 = vpop.f32.mrf.mxu0
      %v3695 = vadd.f32 0.0, %v3694
      %v3696 = vpop.f32.mrf.mxu0
      %v3697 = vadd.f32 0.0, %v3696
      %3698 = vmatprep.mubr.bf16.mxu0 0
      %3699 = vmatmul.mubr.bf16.gmra.mxu0 %v3127
      %v3700 = vpop.f32.mrf.mxu0
      %v3701 = vadd.f32 0.0, %v3700
      %v3702 = vpop.f32.mrf.mxu0
      %v3703 = vadd.f32 0.0, %v3702
      %v3704 = vpop.f32.mrf.mxu0
      %v3705 = vadd.f32 0.0, %v3704
      %v3706 = vpop.f32.mrf.mxu0
      %v3707 = vadd.f32 0.0, %v3706
      %3708 = vmatprep.mubr.bf16.mxu0 0
      %3709 = vmatmul.mubr.bf16.gmra.mxu0 %v3130
      %v3710 = vpop.f32.mrf.mxu0
      %v3711 = vadd.f32 0.0, %v3710
      %v3712 = vpop.f32.mrf.mxu0
      %v3713 = vadd.f32 0.0, %v3712
      %v3714 = vpop.f32.mrf.mxu0
      %v3715 = vadd.f32 0.0, %v3714
      %v3716 = vpop.f32.mrf.mxu0
      %v3717 = vadd.f32 0.0, %v3716
      %3718 = vdwg.mxu0
      %3719 = vmatprep.subr.bf16.mxu0 0
      %3720 = vmatpush1.bf16.msra.mxu0 0
      %3721 = vmatprep.subr.bf16.mxu0 0
      %3722 = vmatpush1.bf16.msra.mxu0 0
      %3723 = vmatprep.subr.bf16.mxu0 0
      %3724 = vmatpush1.bf16.msra.mxu0 0
      %3725 = vmatprep.subr.bf16.mxu0 0
      %3726 = vmatpush1.bf16.msra.mxu0 0
      %3727 = vmatprep.subr.bf16.mxu0 0
      %3728 = vmatpush1.bf16.msra.mxu0 0
      %3729 = vmatprep.subr.bf16.mxu0 0
      %3730 = vmatpush1.bf16.msra.mxu0 0
      %3731 = vmatprep.subr.bf16.mxu0 %v3179
      %3732 = vmatpush1.bf16.msra.mxu0 %v3176
      %3733 = vmatprep.subr.bf16.mxu0 %v3059
      %3734 = vmatpush1.bf16.msra.mxu0 %v3058
      %3735 = vmatprep.subr.bf16.mxu0 0
      %3736 = vmatpush2.bf16.msra.mxu0 0
      %3737 = vmatprep.subr.bf16.mxu0 0
      %3738 = vmatpush2.bf16.msra.mxu0 0
      %3739 = vmatprep.subr.bf16.mxu0 0
      %3740 = vmatpush2.bf16.msra.mxu0 0
      %3741 = vmatprep.subr.bf16.mxu0 0
      %3742 = vmatpush2.bf16.msra.mxu0 0
      %3743 = vmatprep.subr.bf16.mxu0 0
      %3744 = vmatpush2.bf16.msra.mxu0 0
      %3745 = vmatprep.subr.bf16.mxu0 0
      %3746 = vmatpush2.bf16.msra.mxu0 0
      %3747 = vmatprep.subr.bf16.mxu0 0
      %3748 = vmatpush2.bf16.msra.mxu0 0
      %3749 = vmatprep.subr.bf16.mxu0 0
      %3750 = vmatpush2.bf16.msra.mxu0 0
      %3751 = vmatprep.mubr.bf16.mxu0 0
      %3752 = vmatmul.mubr.bf16.gmra.mxu0 %v3121
      %v3753 = vpop.f32.mrf.mxu0
      %v3754 = vadd.f32 0.0, %v3753
      %v3755 = vpop.f32.mrf.mxu0
      %v3756 = vadd.f32 0.0, %v3755
      %v3757 = vpop.f32.mrf.mxu0
      %v3758 = vadd.f32 0.0, %v3757
      %v3759 = vpop.f32.mrf.mxu0
      %v3760 = vadd.f32 0.0, %v3759
      %3761 = vmatprep.mubr.bf16.mxu0 0
      %3762 = vmatmul.mubr.bf16.gmra.mxu0 %v3124
      %v3763 = vpop.f32.mrf.mxu0
      %v3764 = vadd.f32 0.0, %v3763
      %v3765 = vpop.f32.mrf.mxu0
      %v3766 = vadd.f32 0.0, %v3765
      %v3767 = vpop.f32.mrf.mxu0
      %v3768 = vadd.f32 0.0, %v3767
      %v3769 = vpop.f32.mrf.mxu0
      %v3770 = vadd.f32 0.0, %v3769
      %3771 = vmatprep.mubr.bf16.mxu0 0
      %3772 = vmatmul.mubr.bf16.gmra.mxu0 %v3127
      %v3773 = vpop.f32.mrf.mxu0
      %v3774 = vadd.f32 0.0, %v3773
      %v3775 = vpop.f32.mrf.mxu0
      %v3776 = vadd.f32 0.0, %v3775
      %v3777 = vpop.f32.mrf.mxu0
      %v3778 = vadd.f32 0.0, %v3777
      %v3779 = vpop.f32.mrf.mxu0
      %v3780 = vadd.f32 0.0, %v3779
      %3781 = vmatprep.mubr.bf16.mxu0 0
      %3782 = vmatmul.mubr.bf16.gmra.mxu0 %v3130
      %v3783 = vpop.f32.mrf.mxu0
      %v3784 = vadd.f32 0.0, %v3783
      %v3785 = vpop.f32.mrf.mxu0
      %v3786 = vadd.f32 0.0, %v3785
      %v3787 = vpop.f32.mrf.mxu0
      %v3788 = vadd.f32 0.0, %v3787
      %v3789 = vpop.f32.mrf.mxu0
      %v3790 = vadd.f32 0.0, %v3789
      %3791 = vdwg.mxu0
      %3792 = vmatprep.subr.bf16.mxu0 0
      %3793 = vmatpush1.bf16.msra.mxu0 0
      %3794 = vmatprep.subr.bf16.mxu0 0
      %3795 = vmatpush1.bf16.msra.mxu0 0
      %3796 = vmatprep.subr.bf16.mxu0 0
      %3797 = vmatpush1.bf16.msra.mxu0 0
      %3798 = vmatprep.subr.bf16.mxu0 0
      %3799 = vmatpush1.bf16.msra.mxu0 0
      %3800 = vmatprep.subr.bf16.mxu0 0
      %3801 = vmatpush1.bf16.msra.mxu0 0
      %3802 = vmatprep.subr.bf16.mxu0 0
      %3803 = vmatpush1.bf16.msra.mxu0 0
      %3804 = vmatprep.subr.bf16.mxu0 %v3185
      %3805 = vmatpush1.bf16.msra.mxu0 %v3182
      %3806 = vmatprep.subr.bf16.mxu0 %v3061
      %3807 = vmatpush1.bf16.msra.mxu0 %v3060
      %3808 = vmatprep.subr.bf16.mxu0 0
      %3809 = vmatpush2.bf16.msra.mxu0 0
      %3810 = vmatprep.subr.bf16.mxu0 0
      %3811 = vmatpush2.bf16.msra.mxu0 0
      %3812 = vmatprep.subr.bf16.mxu0 0
      %3813 = vmatpush2.bf16.msra.mxu0 0
      %3814 = vmatprep.subr.bf16.mxu0 0
      %3815 = vmatpush2.bf16.msra.mxu0 0
      %3816 = vmatprep.subr.bf16.mxu0 0
      %3817 = vmatpush2.bf16.msra.mxu0 0
      %3818 = vmatprep.subr.bf16.mxu0 0
      %3819 = vmatpush2.bf16.msra.mxu0 0
      %3820 = vmatprep.subr.bf16.mxu0 0
      %3821 = vmatpush2.bf16.msra.mxu0 0
      %3822 = vmatprep.subr.bf16.mxu0 0
      %3823 = vmatpush2.bf16.msra.mxu0 0
      %3824 = vmatprep.mubr.bf16.mxu0 0
      %3825 = vmatmul.mubr.bf16.gmra.mxu0 %v3121
      %v3826 = vpop.f32.mrf.mxu0
      %v3827 = vadd.f32 0.0, %v3826
      %v3828 = vpop.f32.mrf.mxu0
      %v3829 = vadd.f32 0.0, %v3828
      %v3830 = vpop.f32.mrf.mxu0
      %v3831 = vadd.f32 0.0, %v3830
      %v3832 = vpop.f32.mrf.mxu0
      %v3833 = vadd.f32 0.0, %v3832
      %3834 = vmatprep.mubr.bf16.mxu0 0
      %3835 = vmatmul.mubr.bf16.gmra.mxu0 %v3124
      %v3836 = vpop.f32.mrf.mxu0
      %v3837 = vadd.f32 0.0, %v3836
      %v3838 = vpop.f32.mrf.mxu0
      %v3839 = vadd.f32 0.0, %v3838
      %v3840 = vpop.f32.mrf.mxu0
      %v3841 = vadd.f32 0.0, %v3840
      %v3842 = vpop.f32.mrf.mxu0
      %v3843 = vadd.f32 0.0, %v3842
      %3844 = vmatprep.mubr.bf16.mxu0 0
      %3845 = vmatmul.mubr.bf16.gmra.mxu0 %v3127
      %v3846 = vpop.f32.mrf.mxu0
      %v3847 = vadd.f32 0.0, %v3846
      %v3848 = vpop.f32.mrf.mxu0
      %v3849 = vadd.f32 0.0, %v3848
      %v3850 = vpop.f32.mrf.mxu0
      %v3851 = vadd.f32 0.0, %v3850
      %v3852 = vpop.f32.mrf.mxu0
      %v3853 = vadd.f32 0.0, %v3852
      %3854 = vmatprep.mubr.bf16.mxu0 0
      %3855 = vmatmul.mubr.bf16.gmra.mxu0 %v3130
      %v3856 = vpop.f32.mrf.mxu0
      %v3857 = vadd.f32 0.0, %v3856
      %v3858 = vpop.f32.mrf.mxu0
      %v3859 = vadd.f32 0.0, %v3858
      %v3860 = vpop.f32.mrf.mxu0
      %v3861 = vadd.f32 0.0, %v3860
      %v3862 = vpop.f32.mrf.mxu0
      %v3863 = vadd.f32 0.0, %v3862
      %3864 = vdwg.mxu0
      %3865 = vmatprep.subr.bf16.mxu0 0
      %3866 = vmatpush1.bf16.msra.mxu0 0
      %3867 = vmatprep.subr.bf16.mxu0 0
      %3868 = vmatpush1.bf16.msra.mxu0 0
      %3869 = vmatprep.subr.bf16.mxu0 0
      %3870 = vmatpush1.bf16.msra.mxu0 0
      %3871 = vmatprep.subr.bf16.mxu0 0
      %3872 = vmatpush1.bf16.msra.mxu0 0
      %3873 = vmatprep.subr.bf16.mxu0 0
      %3874 = vmatpush1.bf16.msra.mxu0 0
      %3875 = vmatprep.subr.bf16.mxu0 0
      %3876 = vmatpush1.bf16.msra.mxu0 0
      %3877 = vmatprep.subr.bf16.mxu0 %v3191
      %3878 = vmatpush1.bf16.msra.mxu0 %v3188
      %3879 = vmatprep.subr.bf16.mxu0 %v3063
      %3880 = vmatpush1.bf16.msra.mxu0 %v3062
      %3881 = vmatprep.subr.bf16.mxu0 0
      %3882 = vmatpush2.bf16.msra.mxu0 0
      %3883 = vmatprep.subr.bf16.mxu0 0
      %3884 = vmatpush2.bf16.msra.mxu0 0
      %3885 = vmatprep.subr.bf16.mxu0 0
      %3886 = vmatpush2.bf16.msra.mxu0 0
      %3887 = vmatprep.subr.bf16.mxu0 0
      %3888 = vmatpush2.bf16.msra.mxu0 0
      %3889 = vmatprep.subr.bf16.mxu0 0
      %3890 = vmatpush2.bf16.msra.mxu0 0
      %3891 = vmatprep.subr.bf16.mxu0 0
      %3892 = vmatpush2.bf16.msra.mxu0 0
      %3893 = vmatprep.subr.bf16.mxu0 0
      %3894 = vmatpush2.bf16.msra.mxu0 0
      %3895 = vmatprep.subr.bf16.mxu0 0
      %3896 = vmatpush2.bf16.msra.mxu0 0
      %3897 = vmatprep.mubr.bf16.mxu0 0
      %3898 = vmatmul.mubr.bf16.gmra.mxu0 %v3121
      %v3899 = vpop.f32.mrf.mxu0
      %v3900 = vadd.f32 0.0, %v3899
      %v3901 = vpop.f32.mrf.mxu0
      %v3902 = vadd.f32 0.0, %v3901
      %v3903 = vpop.f32.mrf.mxu0
      %v3904 = vadd.f32 0.0, %v3903
      %v3905 = vpop.f32.mrf.mxu0
      %v3906 = vadd.f32 0.0, %v3905
      %3907 = vmatprep.mubr.bf16.mxu0 0
      %3908 = vmatmul.mubr.bf16.gmra.mxu0 %v3124
      %v3909 = vpop.f32.mrf.mxu0
      %v3910 = vadd.f32 0.0, %v3909
      %v3911 = vpop.f32.mrf.mxu0
      %v3912 = vadd.f32 0.0, %v3911
      %v3913 = vpop.f32.mrf.mxu0
      %v3914 = vadd.f32 0.0, %v3913
      %v3915 = vpop.f32.mrf.mxu0
      %v3916 = vadd.f32 0.0, %v3915
      %3917 = vmatprep.mubr.bf16.mxu0 0
      %3918 = vmatmul.mubr.bf16.gmra.mxu0 %v3127
      %v3919 = vpop.f32.mrf.mxu0
      %v3920 = vadd.f32 0.0, %v3919
      %v3921 = vpop.f32.mrf.mxu0
      %v3922 = vadd.f32 0.0, %v3921
      %v3923 = vpop.f32.mrf.mxu0
      %v3924 = vadd.f32 0.0, %v3923
      %v3925 = vpop.f32.mrf.mxu0
      %v3926 = vadd.f32 0.0, %v3925
      %3927 = vmatprep.mubr.bf16.mxu0 0
      %3928 = vmatmul.mubr.bf16.gmra.mxu0 %v3130
      %v3929 = vpop.f32.mrf.mxu0
      %v3930 = vadd.f32 0.0, %v3929
      %v3931 = vpop.f32.mrf.mxu0
      %v3932 = vadd.f32 0.0, %v3931
      %v3933 = vpop.f32.mrf.mxu0
      %v3934 = vadd.f32 0.0, %v3933
      %v3935 = vpop.f32.mrf.mxu0
      %v3936 = vadd.f32 0.0, %v3935
      %3937 = vdwg.mxu0
      %3938 = vmatprep.subr.bf16.mxu0 0
      %3939 = vmatpush1.bf16.msra.mxu0 0
      %3940 = vmatprep.subr.bf16.mxu0 0
      %3941 = vmatpush1.bf16.msra.mxu0 0
      %3942 = vmatprep.subr.bf16.mxu0 0
      %3943 = vmatpush1.bf16.msra.mxu0 0
      %3944 = vmatprep.subr.bf16.mxu0 0
      %3945 = vmatpush1.bf16.msra.mxu0 0
      %3946 = vmatprep.subr.bf16.mxu0 0
      %3947 = vmatpush1.bf16.msra.mxu0 0
      %3948 = vmatprep.subr.bf16.mxu0 0
      %3949 = vmatpush1.bf16.msra.mxu0 0
      %3950 = vmatprep.subr.bf16.mxu0 %v3197
      %3951 = vmatpush1.bf16.msra.mxu0 %v3194
      %3952 = vmatprep.subr.bf16.mxu0 %v3065
      %3953 = vmatpush1.bf16.msra.mxu0 %v3064
      %3954 = vmatprep.subr.bf16.mxu0 0
      %3955 = vmatpush2.bf16.msra.mxu0 0
      %3956 = vmatprep.subr.bf16.mxu0 0
      %3957 = vmatpush2.bf16.msra.mxu0 0
      %3958 = vmatprep.subr.bf16.mxu0 0
      %3959 = vmatpush2.bf16.msra.mxu0 0
      %3960 = vmatprep.subr.bf16.mxu0 0
      %3961 = vmatpush2.bf16.msra.mxu0 0
      %3962 = vmatprep.subr.bf16.mxu0 0
      %3963 = vmatpush2.bf16.msra.mxu0 0
      %3964 = vmatprep.subr.bf16.mxu0 0
      %3965 = vmatpush2.bf16.msra.mxu0 0
      %3966 = vmatprep.subr.bf16.mxu0 0
      %3967 = vmatpush2.bf16.msra.mxu0 0
      %3968 = vmatprep.subr.bf16.mxu0 0
      %3969 = vmatpush2.bf16.msra.mxu0 0
      %3970 = vmatprep.mubr.bf16.mxu0 0
      %3971 = vmatmul.mubr.bf16.gmra.mxu0 %v3121
      %v3972 = vpop.f32.mrf.mxu0
      %v3973 = vadd.f32 0.0, %v3972
      %v3974 = vpop.f32.mrf.mxu0
      %v3975 = vadd.f32 0.0, %v3974
      %v3976 = vpop.f32.mrf.mxu0
      %v3977 = vadd.f32 0.0, %v3976
      %v3978 = vpop.f32.mrf.mxu0
      %v3979 = vadd.f32 0.0, %v3978
      %3980 = vmatprep.mubr.bf16.mxu0 0
      %3981 = vmatmul.mubr.bf16.gmra.mxu0 %v3124
      %v3982 = vpop.f32.mrf.mxu0
      %v3983 = vadd.f32 0.0, %v3982
      %v3984 = vpop.f32.mrf.mxu0
      %v3985 = vadd.f32 0.0, %v3984
      %v3986 = vpop.f32.mrf.mxu0
      %v3987 = vadd.f32 0.0, %v3986
      %v3988 = vpop.f32.mrf.mxu0
      %v3989 = vadd.f32 0.0, %v3988
      %3990 = vmatprep.mubr.bf16.mxu0 0
      %3991 = vmatmul.mubr.bf16.gmra.mxu0 %v3127
      %v3992 = vpop.f32.mrf.mxu0
      %v3993 = vadd.f32 0.0, %v3992
      %v3994 = vpop.f32.mrf.mxu0
      %v3995 = vadd.f32 0.0, %v3994
      %v3996 = vpop.f32.mrf.mxu0
      %v3997 = vadd.f32 0.0, %v3996
      %v3998 = vpop.f32.mrf.mxu0
      %v3999 = vadd.f32 0.0, %v3998
      %4000 = vmatprep.mubr.bf16.mxu0 0
      %4001 = vmatmul.mubr.bf16.gmra.mxu0 %v3130
      %v4002 = vpop.f32.mrf.mxu0
      %v4003 = vadd.f32 0.0, %v4002
      %v4004 = vpop.f32.mrf.mxu0
      %v4005 = vadd.f32 0.0, %v4004
      %v4006 = vpop.f32.mrf.mxu0
      %v4007 = vadd.f32 0.0, %v4006
      %v4008 = vpop.f32.mrf.mxu0
      %v4009 = vadd.f32 0.0, %v4008
      %4010 = vdwg.mxu0
      %4011 = vmatprep.subr.bf16.mxu0 0
      %4012 = vmatpush1.bf16.msra.mxu0 0
      %4013 = vmatprep.subr.bf16.mxu0 0
      %4014 = vmatpush1.bf16.msra.mxu0 0
      %4015 = vmatprep.subr.bf16.mxu0 0
      %4016 = vmatpush1.bf16.msra.mxu0 0
      %4017 = vmatprep.subr.bf16.mxu0 0
      %4018 = vmatpush1.bf16.msra.mxu0 0
      %4019 = vmatprep.subr.bf16.mxu0 0
      %4020 = vmatpush1.bf16.msra.mxu0 0
      %4021 = vmatprep.subr.bf16.mxu0 0
      %4022 = vmatpush1.bf16.msra.mxu0 0
      %4023 = vmatprep.subr.bf16.mxu0 %v3203
      %4024 = vmatpush1.bf16.msra.mxu0 %v3200
      %4025 = vmatprep.subr.bf16.mxu0 %v3067
      %4026 = vmatpush1.bf16.msra.mxu0 %v3066
      %4027 = vmatprep.subr.bf16.mxu0 0
      %4028 = vmatpush2.bf16.msra.mxu0 0
      %4029 = vmatprep.subr.bf16.mxu0 0
      %4030 = vmatpush2.bf16.msra.mxu0 0
      %4031 = vmatprep.subr.bf16.mxu0 0
      %4032 = vmatpush2.bf16.msra.mxu0 0
      %4033 = vmatprep.subr.bf16.mxu0 0
      %4034 = vmatpush2.bf16.msra.mxu0 0
      %4035 = vmatprep.subr.bf16.mxu0 0
      %4036 = vmatpush2.bf16.msra.mxu0 0
      %4037 = vmatprep.subr.bf16.mxu0 0
      %4038 = vmatpush2.bf16.msra.mxu0 0
      %4039 = vmatprep.subr.bf16.mxu0 0
      %4040 = vmatpush2.bf16.msra.mxu0 0
      %4041 = vmatprep.subr.bf16.mxu0 0
      %4042 = vmatpush2.bf16.msra.mxu0 0
      %4043 = vmatprep.mubr.bf16.mxu0 0
      %4044 = vmatmul.mubr.bf16.gmra.mxu0 %v3121
      %v4045 = vpop.f32.mrf.mxu0
      %v4046 = vadd.f32 0.0, %v4045
      %v4047 = vpop.f32.mrf.mxu0
      %v4048 = vadd.f32 0.0, %v4047
      %v4049 = vpop.f32.mrf.mxu0
      %v4050 = vadd.f32 0.0, %v4049
      %v4051 = vpop.f32.mrf.mxu0
      %v4052 = vadd.f32 0.0, %v4051
      %4053 = vmatprep.mubr.bf16.mxu0 0
      %4054 = vmatmul.mubr.bf16.gmra.mxu0 %v3124
      %v4055 = vpop.f32.mrf.mxu0
      %v4056 = vadd.f32 0.0, %v4055
      %v4057 = vpop.f32.mrf.mxu0
      %v4058 = vadd.f32 0.0, %v4057
      %v4059 = vpop.f32.mrf.mxu0
      %v4060 = vadd.f32 0.0, %v4059
      %v4061 = vpop.f32.mrf.mxu0
      %v4062 = vadd.f32 0.0, %v4061
      %4063 = vmatprep.mubr.bf16.mxu0 0
      %4064 = vmatmul.mubr.bf16.gmra.mxu0 %v3127
      %v4065 = vpop.f32.mrf.mxu0
      %v4066 = vadd.f32 0.0, %v4065
      %v4067 = vpop.f32.mrf.mxu0
      %v4068 = vadd.f32 0.0, %v4067
      %v4069 = vpop.f32.mrf.mxu0
      %v4070 = vadd.f32 0.0, %v4069
      %v4071 = vpop.f32.mrf.mxu0
      %v4072 = vadd.f32 0.0, %v4071
      %4073 = vmatprep.mubr.bf16.mxu0 0
      %4074 = vmatmul.mubr.bf16.gmra.mxu0 %v3130
      %v4075 = vpop.f32.mrf.mxu0
      %v4076 = vadd.f32 0.0, %v4075
      %v4077 = vpop.f32.mrf.mxu0
      %v4078 = vadd.f32 0.0, %v4077
      %v4079 = vpop.f32.mrf.mxu0
      %v4080 = vadd.f32 0.0, %v4079
      %v4081 = vpop.f32.mrf.mxu0
      %v4082 = vadd.f32 0.0, %v4081
      %4083 = vdwg.mxu0
      %4084 = vmatprep.subr.bf16.mxu0 0
      %4085 = vmatpush1.bf16.msra.mxu0 0
      %4086 = vmatprep.subr.bf16.mxu0 0
      %4087 = vmatpush1.bf16.msra.mxu0 0
      %4088 = vmatprep.subr.bf16.mxu0 0
      %4089 = vmatpush1.bf16.msra.mxu0 0
      %4090 = vmatprep.subr.bf16.mxu0 0
      %4091 = vmatpush1.bf16.msra.mxu0 0
      %4092 = vmatprep.subr.bf16.mxu0 0
      %4093 = vmatpush1.bf16.msra.mxu0 0
      %4094 = vmatprep.subr.bf16.mxu0 0
      %4095 = vmatpush1.bf16.msra.mxu0 0
      %4096 = vmatprep.subr.bf16.mxu0 0
      %4097 = vmatpush1.bf16.msra.mxu0 %v3206
      %4098 = vmatprep.subr.bf16.mxu0 0
      %4099 = vmatpush1.bf16.msra.mxu0 %v3068
      %4100 = vmatprep.subr.bf16.mxu0 0
      %4101 = vmatpush2.bf16.msra.mxu0 0
      %4102 = vmatprep.subr.bf16.mxu0 0
      %4103 = vmatpush2.bf16.msra.mxu0 0
      %4104 = vmatprep.subr.bf16.mxu0 0
      %4105 = vmatpush2.bf16.msra.mxu0 0
      %4106 = vmatprep.subr.bf16.mxu0 0
      %4107 = vmatpush2.bf16.msra.mxu0 0
      %4108 = vmatprep.subr.bf16.mxu0 0
      %4109 = vmatpush2.bf16.msra.mxu0 0
      %4110 = vmatprep.subr.bf16.mxu0 0
      %4111 = vmatpush2.bf16.msra.mxu0 0
      %4112 = vmatprep.subr.bf16.mxu0 0
      %4113 = vmatpush2.bf16.msra.mxu0 0
      %4114 = vmatprep.subr.bf16.mxu0 0
      %4115 = vmatpush2.bf16.msra.mxu0 0
      %4116 = vmatprep.mubr.bf16.mxu0 0
      %4117 = vmatmul.mubr.bf16.gmra.mxu0 %v3121
      %v4118 = vpop.f32.mrf.mxu0
      %v4119 = vadd.f32 0.0, %v4118
      %v4120 = vpop.f32.mrf.mxu0
      %v4121 = vpop.f32.mrf.mxu0
      %v4122 = vadd.f32 0.0, %v4121
      %v4123 = vpop.f32.mrf.mxu0
      %4124 = vmatprep.mubr.bf16.mxu0 0
      %4125 = vmatmul.mubr.bf16.gmra.mxu0 %v3124
      %v4126 = vpop.f32.mrf.mxu0
      %v4127 = vadd.f32 0.0, %v4126
      %v4128 = vpop.f32.mrf.mxu0
      %v4129 = vpop.f32.mrf.mxu0
      %v4130 = vadd.f32 0.0, %v4129
      %v4131 = vpop.f32.mrf.mxu0
      %4132 = vmatprep.mubr.bf16.mxu0 0
      %4133 = vmatmul.mubr.bf16.gmra.mxu0 %v3127
      %v4134 = vpop.f32.mrf.mxu0
      %v4135 = vadd.f32 0.0, %v4134
      %v4136 = vpop.f32.mrf.mxu0
      %v4137 = vpop.f32.mrf.mxu0
      %v4138 = vadd.f32 0.0, %v4137
      %v4139 = vpop.f32.mrf.mxu0
      %4140 = vmatprep.mubr.bf16.mxu0 0
      %4141 = vmatmul.mubr.bf16.gmra.mxu0 %v3130
      %v4142 = vpop.f32.mrf.mxu0
      %v4143 = vadd.f32 0.0, %v4142
      %v4144 = vpop.f32.mrf.mxu0
      %v4145 = vpop.f32.mrf.mxu0
      %v4146 = vadd.f32 0.0, %v4145
      %v4147 = vpop.f32.mrf.mxu0
      %4148 = vdwg.mxu0
      %4149 = vst [vmem:[%s201] sm:$0xff] %v3243
      %4150 = vst [vmem:[%s201 + $0x8] sm:$0xff] %v3245
      %4151 = vst [vmem:[%s201 + $0x10] sm:$0xff] %v3316
      %4152 = vst [vmem:[%s201 + $0x18] sm:$0xff] %v3318
      %4153 = vst [vmem:[%s201 + $0x20] sm:$0xff] %v3389
      %4154 = vst [vmem:[%s201 + $0x28] sm:$0xff] %v3391
      %4155 = vst [vmem:[%s201 + $0x30] sm:$0xff] %v3462
      %4156 = vst [vmem:[%s201 + $0x38] sm:$0xff] %v3464
      %4157 = vst [vmem:[%s201 + $0x40] sm:$0xff] %v3535
      %4158 = vst [vmem:[%s201 + $0x48] sm:$0xff] %v3537
      %4159 = vst [vmem:[%s201 + $0x50] sm:$0xff] %v3608
      %4160 = vst [vmem:[%s201 + $0x58] sm:$0xff] %v3610
      %4161 = vst [vmem:[%s201 + $0x60] sm:$0xff] %v3681
      %4162 = vst [vmem:[%s201 + $0x68] sm:$0xff] %v3683
      %4163 = vst [vmem:[%s201 + $0x70] sm:$0xff] %v3754
      %4164 = vst [vmem:[%s201 + $0x78] sm:$0xff] %v3756
      %4165 = vst [vmem:[%s201 + $0x80] sm:$0xff] %v3827
      %4166 = vst [vmem:[%s201 + $0x88] sm:$0xff] %v3829
      %4167 = vst [vmem:[%s201 + $0x90] sm:$0xff] %v3900
      %4168 = vst [vmem:[%s201 + $0x98] sm:$0xff] %v3902
      %4169 = vst [vmem:[%s201 + $0xa0] sm:$0xff] %v3973
      %4170 = vst [vmem:[%s201 + $0xa8] sm:$0xff] %v3975
      %4171 = vst [vmem:[%s201 + $0xb0] sm:$0xff] %v4046
      %4172 = vst [vmem:[%s201 + $0xb8] sm:$0xff] %v4048
      %vm4173 = vcmask 523264
      %4174 = vst.msk [vmem:[%s201 + $0xc0] sm:$0xff] %vm4173, %v4119
      %4175 = vst [vmem:[%s201 + $0xc8] sm:$0xff] %v3247
      %4176 = vst [vmem:[%s201 + $0xd0] sm:$0xff] %v3249
      %4177 = vst [vmem:[%s201 + $0xd8] sm:$0xff] %v3320
      %4178 = vst [vmem:[%s201 + $0xe0] sm:$0xff] %v3322
      %4179 = vst [vmem:[%s201 + $0xe8] sm:$0xff] %v3393
      %4180 = vst [vmem:[%s201 + $0xf0] sm:$0xff] %v3395
      %4181 = vst [vmem:[%s201 + $0xf8] sm:$0xff] %v3466
      %4182 = vst [vmem:[%s201 + $0x100] sm:$0xff] %v3468
      %4183 = vst [vmem:[%s201 + $0x108] sm:$0xff] %v3539
      %4184 = vst [vmem:[%s201 + $0x110] sm:$0xff] %v3541
      %4185 = vst [vmem:[%s201 + $0x118] sm:$0xff] %v3612
      %4186 = vst [vmem:[%s201 + $0x120] sm:$0xff] %v3614
      %4187 = vst [vmem:[%s201 + $0x128] sm:$0xff] %v3685
      %4188 = vst [vmem:[%s201 + $0x130] sm:$0xff] %v3687
      %4189 = vst [vmem:[%s201 + $0x138] sm:$0xff] %v3758
      %4190 = vst [vmem:[%s201 + $0x140] sm:$0xff] %v3760
      %4191 = vst [vmem:[%s201 + $0x148] sm:$0xff] %v3831
      %4192 = vst [vmem:[%s201 + $0x150] sm:$0xff] %v3833
      %4193 = vst [vmem:[%s201 + $0x158] sm:$0xff] %v3904
      %4194 = vst [vmem:[%s201 + $0x160] sm:$0xff] %v3906
      %4195 = vst [vmem:[%s201 + $0x168] sm:$0xff] %v3977
      %4196 = vst [vmem:[%s201 + $0x170] sm:$0xff] %v3979
      %4197 = vst [vmem:[%s201 + $0x178] sm:$0xff] %v4050
      %4198 = vst [vmem:[%s201 + $0x180] sm:$0xff] %v4052
      %4199 = vst.msk [vmem:[%s201 + $0x188] sm:$0xff] %vm4173, %v4122
      %4200 = vst [vmem:[%s201 + $0x190] sm:$0xff] %v3253
      %4201 = vst [vmem:[%s201 + $0x198] sm:$0xff] %v3255
      %4202 = vst [vmem:[%s201 + $0x1a0] sm:$0xff] %v3326
      %4203 = vst [vmem:[%s201 + $0x1a8] sm:$0xff] %v3328
      %4204 = vst [vmem:[%s201 + $0x1b0] sm:$0xff] %v3399
      %4205 = vst [vmem:[%s201 + $0x1b8] sm:$0xff] %v3401
      %4206 = vst [vmem:[%s201 + $0x1c0] sm:$0xff] %v3472
      %4207 = vst [vmem:[%s201 + $0x1c8] sm:$0xff] %v3474
      %4208 = vst [vmem:[%s201 + $0x1d0] sm:$0xff] %v3545
      %4209 = vst [vmem:[%s201 + $0x1d8] sm:$0xff] %v3547
      %4210 = vst [vmem:[%s201 + $0x1e0] sm:$0xff] %v3618
      %4211 = vst [vmem:[%s201 + $0x1e8] sm:$0xff] %v3620
      %4212 = vst [vmem:[%s201 + $0x1f0] sm:$0xff] %v3691
      %4213 = vst [vmem:[%s201 + $0x1f8] sm:$0xff] %v3693
      %4214 = vst [vmem:[%s201 + $0x200] sm:$0xff] %v3764
      %4215 = vst [vmem:[%s201 + $0x208] sm:$0xff] %v3766
      %4216 = vst [vmem:[%s201 + $0x210] sm:$0xff] %v3837
      %4217 = vst [vmem:[%s201 + $0x218] sm:$0xff] %v3839
      %4218 = vst [vmem:[%s201 + $0x220] sm:$0xff] %v3910
      %4219 = vst [vmem:[%s201 + $0x228] sm:$0xff] %v3912
      %4220 = vst [vmem:[%s201 + $0x230] sm:$0xff] %v3983
      %4221 = vst [vmem:[%s201 + $0x238] sm:$0xff] %v3985
      %4222 = vst [vmem:[%s201 + $0x240] sm:$0xff] %v4056
      %4223 = vst [vmem:[%s201 + $0x248] sm:$0xff] %v4058
      %4224 = vst.msk [vmem:[%s201 + $0x250] sm:$0xff] %vm4173, %v4127
      %4225 = vst [vmem:[%s201 + $0x258] sm:$0xff] %v3257
      %4226 = vst [vmem:[%s201 + $0x260] sm:$0xff] %v3259
      %4227 = vst [vmem:[%s201 + $0x268] sm:$0xff] %v3330
      %4228 = vst [vmem:[%s201 + $0x270] sm:$0xff] %v3332
      %4229 = vst [vmem:[%s201 + $0x278] sm:$0xff] %v3403
      %4230 = vst [vmem:[%s201 + $0x280] sm:$0xff] %v3405
      %4231 = vst [vmem:[%s201 + $0x288] sm:$0xff] %v3476
      %4232 = vst [vmem:[%s201 + $0x290] sm:$0xff] %v3478
      %4233 = vst [vmem:[%s201 + $0x298] sm:$0xff] %v3549
      %4234 = vst [vmem:[%s201 + $0x2a0] sm:$0xff] %v3551
      %4235 = vst [vmem:[%s201 + $0x2a8] sm:$0xff] %v3622
      %4236 = vst [vmem:[%s201 + $0x2b0] sm:$0xff] %v3624
      %4237 = vst [vmem:[%s201 + $0x2b8] sm:$0xff] %v3695
      %4238 = vst [vmem:[%s201 + $0x2c0] sm:$0xff] %v3697
      %4239 = vst [vmem:[%s201 + $0x2c8] sm:$0xff] %v3768
      %4240 = vst [vmem:[%s201 + $0x2d0] sm:$0xff] %v3770
      %4241 = vst [vmem:[%s201 + $0x2d8] sm:$0xff] %v3841
      %4242 = vst [vmem:[%s201 + $0x2e0] sm:$0xff] %v3843
      %4243 = vst [vmem:[%s201 + $0x2e8] sm:$0xff] %v3914
      %4244 = vst [vmem:[%s201 + $0x2f0] sm:$0xff] %v3916
      %4245 = vst [vmem:[%s201 + $0x2f8] sm:$0xff] %v3987
      %4246 = vst [vmem:[%s201 + $0x300] sm:$0xff] %v3989
      %4247 = vst [vmem:[%s201 + $0x308] sm:$0xff] %v4060
      %4248 = vst [vmem:[%s201 + $0x310] sm:$0xff] %v4062
      %4249 = vst.msk [vmem:[%s201 + $0x318] sm:$0xff] %vm4173, %v4130
      %4250 = vst [vmem:[%s201 + $0x320] sm:$0xff] %v3263
      %4251 = vst [vmem:[%s201 + $0x328] sm:$0xff] %v3265
      %4252 = vst [vmem:[%s201 + $0x330] sm:$0xff] %v3336
      %4253 = vst [vmem:[%s201 + $0x338] sm:$0xff] %v3338
      %4254 = vst [vmem:[%s201 + $0x340] sm:$0xff] %v3409
      %4255 = vst [vmem:[%s201 + $0x348] sm:$0xff] %v3411
      %4256 = vst [vmem:[%s201 + $0x350] sm:$0xff] %v3482
      %4257 = vst [vmem:[%s201 + $0x358] sm:$0xff] %v3484
      %4258 = vst [vmem:[%s201 + $0x360] sm:$0xff] %v3555
      %4259 = vst [vmem:[%s201 + $0x368] sm:$0xff] %v3557
      %4260 = vst [vmem:[%s201 + $0x370] sm:$0xff] %v3628
      %4261 = vst [vmem:[%s201 + $0x378] sm:$0xff] %v3630
      %4262 = vst [vmem:[%s201 + $0x380] sm:$0xff] %v3701
      %4263 = vst [vmem:[%s201 + $0x388] sm:$0xff] %v3703
      %4264 = vst [vmem:[%s201 + $0x390] sm:$0xff] %v3774
      %4265 = vst [vmem:[%s201 + $0x398] sm:$0xff] %v3776
      %4266 = vst [vmem:[%s201 + $0x3a0] sm:$0xff] %v3847
      %4267 = vst [vmem:[%s201 + $0x3a8] sm:$0xff] %v3849
      %4268 = vst [vmem:[%s201 + $0x3b0] sm:$0xff] %v3920
      %4269 = vst [vmem:[%s201 + $0x3b8] sm:$0xff] %v3922
      %4270 = vst [vmem:[%s201 + $0x3c0] sm:$0xff] %v3993
      %4271 = vst [vmem:[%s201 + $0x3c8] sm:$0xff] %v3995
      %4272 = vst [vmem:[%s201 + $0x3d0] sm:$0xff] %v4066
      %4273 = vst [vmem:[%s201 + $0x3d8] sm:$0xff] %v4068
      %4274 = vst.msk [vmem:[%s201 + $0x3e0] sm:$0xff] %vm4173, %v4135
      %4275 = vst [vmem:[%s201 + $0x3e8] sm:$0xff] %v3267
      %4276 = vst [vmem:[%s201 + $0x3f0] sm:$0xff] %v3269
      %4277 = vst [vmem:[%s201 + $0x3f8] sm:$0xff] %v3340
      %4278 = vst [vmem:[%s201 + $0x400] sm:$0xff] %v3342
      %4279 = vst [vmem:[%s201 + $0x408] sm:$0xff] %v3413
      %4280 = vst [vmem:[%s201 + $0x410] sm:$0xff] %v3415
      %4281 = vst [vmem:[%s201 + $0x418] sm:$0xff] %v3486
      %4282 = vst [vmem:[%s201 + $0x420] sm:$0xff] %v3488
      %4283 = vst [vmem:[%s201 + $0x428] sm:$0xff] %v3559
      %4284 = vst [vmem:[%s201 + $0x430] sm:$0xff] %v3561
      %4285 = vst [vmem:[%s201 + $0x438] sm:$0xff] %v3632
      %4286 = vst [vmem:[%s201 + $0x440] sm:$0xff] %v3634
      %4287 = vst [vmem:[%s201 + $0x448] sm:$0xff] %v3705
      %4288 = vst [vmem:[%s201 + $0x450] sm:$0xff] %v3707
      %4289 = vst [vmem:[%s201 + $0x458] sm:$0xff] %v3778
      %4290 = vst [vmem:[%s201 + $0x460] sm:$0xff] %v3780
      %4291 = vst [vmem:[%s201 + $0x468] sm:$0xff] %v3851
      %4292 = vst [vmem:[%s201 + $0x470] sm:$0xff] %v3853
      %4293 = vst [vmem:[%s201 + $0x478] sm:$0xff] %v3924
      %4294 = vst [vmem:[%s201 + $0x480] sm:$0xff] %v3926
      %4295 = vst [vmem:[%s201 + $0x488] sm:$0xff] %v3997
      %4296 = vst [vmem:[%s201 + $0x490] sm:$0xff] %v3999
      %4297 = vst [vmem:[%s201 + $0x498] sm:$0xff] %v4070
      %4298 = vst [vmem:[%s201 + $0x4a0] sm:$0xff] %v4072
      %4299 = vst.msk [vmem:[%s201 + $0x4a8] sm:$0xff] %vm4173, %v4138
      %4300 = vst [vmem:[%s201 + $0x4b0] sm:$0xff] %v3273
      %4301 = vst [vmem:[%s201 + $0x4b8] sm:$0xff] %v3275
      %4302 = vst [vmem:[%s201 + $0x4c0] sm:$0xff] %v3346
      %4303 = vst [vmem:[%s201 + $0x4c8] sm:$0xff] %v3348
      %4304 = vst [vmem:[%s201 + $0x4d0] sm:$0xff] %v3419
      %4305 = vst [vmem:[%s201 + $0x4d8] sm:$0xff] %v3421
      %4306 = vst [vmem:[%s201 + $0x4e0] sm:$0xff] %v3492
      %4307 = vst [vmem:[%s201 + $0x4e8] sm:$0xff] %v3494
      %4308 = vst [vmem:[%s201 + $0x4f0] sm:$0xff] %v3565
      %4309 = vst [vmem:[%s201 + $0x4f8] sm:$0xff] %v3567
      %4310 = vst [vmem:[%s201 + $0x500] sm:$0xff] %v3638
      %4311 = vst [vmem:[%s201 + $0x508] sm:$0xff] %v3640
      %4312 = vst [vmem:[%s201 + $0x510] sm:$0xff] %v3711
      %4313 = vst [vmem:[%s201 + $0x518] sm:$0xff] %v3713
      %4314 = vst [vmem:[%s201 + $0x520] sm:$0xff] %v3784
      %4315 = vst [vmem:[%s201 + $0x528] sm:$0xff] %v3786
      %4316 = vst [vmem:[%s201 + $0x530] sm:$0xff] %v3857
      %4317 = vst [vmem:[%s201 + $0x538] sm:$0xff] %v3859
      %4318 = vst [vmem:[%s201 + $0x540] sm:$0xff] %v3930
      %4319 = vst [vmem:[%s201 + $0x548] sm:$0xff] %v3932
      %4320 = vst [vmem:[%s201 + $0x550] sm:$0xff] %v4003
      %4321 = vst [vmem:[%s201 + $0x558] sm:$0xff] %v4005
      %4322 = vst [vmem:[%s201 + $0x560] sm:$0xff] %v4076
      %4323 = vst [vmem:[%s201 + $0x568] sm:$0xff] %v4078
      %4324 = vst.msk [vmem:[%s201 + $0x570] sm:$0xff] %vm4173, %v4143
      %4325 = vst [vmem:[%s201 + $0x578] sm:$0xff] %v3277
      %4326 = vst [vmem:[%s201 + $0x580] sm:$0xff] %v3279
      %4327 = vst [vmem:[%s201 + $0x588] sm:$0xff] %v3350
      %4328 = vst [vmem:[%s201 + $0x590] sm:$0xff] %v3352
      %4329 = vst [vmem:[%s201 + $0x598] sm:$0xff] %v3423
      %4330 = vst [vmem:[%s201 + $0x5a0] sm:$0xff] %v3425
      %4331 = vst [vmem:[%s201 + $0x5a8] sm:$0xff] %v3496
      %4332 = vst [vmem:[%s201 + $0x5b0] sm:$0xff] %v3498
      %4333 = vst [vmem:[%s201 + $0x5b8] sm:$0xff] %v3569
      %4334 = vst [vmem:[%s201 + $0x5c0] sm:$0xff] %v3571
      %4335 = vst [vmem:[%s201 + $0x5c8] sm:$0xff] %v3642
      %4336 = vst [vmem:[%s201 + $0x5d0] sm:$0xff] %v3644
      %4337 = vst [vmem:[%s201 + $0x5d8] sm:$0xff] %v3715
      %4338 = vst [vmem:[%s201 + $0x5e0] sm:$0xff] %v3717
      %4339 = vst [vmem:[%s201 + $0x5e8] sm:$0xff] %v3788
      %4340 = vst [vmem:[%s201 + $0x5f0] sm:$0xff] %v3790
      %4341 = vst [vmem:[%s201 + $0x5f8] sm:$0xff] %v3861
      %4342 = vst [vmem:[%s201 + $0x600] sm:$0xff] %v3863
      %4343 = vst [vmem:[%s201 + $0x608] sm:$0xff] %v3934
      %4344 = vst [vmem:[%s201 + $0x610] sm:$0xff] %v3936
      %4345 = vst [vmem:[%s201 + $0x618] sm:$0xff] %v4007
      %4346 = vst [vmem:[%s201 + $0x620] sm:$0xff] %v4009
      %4347 = vst [vmem:[%s201 + $0x628] sm:$0xff] %v4080
      %4348 = vst [vmem:[%s201 + $0x630] sm:$0xff] %v4082
      %4349 = vst.msk [vmem:[%s201 + $0x638] sm:$0xff] %vm4173, %v4146
      %s4350 = smul.u32 8, %s15
      %p4351 = scmp.lt.s32.totalorder %s4350, 15
      %s4352 = scalar_select %p4351, %s4350, 15
      %s4353 = smul.addr %s4352, 25
      %s4354 = smul.addr %s4353, 8
      %s4355 = scalar_lea.vmem %s4, %s4354
      // Predicated region
      $region41: #{forward.1} parent=35 // pred_check
        %p4356 = pneg %p122
      $region42: #{forward.1} parent=35 // pred_check_branch
        %4358 = sbr.rel (%p4356) target = $region44
      $region43: #{forward.1} parent=35 // pred_region
        %s4359 = smul.u32 8, %s15
      $region44: #{forward.1} parent=35 // pred_fallthru
        _
    $region36: #{forward.1} parent=5 // pred_fallthru
      _
    %p4360 = scmp.le.s32.totalorder 2, %s10
    // Predicated region
    $region45: #{forward.1} parent=5 // pred_check
      %p4361 = pneg %p4360
    $region46: #{forward.1} parent=5 // pred_check_branch
      %4363 = sbr.rel (%p4361) target = $region48
    $region47: #{forward.1} parent=5 // pred_region
      %s4364 = ssub.s32 %s10, 2
      // Predicated region
      $region49: #{forward.1} parent=47 // pred_check
        %p4365 = pneg %p128
      $region50: #{forward.1} parent=47 // pred_check_branch
        %4367 = sbr.rel (%p4365) target = $region52
      $region51: #{forward.1} parent=47 // pred_region
        %s4368 = smul.u32 8, %s16
        %p4369 = scmp.lt.s32.totalorder %s4368, 15
        %s4370 = scalar_select %p4369, %s4368, 15
        %s4371 = smul.addr %s4370, 25
        %s4372 = smul.addr %s4371, 8
        %s4373 = scalar_lea.vmem %s4, %s4372
      $region52: #{forward.1} parent=47 // pred_fallthru
        _
    $region48: #{forward.1} parent=5 // pred_fallthru
      _
  $region6: #{forward.1} parent=0 // loop_footer
    %s14 = sadd.s32 1, %s10
  $region7: #{forward.1} parent=0 // loop_footer_branch
    %9 = sbr.rel target = $region3
  $region8: #{forward.1} parent=0 // loop_exit
    _

</llo_original>
